<compile_context>
chip_gen: v7x
topology: tpu7x:2x2x1
jax: 0.10.0
libtpu: 0.0.40
codegen_flags: <defaults>
</compile_context>

<pallas_src>
import functools

import numpy as np
import jax
import jax.numpy as jnp
from jax.experimental import pallas as pl
from jax.experimental.pallas import tpu as pltpu

BT = 8  # images handled per grid step (batch is zero-padded to a multiple of BT)


# --------------------------------- kernel ------------------------------------
def _lenet_kernel(x_ref, w1t_ref, s1sel_ref, s1c_ref, b1_ref,
                  w2t_ref, s2sel_ref, s2c_ref, b2_ref,
                  w1f_ref, wf2_ref, wf3_ref, bfc_ref,
                  out_ref,
                  xpad_ref, c1pad_ref, p1pad_ref, c2pad_ref, *, bt):
    f32 = jnp.float32
    bf16 = jnp.bfloat16
    r1 = bt * 28            # rows per tile in the conv1 domain (28 rows / image)
    r2 = bt * 12            # rows per tile in the conv2 domain (12 rows / image)

    def mm(a, b):           # bf16 MXU matmul, f32 accumulation
        return jnp.dot(a.astype(bf16), b.astype(bf16), preferred_element_type=f32)

    # Stage the input into a zero-tail-padded scratch so the conv kernel-row (kh)
    # shifts are plain static row slices (no shift matmuls, no wraparound NaNs).
    x = x_ref[...]                                        # (bt*28, 28) bf16
    xpad_ref[pl.ds(0, r1), :] = x
    xpad_ref[pl.ds(r1, 8), :] = jnp.zeros((8, 28), bf16)

    # ---- conv1 + bias + relu -> (bt*28, 144); rows (b, i) (i>=24 garbage), cols co*24+x
    c1 = mm(x, w1t_ref[0])
    for kh in range(1, 5):
        c1 += mm(xpad_ref[pl.ds(kh, r1), :], w1t_ref[kh])
    c1 = jnp.maximum(c1 + b1_ref[...], 0.0)

    # ---- pool1 (2x2/2): row-parity max via shifted reload, one 0/1 row-compaction
    #      matmul, then two 0/1 lane-selection matmuls -> (bt*12, 72)
    c1b = c1.astype(bf16)
    c1pad_ref[pl.ds(0, r1), :] = c1b
    c1pad_ref[pl.ds(r1, 8), :] = jnp.zeros((8, 144), bf16)
    m1 = jnp.maximum(c1b, c1pad_ref[pl.ds(1, r1), :])     # rows 2p hold the row-pooled max
    h1 = mm(s1sel_ref[...], m1)                           # (bt*12, 144)
    p1 = jnp.maximum(mm(h1, s1c_ref[0]), mm(h1, s1c_ref[1]))

    # ---- conv2 + bias + relu -> (bt*12, 128); rows (b, i) (i>=8 garbage), cols co*8+x
    p1b = p1.astype(bf16)
    p1pad_ref[pl.ds(0, r2), :] = p1b
    p1pad_ref[pl.ds(r2, 8), :] = jnp.zeros((8, 72), bf16)
    c2 = mm(p1b, w2t_ref[0])
    for kh in range(1, 5):
        c2 += mm(p1pad_ref[pl.ds(kh, r2), :], w2t_ref[kh])
    c2 = jnp.maximum(c2 + b2_ref[...], 0.0)

    # ---- pool2 (2x2/2): same structure; rows come out h-major (h*bt + b) for fc1
    c2b = c2.astype(bf16)
    c2pad_ref[pl.ds(0, r2), :] = c2b
    c2pad_ref[pl.ds(r2, 8), :] = jnp.zeros((8, 128), bf16)
    m2 = jnp.maximum(c2b, c2pad_ref[pl.ds(1, r2), :])
    h2 = mm(s2sel_ref[...], m2)                           # (4*bt, 128)
    p2 = jnp.maximum(mm(h2, s2c_ref[0]), mm(h2, s2c_ref[1]))   # (4*bt, 64)

    # ---- fc1 (torch C,H,W flatten folded into w1f per spatial row h) + relu ----
    y = mm(p2[0:bt, :], w1f_ref[0])
    for h in range(1, 4):
        y += mm(p2[h * bt:(h + 1) * bt, :], w1f_ref[h])
    y = jnp.maximum(y + bfc_ref[0:1, :], 0.0)

    # ---- fc2 + relu, fc3 (padded to 128 lanes -> lane-dense output block) ----
    y = jnp.maximum(mm(y, wf2_ref[...]) + bfc_ref[1:2, :], 0.0)
    y = mm(y, wf3_ref[...]) + bfc_ref[2:3, :]

    out_ref[...] = y                                      # (bt, 128) f32


# --------------------- one-time host-side weight folding ---------------------
def fold_params(params, num_classes, bt=BT):
    assert num_classes <= 128, "num_classes must fit in the 128-lane padded output"
    f32 = np.float32
    w1 = np.asarray(params["conv1_w"], f32)   # (6, 1, 5, 5)
    b1 = np.asarray(params["conv1_b"], f32)   # (6,)
    w2 = np.asarray(params["conv2_w"], f32)   # (16, 6, 5, 5)
    b2 = np.asarray(params["conv2_b"], f32)   # (16,)
    fw1 = np.asarray(params["fc1_w"], f32)    # (120, 256)
    fb1 = np.asarray(params["fc1_b"], f32)
    fw2 = np.asarray(params["fc2_w"], f32)    # (84, 120)
    fb2 = np.asarray(params["fc2_b"], f32)
    fw3 = np.asarray(params["fc3_w"], f32)    # (num_classes, 84)
    fb3 = np.asarray(params["fc3_b"], f32)

    # conv1: lane-direction correlation as block-Toeplitz weight  (5, 28, 6*24)
    w1t = np.zeros((5, 28, 6 * 24), f32)
    for kh in range(5):
        for kw in range(5):
            for co in range(6):
                for xo in range(24):
                    w1t[kh, xo + kw, co * 24 + xo] = w1[co, 0, kh, kw]
    b1row = np.repeat(b1, 24)[None, :]                      # (1, 144)

    # pool1 row compaction (applied after the in-kernel row-parity max): pick row b*28+2p
    s1sel = np.zeros((bt * 12, bt * 28), f32)
    for b in range(bt):
        for p in range(12):
            s1sel[b * 12 + p, b * 28 + 2 * p] = 1.0
    # pool1 lane (column) 0-1 selections
    s1c = np.zeros((2, 144, 72), f32)
    for par in range(2):
        for co in range(6):
            for q in range(12):
                s1c[par, co * 24 + 2 * q + par, co * 12 + q] = 1.0

    # conv2: block-Toeplitz weight  (5, 6*12, 16*8)
    w2t = np.zeros((5, 72, 128), f32)
    for kh in range(5):
        for kw in range(5):
            for co in range(16):
                for ci in range(6):
                    for xo in range(8):
                        w2t[kh, ci * 12 + xo + kw, co * 8 + xo] = w2[co, ci, kh, kw]
    b2row = np.repeat(b2, 8)[None, :]                       # (1, 128)

    # pool2 row compaction, rows reordered h-major so fc1 uses contiguous row slices
    s2sel = np.zeros((4 * bt, bt * 12), f32)
    for h in range(4):
        for b in range(bt):
            s2sel[h * bt + b, b * 12 + 2 * h] = 1.0
    s2c = np.zeros((2, 128, 64), f32)
    for par in range(2):
        for co in range(16):
            for k in range(4):
                s2c[par, co * 8 + 2 * k + par, co * 4 + k] = 1.0

    # fc1 with PyTorch flatten order (co*16 + h*4 + k) folded in; pad out to 128 lanes
    w1f = np.zeros((4, 64, 128), f32)
    for h in range(4):
        for co in range(16):
            for k in range(4):
                w1f[h, co * 4 + k, :120] = fw1[:, co * 16 + h * 4 + k]
    wf2 = np.zeros((128, 128), f32); wf2[:120, :84] = fw2.T
    wf3 = np.zeros((128, 128), f32); wf3[:84, :num_classes] = fw3.T
    bfc = np.zeros((3, 128), f32)
    bfc[0, :120] = fb1; bfc[1, :84] = fb2; bfc[2, :num_classes] = fb3

    bf16 = jnp.bfloat16
    return {
        "w1t": jnp.asarray(w1t, bf16), "s1sel": jnp.asarray(s1sel, bf16),
        "s1c": jnp.asarray(s1c, bf16), "b1row": jnp.asarray(b1row, jnp.float32),
        "w2t": jnp.asarray(w2t, bf16), "s2sel": jnp.asarray(s2sel, bf16),
        "s2c": jnp.asarray(s2c, bf16), "b2row": jnp.asarray(b2row, jnp.float32),
        "w1f": jnp.asarray(w1f, bf16),
        "wf2": jnp.asarray(wf2, bf16), "wf3": jnp.asarray(wf3, bf16),
        "bfc": jnp.asarray(bfc, jnp.float32),
    }


# ------------------------------- forward wrapper ------------------------------
def make_forward(params, num_classes, bt=BT):
    consts = fold_params(params, num_classes, bt)
    order = ["w1t", "s1sel", "s1c", "b1row",
             "w2t", "s2sel", "s2c", "b2row",
             "w1f", "wf2", "wf3", "bfc"]
    const_args = [consts[k] for k in order]

    def _const_spec(a):
        nd = a.ndim
        return pl.BlockSpec(a.shape, lambda i, _nd=nd: (0,) * _nd)

    def forward(x_nchw):
        B = x_nchw.shape[0]
        assert x_nchw.shape[1:] == (1, 28, 28)
        b_pad = ((B + bt - 1) // bt) * bt
        x = x_nchw.reshape(B, 28, 28).astype(jnp.bfloat16)
        if b_pad != B:
            x = jnp.concatenate(
                [x, jnp.zeros((b_pad - B, 28, 28), jnp.bfloat16)], axis=0)
        x2d = x.reshape(b_pad * 28, 28)        # rows = (image, image-row)

        out = pl.pallas_call(
            functools.partial(_lenet_kernel, bt=bt),
            out_shape=jax.ShapeDtypeStruct((b_pad, 128), jnp.float32),
            grid=(b_pad // bt,),
            in_specs=[pl.BlockSpec((bt * 28, 28), lambda i: (i, 0))]
                     + [_const_spec(a) for a in const_args],
            out_specs=pl.BlockSpec((bt, 128), lambda i: (i, 0)),
            scratch_shapes=[
                pltpu.VMEM((bt * 28 + 8, 28), jnp.bfloat16),    # shifted conv1 input
                pltpu.VMEM((bt * 28 + 8, 144), jnp.bfloat16),   # conv1 act for pool1
                pltpu.VMEM((bt * 12 + 8, 72), jnp.bfloat16),    # shifted conv2 input
                pltpu.VMEM((bt * 12 + 8, 128), jnp.bfloat16),   # conv2 act for pool2
            ],
            compiler_params=pltpu.CompilerParams(
                dimension_semantics=("parallel",)),
        )(x2d, *const_args)
        return out[:B, :num_classes]

    return forward


# ------------------------------ plain-JAX reference ---------------------------
def reference_forward(params, x_nchw):
    x = x_nchw.astype(jnp.float32)
    dn = ("NCHW", "OIHW", "NCHW")
    y = jax.lax.conv_general_dilated(x, params["conv1_w"], (1, 1), "VALID",
                                     dimension_numbers=dn)
    y = jax.nn.relu(y + params["conv1_b"][None, :, None, None])
    y = jax.lax.reduce_window(y, -jnp.inf, jax.lax.max, (1, 1, 2, 2), (1, 1, 2, 2), "VALID")
    y = jax.lax.conv_general_dilated(y, params["conv2_w"], (1, 1), "VALID",
                                     dimension_numbers=dn)
    y = jax.nn.relu(y + params["conv2_b"][None, :, None, None])
    y = jax.lax.reduce_window(y, -jnp.inf, jax.lax.max, (1, 1, 2, 2), (1, 1, 2, 2), "VALID")
    y = y.reshape(y.shape[0], -1)                         # (B, 16*4*4) in C,H,W order
    y = jax.nn.relu(y @ params["fc1_w"].T + params["fc1_b"])
    y = jax.nn.relu(y @ params["fc2_w"].T + params["fc2_b"])
    return y @ params["fc3_w"].T + params["fc3_b"]


# ---------------------------------- params ------------------------------------
def init_params(num_classes, key):
    ks = jax.random.split(key, 10)
    s = 0.1
    return {
        "conv1_w": s * jax.random.normal(ks[0], (6, 1, 5, 5), jnp.float32),
        "conv1_b": s * jax.random.normal(ks[1], (6,), jnp.float32),
        "conv2_w": s * jax.random.normal(ks[2], (16, 6, 5, 5), jnp.float32),
        "conv2_b": s * jax.random.normal(ks[3], (16,), jnp.float32),
        "fc1_w": s * jax.random.normal(ks[4], (120, 16 * 4 * 4), jnp.float32),
        "fc1_b": s * jax.random.normal(ks[5], (120,), jnp.float32),
        "fc2_w": s * jax.random.normal(ks[6], (84, 120), jnp.float32),
        "fc2_b": s * jax.random.normal(ks[7], (84,), jnp.float32),
        "fc3_w": s * jax.random.normal(ks[8], (num_classes, 84), jnp.float32),
        "fc3_b": s * jax.random.normal(ks[9], (num_classes,), jnp.float32),
    }


if __name__ == "__main__":
    num_classes = 10
    key = jax.random.PRNGKey(0)
    k_params, k_x = jax.random.split(key)
    params = init_params(num_classes, k_params)
    # Module implies 28x28 single-channel input (fc1 expects 16*4*4 after two conv/pool).
    x = jax.random.normal(k_x, (2, 1, 28, 28), jnp.float32)

    forward = jax.jit(make_forward(params, num_classes))
    out = forward(x)
    out = jax.block_until_ready(out)

    assert out.shape == (2, num_classes)
    assert bool(jnp.all(jnp.isfinite(out)))

    ref = reference_forward(params, x)
    max_err = float(jnp.max(jnp.abs(out - ref)))
    assert jnp.allclose(out, ref, atol=5e-2, rtol=5e-2), f"max_err={max_err}"

    print("KERNEL_OK")
</pallas_src>

<mosaic_0001>
module attributes {stable_mosaic.version = 11 : i64} {
  func.func @_lenet_kernel(%arg0: i32, %arg1: memref<224x28xbf16, #tpu.memory_space<vmem>>, %arg2: memref<5x28x144xbf16, #tpu.memory_space<vmem>>, %arg3: memref<96x224xbf16, #tpu.memory_space<vmem>>, %arg4: memref<2x144x72xbf16, #tpu.memory_space<vmem>>, %arg5: memref<1x144xf32, #tpu.memory_space<vmem>>, %arg6: memref<5x72x128xbf16, #tpu.memory_space<vmem>>, %arg7: memref<32x96xbf16, #tpu.memory_space<vmem>>, %arg8: memref<2x128x64xbf16, #tpu.memory_space<vmem>>, %arg9: memref<1x128xf32, #tpu.memory_space<vmem>>, %arg10: memref<4x64x128xbf16, #tpu.memory_space<vmem>>, %arg11: memref<128x128xbf16, #tpu.memory_space<vmem>>, %arg12: memref<128x128xbf16, #tpu.memory_space<vmem>>, %arg13: memref<3x128xf32, #tpu.memory_space<vmem>>, %arg14: memref<8x128xf32, #tpu.memory_space<vmem>>, %arg15: memref<232x28xbf16, #tpu.memory_space<vmem>>, %arg16: memref<232x144xbf16, #tpu.memory_space<vmem>>, %arg17: memref<104x72xbf16, #tpu.memory_space<vmem>>, %arg18: memref<104x128xbf16, #tpu.memory_space<vmem>>) attributes {dimension_semantics = [#tpu.dimension_semantics<parallel>], iteration_bounds = array<i64: 1>, scalar_prefetch = 0 : i64, scratch_operands = 4 : i64, tpu.core_type = #tpu.core_type<tc>, window_params = [{transform_indices = @transform_0, window_bounds = array<i64: 224, 28>}, {pipeline_mode = #tpu.pipeline_mode<synchronous>, transform_indices = @transform_1, window_bounds = array<i64: 5, 28, 144>}, {pipeline_mode = #tpu.pipeline_mode<synchronous>, transform_indices = @transform_2, window_bounds = array<i64: 96, 224>}, {pipeline_mode = #tpu.pipeline_mode<synchronous>, transform_indices = @transform_3, window_bounds = array<i64: 2, 144, 72>}, {pipeline_mode = #tpu.pipeline_mode<synchronous>, transform_indices = @transform_4, window_bounds = array<i64: 1, 144>}, {pipeline_mode = #tpu.pipeline_mode<synchronous>, transform_indices = @transform_5, window_bounds = array<i64: 5, 72, 128>}, {pipeline_mode = #tpu.pipeline_mode<synchronous>, transform_indices = @transform_6, window_bounds = array<i64: 32, 96>}, {pipeline_mode = #tpu.pipeline_mode<synchronous>, transform_indices = @transform_7, window_bounds = array<i64: 2, 128, 64>}, {pipeline_mode = #tpu.pipeline_mode<synchronous>, transform_indices = @transform_8, window_bounds = array<i64: 1, 128>}, {pipeline_mode = #tpu.pipeline_mode<synchronous>, transform_indices = @transform_9, window_bounds = array<i64: 4, 64, 128>}, {pipeline_mode = #tpu.pipeline_mode<synchronous>, transform_indices = @transform_10, window_bounds = array<i64: 128, 128>}, {pipeline_mode = #tpu.pipeline_mode<synchronous>, transform_indices = @transform_11, window_bounds = array<i64: 128, 128>}, {pipeline_mode = #tpu.pipeline_mode<synchronous>, transform_indices = @transform_12, window_bounds = array<i64: 3, 128>}, {transform_indices = @transform_13, window_bounds = array<i64: 8, 128>}]} {
    %c0 = arith.constant 0 : index
    %c0_0 = arith.constant 0 : index
    %0 = vector.load %arg1[%c0, %c0_0] : memref<224x28xbf16, #tpu.memory_space<vmem>>, vector<224x28xbf16>
    %c0_1 = arith.constant 0 : index
    %c0_2 = arith.constant 0 : index
    %1 = vector.load %arg15[%c0_1, %c0_2] : memref<232x28xbf16, #tpu.memory_space<vmem>>, vector<224x28xbf16>
    tpu.vector_store %arg15[%c0_1, %c0_2], %0 {strides = array<i32>} : memref<232x28xbf16, #tpu.memory_space<vmem>>, vector<224x28xbf16>,
    %cst = arith.constant 0.000000e+00 : bf16
    %2 = vector.broadcast %cst : bf16 to vector<8x28xbf16>
    %c224 = arith.constant 224 : index
    %c0_3 = arith.constant 0 : index
    %3 = vector.load %arg15[%c224, %c0_3] : memref<232x28xbf16, #tpu.memory_space<vmem>>, vector<8x28xbf16>
    tpu.vector_store %arg15[%c224, %c0_3], %2 {strides = array<i32>} : memref<232x28xbf16, #tpu.memory_space<vmem>>, vector<8x28xbf16>,
    %c0_4 = arith.constant 0 : index
    %c0_5 = arith.constant 0 : index
    %c0_6 = arith.constant 0 : index
    %4 = vector.load %arg2[%c0_4, %c0_5, %c0_6] : memref<5x28x144xbf16, #tpu.memory_space<vmem>>, vector<1x28x144xbf16>
    %5 = vector.shape_cast %4 : vector<1x28x144xbf16> to vector<28x144xbf16>
    %cst_7 = arith.constant dense<0.000000e+00> : vector<224x144xf32>
    %6 = tpu.matmul %0, %5, %cst_7 {dimension_numbers = #tpu.dot_dimension_numbers<[1], [0], [0], [1], [0, 0, 1, 1], [], []>} : vector<224x28xbf16>, vector<28x144xbf16>, vector<224x144xf32> -> vector<224x144xf32>
    %c1 = arith.constant 1 : index
    %c0_8 = arith.constant 0 : index
    %7 = vector.load %arg15[%c1, %c0_8] : memref<232x28xbf16, #tpu.memory_space<vmem>>, vector<224x28xbf16>
    %c1_9 = arith.constant 1 : index
    %c0_10 = arith.constant 0 : index
    %c0_11 = arith.constant 0 : index
    %8 = vector.load %arg2[%c1_9, %c0_10, %c0_11] : memref<5x28x144xbf16, #tpu.memory_space<vmem>>, vector<1x28x144xbf16>
    %9 = vector.shape_cast %8 : vector<1x28x144xbf16> to vector<28x144xbf16>
    %cst_12 = arith.constant dense<0.000000e+00> : vector<224x144xf32>
    %10 = tpu.matmul %7, %9, %cst_12 {dimension_numbers = #tpu.dot_dimension_numbers<[1], [0], [0], [1], [0, 0, 1, 1], [], []>} : vector<224x28xbf16>, vector<28x144xbf16>, vector<224x144xf32> -> vector<224x144xf32>
    %11 = arith.addf %6, %10 : vector<224x144xf32>
    %c2 = arith.constant 2 : index
    %c0_13 = arith.constant 0 : index
    %12 = vector.load %arg15[%c2, %c0_13] : memref<232x28xbf16, #tpu.memory_space<vmem>>, vector<224x28xbf16>
    %c2_14 = arith.constant 2 : index
    %c0_15 = arith.constant 0 : index
    %c0_16 = arith.constant 0 : index
    %13 = vector.load %arg2[%c2_14, %c0_15, %c0_16] : memref<5x28x144xbf16, #tpu.memory_space<vmem>>, vector<1x28x144xbf16>
    %14 = vector.shape_cast %13 : vector<1x28x144xbf16> to vector<28x144xbf16>
    %cst_17 = arith.constant dense<0.000000e+00> : vector<224x144xf32>
    %15 = tpu.matmul %12, %14, %cst_17 {dimension_numbers = #tpu.dot_dimension_numbers<[1], [0], [0], [1], [0, 0, 1, 1], [], []>} : vector<224x28xbf16>, vector<28x144xbf16>, vector<224x144xf32> -> vector<224x144xf32>
    %16 = arith.addf %11, %15 : vector<224x144xf32>
    %c3 = arith.constant 3 : index
    %c0_18 = arith.constant 0 : index
    %17 = vector.load %arg15[%c3, %c0_18] : memref<232x28xbf16, #tpu.memory_space<vmem>>, vector<224x28xbf16>
    %c3_19 = arith.constant 3 : index
    %c0_20 = arith.constant 0 : index
    %c0_21 = arith.constant 0 : index
    %18 = vector.load %arg2[%c3_19, %c0_20, %c0_21] : memref<5x28x144xbf16, #tpu.memory_space<vmem>>, vector<1x28x144xbf16>
    %19 = vector.shape_cast %18 : vector<1x28x144xbf16> to vector<28x144xbf16>
    %cst_22 = arith.constant dense<0.000000e+00> : vector<224x144xf32>
    %20 = tpu.matmul %17, %19, %cst_22 {dimension_numbers = #tpu.dot_dimension_numbers<[1], [0], [0], [1], [0, 0, 1, 1], [], []>} : vector<224x28xbf16>, vector<28x144xbf16>, vector<224x144xf32> -> vector<224x144xf32>
    %21 = arith.addf %16, %20 : vector<224x144xf32>
    %c4 = arith.constant 4 : index
    %c0_23 = arith.constant 0 : index
    %22 = vector.load %arg15[%c4, %c0_23] : memref<232x28xbf16, #tpu.memory_space<vmem>>, vector<224x28xbf16>
    %c4_24 = arith.constant 4 : index
    %c0_25 = arith.constant 0 : index
    %c0_26 = arith.constant 0 : index
    %23 = vector.load %arg2[%c4_24, %c0_25, %c0_26] : memref<5x28x144xbf16, #tpu.memory_space<vmem>>, vector<1x28x144xbf16>
    %24 = vector.shape_cast %23 : vector<1x28x144xbf16> to vector<28x144xbf16>
    %cst_27 = arith.constant dense<0.000000e+00> : vector<224x144xf32>
    %25 = tpu.matmul %22, %24, %cst_27 {dimension_numbers = #tpu.dot_dimension_numbers<[1], [0], [0], [1], [0, 0, 1, 1], [], []>} : vector<224x28xbf16>, vector<28x144xbf16>, vector<224x144xf32> -> vector<224x144xf32>
    %26 = arith.addf %21, %25 : vector<224x144xf32>
    %c0_28 = arith.constant 0 : index
    %c0_29 = arith.constant 0 : index
    %27 = vector.load %arg5[%c0_28, %c0_29] : memref<1x144xf32, #tpu.memory_space<vmem>>, vector<1x144xf32>
    %28 = vector.broadcast %27 : vector<1x144xf32> to vector<224x144xf32>
    %29 = arith.addf %26, %28 : vector<224x144xf32>
    %cst_30 = arith.constant 0.000000e+00 : f32
    %30 = vector.broadcast %cst_30 : f32 to vector<224x144xf32>
    %31 = arith.maximumf %29, %30 : vector<224x144xf32>
    %32 = arith.truncf %31 : vector<224x144xf32> to vector<224x144xbf16>
    %c0_31 = arith.constant 0 : index
    %c0_32 = arith.constant 0 : index
    %33 = vector.load %arg16[%c0_31, %c0_32] : memref<232x144xbf16, #tpu.memory_space<vmem>>, vector<224x144xbf16>
    tpu.vector_store %arg16[%c0_31, %c0_32], %32 {strides = array<i32>} : memref<232x144xbf16, #tpu.memory_space<vmem>>, vector<224x144xbf16>,
    %cst_33 = arith.constant 0.000000e+00 : bf16
    %34 = vector.broadcast %cst_33 : bf16 to vector<8x144xbf16>
    %c224_34 = arith.constant 224 : index
    %c0_35 = arith.constant 0 : index
    %35 = vector.load %arg16[%c224_34, %c0_35] : memref<232x144xbf16, #tpu.memory_space<vmem>>, vector<8x144xbf16>
    tpu.vector_store %arg16[%c224_34, %c0_35], %34 {strides = array<i32>} : memref<232x144xbf16, #tpu.memory_space<vmem>>, vector<8x144xbf16>,
    %c1_36 = arith.constant 1 : index
    %c0_37 = arith.constant 0 : index
    %36 = vector.load %arg16[%c1_36, %c0_37] : memref<232x144xbf16, #tpu.memory_space<vmem>>, vector<224x144xbf16>
    %37 = arith.maximumf %32, %36 : vector<224x144xbf16>
    %c0_38 = arith.constant 0 : index
    %c0_39 = arith.constant 0 : index
    %38 = vector.load %arg3[%c0_38, %c0_39] : memref<96x224xbf16, #tpu.memory_space<vmem>>, vector<96x224xbf16>
    %cst_40 = arith.constant dense<0.000000e+00> : vector<96x144xf32>
    %39 = tpu.matmul %38, %37, %cst_40 {dimension_numbers = #tpu.dot_dimension_numbers<[1], [0], [0], [1], [0, 0, 1, 1], [], []>} : vector<96x224xbf16>, vector<224x144xbf16>, vector<96x144xf32> -> vector<96x144xf32>
    %c0_41 = arith.constant 0 : index
    %c0_42 = arith.constant 0 : index
    %c0_43 = arith.constant 0 : index
    %40 = vector.load %arg4[%c0_41, %c0_42, %c0_43] : memref<2x144x72xbf16, #tpu.memory_space<vmem>>, vector<1x144x72xbf16>
    %41 = vector.shape_cast %40 : vector<1x144x72xbf16> to vector<144x72xbf16>
    %42 = arith.truncf %39 : vector<96x144xf32> to vector<96x144xbf16>
    %cst_44 = arith.constant dense<0.000000e+00> : vector<96x72xf32>
    %43 = tpu.matmul %42, %41, %cst_44 {dimension_numbers = #tpu.dot_dimension_numbers<[1], [0], [0], [1], [0, 0, 1, 1], [], []>} : vector<96x144xbf16>, vector<144x72xbf16>, vector<96x72xf32> -> vector<96x72xf32>
    %c1_45 = arith.constant 1 : index
    %c0_46 = arith.constant 0 : index
    %c0_47 = arith.constant 0 : index
    %44 = vector.load %arg4[%c1_45, %c0_46, %c0_47] : memref<2x144x72xbf16, #tpu.memory_space<vmem>>, vector<1x144x72xbf16>
    %45 = vector.shape_cast %44 : vector<1x144x72xbf16> to vector<144x72xbf16>
    %46 = arith.truncf %39 : vector<96x144xf32> to vector<96x144xbf16>
    %cst_48 = arith.constant dense<0.000000e+00> : vector<96x72xf32>
    %47 = tpu.matmul %46, %45, %cst_48 {dimension_numbers = #tpu.dot_dimension_numbers<[1], [0], [0], [1], [0, 0, 1, 1], [], []>} : vector<96x144xbf16>, vector<144x72xbf16>, vector<96x72xf32> -> vector<96x72xf32>
    %48 = arith.maximumf %43, %47 : vector<96x72xf32>
    %49 = arith.truncf %48 : vector<96x72xf32> to vector<96x72xbf16>
    %c0_49 = arith.constant 0 : index
    %c0_50 = arith.constant 0 : index
    %50 = vector.load %arg17[%c0_49, %c0_50] : memref<104x72xbf16, #tpu.memory_space<vmem>>, vector<96x72xbf16>
    tpu.vector_store %arg17[%c0_49, %c0_50], %49 {strides = array<i32>} : memref<104x72xbf16, #tpu.memory_space<vmem>>, vector<96x72xbf16>,
    %cst_51 = arith.constant 0.000000e+00 : bf16
    %51 = vector.broadcast %cst_51 : bf16 to vector<8x72xbf16>
    %c96 = arith.constant 96 : index
    %c0_52 = arith.constant 0 : index
    %52 = vector.load %arg17[%c96, %c0_52] : memref<104x72xbf16, #tpu.memory_space<vmem>>, vector<8x72xbf16>
    tpu.vector_store %arg17[%c96, %c0_52], %51 {strides = array<i32>} : memref<104x72xbf16, #tpu.memory_space<vmem>>, vector<8x72xbf16>,
    %c0_53 = arith.constant 0 : index
    %c0_54 = arith.constant 0 : index
    %c0_55 = arith.constant 0 : index
    %53 = vector.load %arg6[%c0_53, %c0_54, %c0_55] : memref<5x72x128xbf16, #tpu.memory_space<vmem>>, vector<1x72x128xbf16>
    %54 = vector.shape_cast %53 : vector<1x72x128xbf16> to vector<72x128xbf16>
    %cst_56 = arith.constant dense<0.000000e+00> : vector<96x128xf32>
    %55 = tpu.matmul %49, %54, %cst_56 {dimension_numbers = #tpu.dot_dimension_numbers<[1], [0], [0], [1], [0, 0, 1, 1], [], []>} : vector<96x72xbf16>, vector<72x128xbf16>, vector<96x128xf32> -> vector<96x128xf32>
    %c1_57 = arith.constant 1 : index
    %c0_58 = arith.constant 0 : index
    %56 = vector.load %arg17[%c1_57, %c0_58] : memref<104x72xbf16, #tpu.memory_space<vmem>>, vector<96x72xbf16>
    %c1_59 = arith.constant 1 : index
    %c0_60 = arith.constant 0 : index
    %c0_61 = arith.constant 0 : index
    %57 = vector.load %arg6[%c1_59, %c0_60, %c0_61] : memref<5x72x128xbf16, #tpu.memory_space<vmem>>, vector<1x72x128xbf16>
    %58 = vector.shape_cast %57 : vector<1x72x128xbf16> to vector<72x128xbf16>
    %cst_62 = arith.constant dense<0.000000e+00> : vector<96x128xf32>
    %59 = tpu.matmul %56, %58, %cst_62 {dimension_numbers = #tpu.dot_dimension_numbers<[1], [0], [0], [1], [0, 0, 1, 1], [], []>} : vector<96x72xbf16>, vector<72x128xbf16>, vector<96x128xf32> -> vector<96x128xf32>
    %60 = arith.addf %55, %59 : vector<96x128xf32>
    %c2_63 = arith.constant 2 : index
    %c0_64 = arith.constant 0 : index
    %61 = vector.load %arg17[%c2_63, %c0_64] : memref<104x72xbf16, #tpu.memory_space<vmem>>, vector<96x72xbf16>
    %c2_65 = arith.constant 2 : index
    %c0_66 = arith.constant 0 : index
    %c0_67 = arith.constant 0 : index
    %62 = vector.load %arg6[%c2_65, %c0_66, %c0_67] : memref<5x72x128xbf16, #tpu.memory_space<vmem>>, vector<1x72x128xbf16>
    %63 = vector.shape_cast %62 : vector<1x72x128xbf16> to vector<72x128xbf16>
    %cst_68 = arith.constant dense<0.000000e+00> : vector<96x128xf32>
    %64 = tpu.matmul %61, %63, %cst_68 {dimension_numbers = #tpu.dot_dimension_numbers<[1], [0], [0], [1], [0, 0, 1, 1], [], []>} : vector<96x72xbf16>, vector<72x128xbf16>, vector<96x128xf32> -> vector<96x128xf32>
    %65 = arith.addf %60, %64 : vector<96x128xf32>
    %c3_69 = arith.constant 3 : index
    %c0_70 = arith.constant 0 : index
    %66 = vector.load %arg17[%c3_69, %c0_70] : memref<104x72xbf16, #tpu.memory_space<vmem>>, vector<96x72xbf16>
    %c3_71 = arith.constant 3 : index
    %c0_72 = arith.constant 0 : index
    %c0_73 = arith.constant 0 : index
    %67 = vector.load %arg6[%c3_71, %c0_72, %c0_73] : memref<5x72x128xbf16, #tpu.memory_space<vmem>>, vector<1x72x128xbf16>
    %68 = vector.shape_cast %67 : vector<1x72x128xbf16> to vector<72x128xbf16>
    %cst_74 = arith.constant dense<0.000000e+00> : vector<96x128xf32>
    %69 = tpu.matmul %66, %68, %cst_74 {dimension_numbers = #tpu.dot_dimension_numbers<[1], [0], [0], [1], [0, 0, 1, 1], [], []>} : vector<96x72xbf16>, vector<72x128xbf16>, vector<96x128xf32> -> vector<96x128xf32>
    %70 = arith.addf %65, %69 : vector<96x128xf32>
    %c4_75 = arith.constant 4 : index
    %c0_76 = arith.constant 0 : index
    %71 = vector.load %arg17[%c4_75, %c0_76] : memref<104x72xbf16, #tpu.memory_space<vmem>>, vector<96x72xbf16>
    %c4_77 = arith.constant 4 : index
    %c0_78 = arith.constant 0 : index
    %c0_79 = arith.constant 0 : index
    %72 = vector.load %arg6[%c4_77, %c0_78, %c0_79] : memref<5x72x128xbf16, #tpu.memory_space<vmem>>, vector<1x72x128xbf16>
    %73 = vector.shape_cast %72 : vector<1x72x128xbf16> to vector<72x128xbf16>
    %cst_80 = arith.constant dense<0.000000e+00> : vector<96x128xf32>
    %74 = tpu.matmul %71, %73, %cst_80 {dimension_numbers = #tpu.dot_dimension_numbers<[1], [0], [0], [1], [0, 0, 1, 1], [], []>} : vector<96x72xbf16>, vector<72x128xbf16>, vector<96x128xf32> -> vector<96x128xf32>
    %75 = arith.addf %70, %74 : vector<96x128xf32>
    %c0_81 = arith.constant 0 : index
    %c0_82 = arith.constant 0 : index
    %76 = vector.load %arg9[%c0_81, %c0_82] : memref<1x128xf32, #tpu.memory_space<vmem>>, vector<1x128xf32>
    %77 = vector.broadcast %76 : vector<1x128xf32> to vector<96x128xf32>
    %78 = arith.addf %75, %77 : vector<96x128xf32>
    %cst_83 = arith.constant 0.000000e+00 : f32
    %79 = vector.broadcast %cst_83 : f32 to vector<96x128xf32>
    %80 = arith.maximumf %78, %79 : vector<96x128xf32>
    %81 = arith.truncf %80 : vector<96x128xf32> to vector<96x128xbf16>
    %c0_84 = arith.constant 0 : index
    %c0_85 = arith.constant 0 : index
    %82 = vector.load %arg18[%c0_84, %c0_85] : memref<104x128xbf16, #tpu.memory_space<vmem>>, vector<96x128xbf16>
    tpu.vector_store %arg18[%c0_84, %c0_85], %81 {strides = array<i32>} : memref<104x128xbf16, #tpu.memory_space<vmem>>, vector<96x128xbf16>,
    %cst_86 = arith.constant 0.000000e+00 : bf16
    %83 = vector.broadcast %cst_86 : bf16 to vector<8x128xbf16>
    %c96_87 = arith.constant 96 : index
    %c0_88 = arith.constant 0 : index
    %84 = vector.load %arg18[%c96_87, %c0_88] : memref<104x128xbf16, #tpu.memory_space<vmem>>, vector<8x128xbf16>
    tpu.vector_store %arg18[%c96_87, %c0_88], %83 {strides = array<i32>} : memref<104x128xbf16, #tpu.memory_space<vmem>>, vector<8x128xbf16>,
    %c1_89 = arith.constant 1 : index
    %c0_90 = arith.constant 0 : index
    %85 = vector.load %arg18[%c1_89, %c0_90] : memref<104x128xbf16, #tpu.memory_space<vmem>>, vector<96x128xbf16>
    %86 = arith.maximumf %81, %85 : vector<96x128xbf16>
    %c0_91 = arith.constant 0 : index
    %c0_92 = arith.constant 0 : index
    %87 = vector.load %arg7[%c0_91, %c0_92] : memref<32x96xbf16, #tpu.memory_space<vmem>>, vector<32x96xbf16>
    %cst_93 = arith.constant dense<0.000000e+00> : vector<32x128xf32>
    %88 = tpu.matmul %87, %86, %cst_93 {dimension_numbers = #tpu.dot_dimension_numbers<[1], [0], [0], [1], [0, 0, 1, 1], [], []>} : vector<32x96xbf16>, vector<96x128xbf16>, vector<32x128xf32> -> vector<32x128xf32>
    %c0_94 = arith.constant 0 : index
    %c0_95 = arith.constant 0 : index
    %c0_96 = arith.constant 0 : index
    %89 = vector.load %arg8[%c0_94, %c0_95, %c0_96] : memref<2x128x64xbf16, #tpu.memory_space<vmem>>, vector<1x128x64xbf16>
    %90 = vector.shape_cast %89 : vector<1x128x64xbf16> to vector<128x64xbf16>
    %91 = arith.truncf %88 : vector<32x128xf32> to vector<32x128xbf16>
    %cst_97 = arith.constant dense<0.000000e+00> : vector<32x64xf32>
    %92 = tpu.matmul %91, %90, %cst_97 {dimension_numbers = #tpu.dot_dimension_numbers<[1], [0], [0], [1], [0, 0, 1, 1], [], []>} : vector<32x128xbf16>, vector<128x64xbf16>, vector<32x64xf32> -> vector<32x64xf32>
    %c1_98 = arith.constant 1 : index
    %c0_99 = arith.constant 0 : index
    %c0_100 = arith.constant 0 : index
    %93 = vector.load %arg8[%c1_98, %c0_99, %c0_100] : memref<2x128x64xbf16, #tpu.memory_space<vmem>>, vector<1x128x64xbf16>
    %94 = vector.shape_cast %93 : vector<1x128x64xbf16> to vector<128x64xbf16>
    %95 = arith.truncf %88 : vector<32x128xf32> to vector<32x128xbf16>
    %cst_101 = arith.constant dense<0.000000e+00> : vector<32x64xf32>
    %96 = tpu.matmul %95, %94, %cst_101 {dimension_numbers = #tpu.dot_dimension_numbers<[1], [0], [0], [1], [0, 0, 1, 1], [], []>} : vector<32x128xbf16>, vector<128x64xbf16>, vector<32x64xf32> -> vector<32x64xf32>
    %97 = arith.maximumf %92, %96 : vector<32x64xf32>
    %98 = vector.extract_strided_slice %97 {offsets = [0, 0], sizes = [8, 64], strides = [1, 1]} : vector<32x64xf32> to vector<8x64xf32>
    %c0_102 = arith.constant 0 : index
    %c0_103 = arith.constant 0 : index
    %c0_104 = arith.constant 0 : index
    %99 = vector.load %arg10[%c0_102, %c0_103, %c0_104] : memref<4x64x128xbf16, #tpu.memory_space<vmem>>, vector<1x64x128xbf16>
    %100 = vector.shape_cast %99 : vector<1x64x128xbf16> to vector<64x128xbf16>
    %101 = arith.truncf %98 : vector<8x64xf32> to vector<8x64xbf16>
    %cst_105 = arith.constant dense<0.000000e+00> : vector<8x128xf32>
    %102 = tpu.matmul %101, %100, %cst_105 {dimension_numbers = #tpu.dot_dimension_numbers<[1], [0], [0], [1], [0, 0, 1, 1], [], []>} : vector<8x64xbf16>, vector<64x128xbf16>, vector<8x128xf32> -> vector<8x128xf32>
    %103 = vector.extract_strided_slice %97 {offsets = [8, 0], sizes = [8, 64], strides = [1, 1]} : vector<32x64xf32> to vector<8x64xf32>
    %c1_106 = arith.constant 1 : index
    %c0_107 = arith.constant 0 : index
    %c0_108 = arith.constant 0 : index
    %104 = vector.load %arg10[%c1_106, %c0_107, %c0_108] : memref<4x64x128xbf16, #tpu.memory_space<vmem>>, vector<1x64x128xbf16>
    %105 = vector.shape_cast %104 : vector<1x64x128xbf16> to vector<64x128xbf16>
    %106 = arith.truncf %103 : vector<8x64xf32> to vector<8x64xbf16>
    %cst_109 = arith.constant dense<0.000000e+00> : vector<8x128xf32>
    %107 = tpu.matmul %106, %105, %cst_109 {dimension_numbers = #tpu.dot_dimension_numbers<[1], [0], [0], [1], [0, 0, 1, 1], [], []>} : vector<8x64xbf16>, vector<64x128xbf16>, vector<8x128xf32> -> vector<8x128xf32>
    %108 = arith.addf %102, %107 : vector<8x128xf32>
    %109 = vector.extract_strided_slice %97 {offsets = [16, 0], sizes = [8, 64], strides = [1, 1]} : vector<32x64xf32> to vector<8x64xf32>
    %c2_110 = arith.constant 2 : index
    %c0_111 = arith.constant 0 : index
    %c0_112 = arith.constant 0 : index
    %110 = vector.load %arg10[%c2_110, %c0_111, %c0_112] : memref<4x64x128xbf16, #tpu.memory_space<vmem>>, vector<1x64x128xbf16>
    %111 = vector.shape_cast %110 : vector<1x64x128xbf16> to vector<64x128xbf16>
    %112 = arith.truncf %109 : vector<8x64xf32> to vector<8x64xbf16>
    %cst_113 = arith.constant dense<0.000000e+00> : vector<8x128xf32>
    %113 = tpu.matmul %112, %111, %cst_113 {dimension_numbers = #tpu.dot_dimension_numbers<[1], [0], [0], [1], [0, 0, 1, 1], [], []>} : vector<8x64xbf16>, vector<64x128xbf16>, vector<8x128xf32> -> vector<8x128xf32>
    %114 = arith.addf %108, %113 : vector<8x128xf32>
    %115 = vector.extract_strided_slice %97 {offsets = [24, 0], sizes = [8, 64], strides = [1, 1]} : vector<32x64xf32> to vector<8x64xf32>
    %c3_114 = arith.constant 3 : index
    %c0_115 = arith.constant 0 : index
    %c0_116 = arith.constant 0 : index
    %116 = vector.load %arg10[%c3_114, %c0_115, %c0_116] : memref<4x64x128xbf16, #tpu.memory_space<vmem>>, vector<1x64x128xbf16>
    %117 = vector.shape_cast %116 : vector<1x64x128xbf16> to vector<64x128xbf16>
    %118 = arith.truncf %115 : vector<8x64xf32> to vector<8x64xbf16>
    %cst_117 = arith.constant dense<0.000000e+00> : vector<8x128xf32>
    %119 = tpu.matmul %118, %117, %cst_117 {dimension_numbers = #tpu.dot_dimension_numbers<[1], [0], [0], [1], [0, 0, 1, 1], [], []>} : vector<8x64xbf16>, vector<64x128xbf16>, vector<8x128xf32> -> vector<8x128xf32>
    %120 = arith.addf %114, %119 : vector<8x128xf32>
    %c0_118 = arith.constant 0 : index
    %c0_119 = arith.constant 0 : index
    %121 = vector.load %arg13[%c0_118, %c0_119] : memref<3x128xf32, #tpu.memory_space<vmem>>, vector<1x128xf32>
    %122 = vector.broadcast %121 : vector<1x128xf32> to vector<8x128xf32>
    %123 = arith.addf %120, %122 : vector<8x128xf32>
    %cst_120 = arith.constant 0.000000e+00 : f32
    %124 = vector.broadcast %cst_120 : f32 to vector<8x128xf32>
    %125 = arith.maximumf %123, %124 : vector<8x128xf32>
    %c0_121 = arith.constant 0 : index
    %c0_122 = arith.constant 0 : index
    %126 = vector.load %arg11[%c0_121, %c0_122] : memref<128x128xbf16, #tpu.memory_space<vmem>>, vector<128x128xbf16>
    %127 = arith.truncf %125 : vector<8x128xf32> to vector<8x128xbf16>
    %cst_123 = arith.constant dense<0.000000e+00> : vector<8x128xf32>
    %128 = tpu.matmul %127, %126, %cst_123 {dimension_numbers = #tpu.dot_dimension_numbers<[1], [0], [0], [1], [0, 0, 1, 1], [], []>} : vector<8x128xbf16>, vector<128x128xbf16>, vector<8x128xf32> -> vector<8x128xf32>
    %c1_124 = arith.constant 1 : index
    %c0_125 = arith.constant 0 : index
    %129 = vector.load %arg13[%c1_124, %c0_125] : memref<3x128xf32, #tpu.memory_space<vmem>>, vector<1x128xf32>
    %130 = vector.broadcast %129 : vector<1x128xf32> to vector<8x128xf32>
    %131 = arith.addf %128, %130 : vector<8x128xf32>
    %cst_126 = arith.constant 0.000000e+00 : f32
    %132 = vector.broadcast %cst_126 : f32 to vector<8x128xf32>
    %133 = arith.maximumf %131, %132 : vector<8x128xf32>
    %c0_127 = arith.constant 0 : index
    %c0_128 = arith.constant 0 : index
    %134 = vector.load %arg12[%c0_127, %c0_128] : memref<128x128xbf16, #tpu.memory_space<vmem>>, vector<128x128xbf16>
    %135 = arith.truncf %133 : vector<8x128xf32> to vector<8x128xbf16>
    %cst_129 = arith.constant dense<0.000000e+00> : vector<8x128xf32>
    %136 = tpu.matmul %135, %134, %cst_129 {dimension_numbers = #tpu.dot_dimension_numbers<[1], [0], [0], [1], [0, 0, 1, 1], [], []>} : vector<8x128xbf16>, vector<128x128xbf16>, vector<8x128xf32> -> vector<8x128xf32>
    %c2_130 = arith.constant 2 : index
    %c0_131 = arith.constant 0 : index
    %137 = vector.load %arg13[%c2_130, %c0_131] : memref<3x128xf32, #tpu.memory_space<vmem>>, vector<1x128xf32>
    %138 = vector.broadcast %137 : vector<1x128xf32> to vector<8x128xf32>
    %139 = arith.addf %136, %138 : vector<8x128xf32>
    %c0_132 = arith.constant 0 : index
    %c0_133 = arith.constant 0 : index
    %140 = vector.load %arg14[%c0_132, %c0_133] : memref<8x128xf32, #tpu.memory_space<vmem>>, vector<8x128xf32>
    tpu.vector_store %arg14[%c0_132, %c0_133], %139 {strides = array<i32>} : memref<8x128xf32, #tpu.memory_space<vmem>>, vector<8x128xf32>,
    return
  }
  func.func @transform_0(%arg0: i32) -> (i32, i32) {
    %c0_i32 = arith.constant 0 : i32
    %c0_i32_0 = arith.constant 0 : i32
    return %arg0, %c0_i32 : i32, i32
  }
  func.func @transform_1(%arg0: i32) -> (i32, i32, i32) {
    %c0_i32 = arith.constant 0 : i32
    %c0_i32_0 = arith.constant 0 : i32
    %c0_i32_1 = arith.constant 0 : i32
    %c0_i32_2 = arith.constant 0 : i32
    return %c0_i32, %c0_i32_0, %c0_i32_1 : i32, i32, i32
  }
  func.func @transform_2(%arg0: i32) -> (i32, i32) {
    %c0_i32 = arith.constant 0 : i32
    %c0_i32_0 = arith.constant 0 : i32
    %c0_i32_1 = arith.constant 0 : i32
    return %c0_i32, %c0_i32_0 : i32, i32
  }
  func.func @transform_3(%arg0: i32) -> (i32, i32, i32) {
    %c0_i32 = arith.constant 0 : i32
    %c0_i32_0 = arith.constant 0 : i32
    %c0_i32_1 = arith.constant 0 : i32
    %c0_i32_2 = arith.constant 0 : i32
    return %c0_i32, %c0_i32_0, %c0_i32_1 : i32, i32, i32
  }
  func.func @transform_4(%arg0: i32) -> (i32, i32) {
    %c0_i32 = arith.constant 0 : i32
    %c0_i32_0 = arith.constant 0 : i32
    %c0_i32_1 = arith.constant 0 : i32
    return %c0_i32, %c0_i32_0 : i32, i32
  }
  func.func @transform_5(%arg0: i32) -> (i32, i32, i32) {
    %c0_i32 = arith.constant 0 : i32
    %c0_i32_0 = arith.constant 0 : i32
    %c0_i32_1 = arith.constant 0 : i32
    %c0_i32_2 = arith.constant 0 : i32
    return %c0_i32, %c0_i32_0, %c0_i32_1 : i32, i32, i32
  }
  func.func @transform_6(%arg0: i32) -> (i32, i32) {
    %c0_i32 = arith.constant 0 : i32
    %c0_i32_0 = arith.constant 0 : i32
    %c0_i32_1 = arith.constant 0 : i32
    return %c0_i32, %c0_i32_0 : i32, i32
  }
  func.func @transform_7(%arg0: i32) -> (i32, i32, i32) {
    %c0_i32 = arith.constant 0 : i32
    %c0_i32_0 = arith.constant 0 : i32
    %c0_i32_1 = arith.constant 0 : i32
    %c0_i32_2 = arith.constant 0 : i32
    return %c0_i32, %c0_i32_0, %c0_i32_1 : i32, i32, i32
  }
  func.func @transform_8(%arg0: i32) -> (i32, i32) {
    %c0_i32 = arith.constant 0 : i32
    %c0_i32_0 = arith.constant 0 : i32
    %c0_i32_1 = arith.constant 0 : i32
    return %c0_i32, %c0_i32_0 : i32, i32
  }
  func.func @transform_9(%arg0: i32) -> (i32, i32, i32) {
    %c0_i32 = arith.constant 0 : i32
    %c0_i32_0 = arith.constant 0 : i32
    %c0_i32_1 = arith.constant 0 : i32
    %c0_i32_2 = arith.constant 0 : i32
    return %c0_i32, %c0_i32_0, %c0_i32_1 : i32, i32, i32
  }
  func.func @transform_10(%arg0: i32) -> (i32, i32) {
    %c0_i32 = arith.constant 0 : i32
    %c0_i32_0 = arith.constant 0 : i32
    %c0_i32_1 = arith.constant 0 : i32
    return %c0_i32, %c0_i32_0 : i32, i32
  }
  func.func @transform_11(%arg0: i32) -> (i32, i32) {
    %c0_i32 = arith.constant 0 : i32
    %c0_i32_0 = arith.constant 0 : i32
    %c0_i32_1 = arith.constant 0 : i32
    return %c0_i32, %c0_i32_0 : i32, i32
  }
  func.func @transform_12(%arg0: i32) -> (i32, i32) {
    %c0_i32 = arith.constant 0 : i32
    %c0_i32_0 = arith.constant 0 : i32
    %c0_i32_1 = arith.constant 0 : i32
    return %c0_i32, %c0_i32_0 : i32, i32
  }
  func.func @transform_13(%arg0: i32) -> (i32, i32) {
    %c0_i32 = arith.constant 0 : i32
    %c0_i32_0 = arith.constant 0 : i32
    return %arg0, %c0_i32 : i32, i32
  }
}

</mosaic_0001>

<llo_original>
// kernel: forward.1
$region0: #{forward.1}
  #allocation0 [shape = 'u32[]', space=smem, size = 0x4, offset = 0x4, fixed_abs, tag = 'smem constant byte address 0x4 - core index']
  #allocation1 [shape = 'u32[144,128]{1,0:T(1,128)}', space=vmem, size = 0x12000, scoped, tag = 'internal scratch']
  #allocation2 [shape = 'bf16[232,28]{1,0:T(8,128)(2,1)}', space=vmem, size = 0xe800, scoped, tag = 'scratch operand']
  #allocation3 [shape = 'bf16[232,144]{1,0:T(8,128)(2,1)}', space=vmem, size = 0x1d000, scoped, tag = 'scratch operand']
  #allocation4 [shape = 'bf16[104,72]{1,0:T(8,128)(2,1)}', space=vmem, size = 0x6800, scoped, tag = 'scratch operand']
  #allocation5 [shape = 'bf16[104,128]{1,0:T(8,128)(2,1)}', space=vmem, size = 0x6800, scoped, tag = 'scratch operand']
  %s0 = inlined_call_operand.vmem [shape: bf16[224,28], index: 0, kind: input, shape index: {}]
  %s1 = inlined_call_operand.vmem [shape: bf16[5,28,144], index: 1, kind: input, shape index: {}]
  %s2 = inlined_call_operand.vmem [shape: bf16[96,224], index: 2, kind: input, shape index: {}]
  %s3 = inlined_call_operand.vmem [shape: bf16[2,144,72], index: 3, kind: input, shape index: {}]
  %s4 = inlined_call_operand.hbm [shape: f32[1,144], index: 4, kind: input, shape index: {}]
  %s5 = inlined_call_operand.vmem [shape: bf16[5,72,128], index: 5, kind: input, shape index: {}]
  %s6 = inlined_call_operand.hbm [shape: bf16[32,96], index: 6, kind: input, shape index: {}]
  %s7 = inlined_call_operand.vmem [shape: bf16[2,128,64], index: 7, kind: input, shape index: {}]
  %s8 = inlined_call_operand.vmem [shape: f32[1,128], index: 8, kind: input, shape index: {}]
  %s9 = inlined_call_operand.vmem [shape: bf16[4,64,128], index: 9, kind: input, shape index: {}]
  %s10 = inlined_call_operand.hbm [shape: bf16[128,128], index: 10, kind: input, shape index: {}]
  %s11 = inlined_call_operand.vmem [shape: bf16[128,128], index: 11, kind: input, shape index: {}]
  %s12 = inlined_call_operand.vmem [shape: f32[3,128], index: 12, kind: input, shape index: {}]
  %s13 = inlined_call_operand.vmem [shape: f32[8,128], index: 13, kind: output, shape index: {}]
  %s14 = sld [smem:[#allocation0]]
  $region74: #{forward.1} parent=0
    _
  %s16 = ssub.s32 1, %s14
  %s17 = scalar_select 0, %s16, %s14
  $region1: #{forward.1} parent=0
    #allocation6 [shape = 'u8[1024]{0}', space=vmem, size = 0x400, scoped, tag = 'input window, operand 4, single buffered']
    #allocation7 [shape = 's32[1]{0}', space=sflag, size = 0x4, scoped, tag = 'scoped memory for forward.1']
    #allocation8 [shape = 'u8[8192]{0}', space=vmem, size = 0x2000, scoped, tag = 'input window, operand 6, single buffered']
    #allocation9 [shape = 's32[1]{0}', space=sflag, size = 0x4, scoped, tag = 'scoped memory for forward.1']
    #allocation10 [shape = 'u8[32768]{0}', space=vmem, size = 0x8000, scoped, tag = 'input window, operand 10, single buffered']
    %18 = vsyncpa [#allocation7], 0
    %19 = vsyncpa [#allocation9], 0
    // Predicated region
    $region2: #{forward.1} parent=1 // pred_check
      _
    $region3: #{forward.1} parent=1 // pred_check_branch
      %21 = sbr.rel (0) target = $region5
    $region4: #{forward.1} parent=1 // pred_region
      _
    $region5: #{forward.1} parent=1 // pred_fallthru
      _
    // Predicated region
    $region6: #{forward.1} parent=1 // pred_check
      _
    $region7: #{forward.1} parent=1 // pred_check_branch
      %23 = sbr.rel (0) target = $region9
    $region8: #{forward.1} parent=1 // pred_region
      _
    $region9: #{forward.1} parent=1 // pred_fallthru
      _
    // Predicated region
    $region10: #{forward.1} parent=1 // pred_check
      _
    $region11: #{forward.1} parent=1 // pred_check_branch
      %25 = sbr.rel (0) target = $region13
    $region12: #{forward.1} parent=1 // pred_region
      _
    $region13: #{forward.1} parent=1 // pred_fallthru
      _
    // Predicated region
    $region14: #{forward.1} parent=1 // pred_check
      _
    $region15: #{forward.1} parent=1 // pred_check_branch
      %27 = sbr.rel (0) target = $region17
    $region16: #{forward.1} parent=1 // pred_region
      _
    $region17: #{forward.1} parent=1 // pred_fallthru
      _
    // Predicated region
    $region18: #{forward.1} parent=1 // pred_check
      _
    $region19: #{forward.1} parent=1 // pred_check_branch
      %29 = sbr.rel (0) target = $region21
    $region20: #{forward.1} parent=1 // pred_region
      %s31 = ssub.s32 32, 32
      %32 = vsyncadd [#allocation7], %s31
      %s34 = sshll.u32 [#allocation6], 4
      %s35 = int_to_ptr.vmem [resolvable:$true] %s34
      %37 = dma.hbm_to_vmem [thread:$0]  %s4, 32, %s35, [#allocation7]
    $region21: #{forward.1} parent=1 // pred_fallthru
      _
    // Predicated region
    $region22: #{forward.1} parent=1 // pred_check
      _
    $region23: #{forward.1} parent=1 // pred_check_branch
      %39 = sbr.rel (0) target = $region25
    $region24: #{forward.1} parent=1 // pred_region
      _
    $region25: #{forward.1} parent=1 // pred_fallthru
      _
    // Predicated region
    $region26: #{forward.1} parent=1 // pred_check
      _
    $region27: #{forward.1} parent=1 // pred_check_branch
      %41 = sbr.rel (0) target = $region29
    $region28: #{forward.1} parent=1 // pred_region
      %s43 = ssub.s32 256, 256
      %44 = vsyncadd [#allocation9], %s43
      %s45 = sshll.u32 [#allocation8], 4
      %s46 = int_to_ptr.vmem [resolvable:$true] %s45
      %51 = dma.hbm_to_vmem [thread:$0]  %s6, 256, %s46, [#allocation9], 64, 64, 4
    $region29: #{forward.1} parent=1 // pred_fallthru
      _
    // Predicated region
    $region30: #{forward.1} parent=1 // pred_check
      _
    $region31: #{forward.1} parent=1 // pred_check_branch
      %53 = sbr.rel (0) target = $region33
    $region32: #{forward.1} parent=1 // pred_region
      _
    $region33: #{forward.1} parent=1 // pred_fallthru
      _
    // Predicated region
    $region34: #{forward.1} parent=1 // pred_check
      _
    $region35: #{forward.1} parent=1 // pred_check_branch
      %55 = sbr.rel (0) target = $region37
    $region36: #{forward.1} parent=1 // pred_region
      _
    $region37: #{forward.1} parent=1 // pred_fallthru
      _
    // Predicated region
    $region38: #{forward.1} parent=1 // pred_check
      _
    $region39: #{forward.1} parent=1 // pred_check_branch
      %57 = sbr.rel (0) target = $region41
    $region40: #{forward.1} parent=1 // pred_region
      _
    $region41: #{forward.1} parent=1 // pred_fallthru
      _
    // Predicated region
    $region42: #{forward.1} parent=1 // pred_check
      _
    $region43: #{forward.1} parent=1 // pred_check_branch
      %59 = sbr.rel (0) target = $region45
    $region44: #{forward.1} parent=1 // pred_region
      %s61 = ssub.s32 1024, 1024
      %62 = vsyncadd [#allocation9], %s61
      %s63 = sshll.u32 [#allocation10], 4
      %s64 = int_to_ptr.vmem [resolvable:$true] %s63
      %69 = dma.hbm_to_vmem [thread:$0]  %s10, 1024, %s64, [#allocation9], 64, 64, 4
    $region45: #{forward.1} parent=1 // pred_fallthru
      _
    // Predicated region
    $region46: #{forward.1} parent=1 // pred_check
      _
    $region47: #{forward.1} parent=1 // pred_check_branch
      %71 = sbr.rel (0) target = $region49
    $region48: #{forward.1} parent=1 // pred_region
      _
    $region49: #{forward.1} parent=1 // pred_fallthru
      _
    // Predicated region
    $region50: #{forward.1} parent=1 // pred_check
      _
    $region51: #{forward.1} parent=1 // pred_check_branch
      %73 = sbr.rel (0) target = $region53
    $region52: #{forward.1} parent=1 // pred_region
      _
    $region53: #{forward.1} parent=1 // pred_fallthru
      _
    // Predicated region
    $region54: #{forward.1} parent=1 // pred_check
      _
    $region55: #{forward.1} parent=1 // pred_check_branch
      %75 = sbr.rel (0) target = $region57
    $region56: #{forward.1} parent=1 // pred_region
      %76 = dma.done [#allocation7], 32
    $region57: #{forward.1} parent=1 // pred_fallthru
      _
    // Predicated region
    $region58: #{forward.1} parent=1 // pred_check
      _
    $region59: #{forward.1} parent=1 // pred_check_branch
      %78 = sbr.rel (0) target = $region61
    $region60: #{forward.1} parent=1 // pred_region
      %79 = dma.done [#allocation9], 256
    $region61: #{forward.1} parent=1 // pred_fallthru
      _
    // Predicated region
    $region62: #{forward.1} parent=1 // pred_check
      _
    $region63: #{forward.1} parent=1 // pred_check_branch
      %81 = sbr.rel (0) target = $region65
    $region64: #{forward.1} parent=1 // pred_region
      %82 = dma.done [#allocation9], 1024
    $region65: #{forward.1} parent=1 // pred_fallthru
      _
    %v84 = vld [vmem:[%s0] sm:$0xf]
    %v85 = vld [vmem:[%s0 + $0x4] sm:$0xf]
    %v86 = vld [vmem:[%s0 + $0x8] sm:$0xf]
    %v87 = vld [vmem:[%s0 + $0xc] sm:$0xf]
    %v88 = vld [vmem:[%s0 + $0x10] sm:$0xf]
    %v89 = vld [vmem:[%s0 + $0x14] sm:$0xf]
    %v90 = vld [vmem:[%s0 + $0x18] sm:$0xf]
    %v91 = vld [vmem:[%s0 + $0x1c] sm:$0xf]
    %v92 = vld [vmem:[%s0 + $0x20] sm:$0xf]
    %v93 = vld [vmem:[%s0 + $0x24] sm:$0xf]
    %v94 = vld [vmem:[%s0 + $0x28] sm:$0xf]
    %v95 = vld [vmem:[%s0 + $0x2c] sm:$0xf]
    %v96 = vld [vmem:[%s0 + $0x30] sm:$0xf]
    %v97 = vld [vmem:[%s0 + $0x34] sm:$0xf]
    %v98 = vld [vmem:[%s0 + $0x38] sm:$0xf]
    %v99 = vld [vmem:[%s0 + $0x3c] sm:$0xf]
    %v100 = vld [vmem:[%s0 + $0x40] sm:$0xf]
    %v101 = vld [vmem:[%s0 + $0x44] sm:$0xf]
    %v102 = vld [vmem:[%s0 + $0x48] sm:$0xf]
    %v103 = vld [vmem:[%s0 + $0x4c] sm:$0xf]
    %v104 = vld [vmem:[%s0 + $0x50] sm:$0xf]
    %v105 = vld [vmem:[%s0 + $0x54] sm:$0xf]
    %v106 = vld [vmem:[%s0 + $0x58] sm:$0xf]
    %v107 = vld [vmem:[%s0 + $0x5c] sm:$0xf]
    %v108 = vld [vmem:[%s0 + $0x60] sm:$0xf]
    %v109 = vld [vmem:[%s0 + $0x64] sm:$0xf]
    %v110 = vld [vmem:[%s0 + $0x68] sm:$0xf]
    %v111 = vld [vmem:[%s0 + $0x6c] sm:$0xf]
    %vm112 = vcmask 224256
    %113 = vst.msk [vmem:[#allocation2] sm:$0xf] %vm112, %v84
    %114 = vst.msk [vmem:[#allocation2 + $0x4] sm:$0xf] %vm112, %v85
    %115 = vst.msk [vmem:[#allocation2 + $0x8] sm:$0xf] %vm112, %v86
    %116 = vst.msk [vmem:[#allocation2 + $0xc] sm:$0xf] %vm112, %v87
    %117 = vst.msk [vmem:[#allocation2 + $0x10] sm:$0xf] %vm112, %v88
    %118 = vst.msk [vmem:[#allocation2 + $0x14] sm:$0xf] %vm112, %v89
    %119 = vst.msk [vmem:[#allocation2 + $0x18] sm:$0xf] %vm112, %v90
    %120 = vst.msk [vmem:[#allocation2 + $0x1c] sm:$0xf] %vm112, %v91
    %121 = vst.msk [vmem:[#allocation2 + $0x20] sm:$0xf] %vm112, %v92
    %122 = vst.msk [vmem:[#allocation2 + $0x24] sm:$0xf] %vm112, %v93
    %123 = vst.msk [vmem:[#allocation2 + $0x28] sm:$0xf] %vm112, %v94
    %124 = vst.msk [vmem:[#allocation2 + $0x2c] sm:$0xf] %vm112, %v95
    %125 = vst.msk [vmem:[#allocation2 + $0x30] sm:$0xf] %vm112, %v96
    %126 = vst.msk [vmem:[#allocation2 + $0x34] sm:$0xf] %vm112, %v97
    %127 = vst.msk [vmem:[#allocation2 + $0x38] sm:$0xf] %vm112, %v98
    %128 = vst.msk [vmem:[#allocation2 + $0x3c] sm:$0xf] %vm112, %v99
    %129 = vst.msk [vmem:[#allocation2 + $0x40] sm:$0xf] %vm112, %v100
    %130 = vst.msk [vmem:[#allocation2 + $0x44] sm:$0xf] %vm112, %v101
    %131 = vst.msk [vmem:[#allocation2 + $0x48] sm:$0xf] %vm112, %v102
    %132 = vst.msk [vmem:[#allocation2 + $0x4c] sm:$0xf] %vm112, %v103
    %133 = vst.msk [vmem:[#allocation2 + $0x50] sm:$0xf] %vm112, %v104
    %134 = vst.msk [vmem:[#allocation2 + $0x54] sm:$0xf] %vm112, %v105
    %135 = vst.msk [vmem:[#allocation2 + $0x58] sm:$0xf] %vm112, %v106
    %136 = vst.msk [vmem:[#allocation2 + $0x5c] sm:$0xf] %vm112, %v107
    %137 = vst.msk [vmem:[#allocation2 + $0x60] sm:$0xf] %vm112, %v108
    %138 = vst.msk [vmem:[#allocation2 + $0x64] sm:$0xf] %vm112, %v109
    %139 = vst.msk [vmem:[#allocation2 + $0x68] sm:$0xf] %vm112, %v110
    %140 = vst.msk [vmem:[#allocation2 + $0x6c] sm:$0xf] %vm112, %v111
    %141 = vst.msk [vmem:[#allocation2 + $0x70] sm:$0xf] %vm112, 0
    %v142 = vld [vmem:[%s1] sm:$0xff]
    %v143 = vld [vmem:[%s1 + $0x8] sm:$0xff]
    %v144 = vld [vmem:[%s1 + $0x10] sm:$0xff]
    %v145 = vld [vmem:[%s1 + $0x18] sm:$0x33]
    %v146 = vld [vmem:[#allocation2] sm:$0xf]
    %v147 = vld [vmem:[#allocation2 + $0x4] sm:$0xf]
    %v148 = vld [vmem:[#allocation2 + $0x8] sm:$0xf]
    %v149 = vld [vmem:[#allocation2 + $0xc] sm:$0xf]
    %v150 = vld [vmem:[#allocation2 + $0x10] sm:$0xf]
    %v151 = vld [vmem:[#allocation2 + $0x14] sm:$0xf]
    %v152 = vld [vmem:[#allocation2 + $0x18] sm:$0xf]
    %v153 = vld [vmem:[#allocation2 + $0x1c] sm:$0xf]
    %v154 = vld [vmem:[#allocation2 + $0x20] sm:$0xf]
    %v155 = vld [vmem:[#allocation2 + $0x24] sm:$0xf]
    %v156 = vld [vmem:[#allocation2 + $0x28] sm:$0xf]
    %v157 = vld [vmem:[#allocation2 + $0x2c] sm:$0xf]
    %v158 = vld [vmem:[#allocation2 + $0x30] sm:$0xf]
    %v159 = vld [vmem:[#allocation2 + $0x34] sm:$0xf]
    %v160 = vld [vmem:[#allocation2 + $0x38] sm:$0xf]
    %v161 = vld [vmem:[#allocation2 + $0x3c] sm:$0xf]
    %v162 = vld [vmem:[#allocation2 + $0x40] sm:$0xf]
    %v163 = vld [vmem:[#allocation2 + $0x44] sm:$0xf]
    %v164 = vld [vmem:[#allocation2 + $0x48] sm:$0xf]
    %v165 = vld [vmem:[#allocation2 + $0x4c] sm:$0xf]
    %v166 = vld [vmem:[#allocation2 + $0x50] sm:$0xf]
    %v167 = vld [vmem:[#allocation2 + $0x54] sm:$0xf]
    %v168 = vld [vmem:[#allocation2 + $0x58] sm:$0xf]
    %v169 = vld [vmem:[#allocation2 + $0x5c] sm:$0xf]
    %v170 = vld [vmem:[#allocation2 + $0x60] sm:$0xf]
    %v171 = vld [vmem:[#allocation2 + $0x64] sm:$0xf]
    %v172 = vld [vmem:[#allocation2 + $0x68] sm:$0xf]
    %v173 = vld [vmem:[#allocation2 + $0x6c] sm:$0xf]
    %v174 = vld [vmem:[#allocation2 + $0x70] sm:$0x1]
    %s175 = scalar_lea.vmem %s1, 32
    %v176 = vld [vmem:[%s175] sm:$0xff]
    %v177 = vld [vmem:[%s175 + $0x8] sm:$0xff]
    %v178 = vld [vmem:[%s175 + $0x10] sm:$0xff]
    %v179 = vld [vmem:[%s175 + $0x18] sm:$0x33]
    %v209 = vunpack.c.l.b16 %v146
    %v210 = vunpack.c.l.b16 %v147
    %v211 = vunpack.c.l.b16 %v148
    %v212 = vunpack.c.l.b16 %v149
    %v213 = vunpack.c.l.b16 %v150
    %v214 = vunpack.c.l.b16 %v151
    %v215 = vunpack.c.l.b16 %v152
    %v216 = vunpack.c.l.b16 %v153
    %v217 = vunpack.c.l.b16 %v154
    %v218 = vunpack.c.l.b16 %v155
    %v219 = vunpack.c.l.b16 %v156
    %v220 = vunpack.c.l.b16 %v157
    %v221 = vunpack.c.l.b16 %v158
    %v222 = vunpack.c.l.b16 %v159
    %v223 = vunpack.c.l.b16 %v160
    %v224 = vunpack.c.l.b16 %v161
    %v225 = vunpack.c.l.b16 %v162
    %v226 = vunpack.c.l.b16 %v163
    %v227 = vunpack.c.l.b16 %v164
    %v228 = vunpack.c.l.b16 %v165
    %v229 = vunpack.c.l.b16 %v166
    %v230 = vunpack.c.l.b16 %v167
    %v231 = vunpack.c.l.b16 %v168
    %v232 = vunpack.c.l.b16 %v169
    %v233 = vunpack.c.l.b16 %v170
    %v234 = vunpack.c.l.b16 %v171
    %v235 = vunpack.c.l.b16 %v172
    %v236 = vunpack.c.l.b16 %v173
    %v237 = vunpack.c.l.b16 %v174
    %v238 = vpack.c.b16 %v210, %v209
    %v239 = vpack.c.b16 %v212, %v211
    %v240 = vpack.c.b16 %v214, %v213
    %v241 = vpack.c.b16 %v216, %v215
    %v242 = vpack.c.b16 %v218, %v217
    %v243 = vpack.c.b16 %v220, %v219
    %v244 = vpack.c.b16 %v222, %v221
    %v245 = vpack.c.b16 %v224, %v223
    %v246 = vpack.c.b16 %v226, %v225
    %v247 = vpack.c.b16 %v228, %v227
    %v248 = vpack.c.b16 %v230, %v229
    %v249 = vpack.c.b16 %v232, %v231
    %v250 = vpack.c.b16 %v234, %v233
    %v251 = vpack.c.b16 %v236, %v235
    %v252 = vpack.c.b16 %v237, %v237
    %vm253 = vsmask.f32 7424
    %v255 = vshrl.u32 %v238, 16
    %v257 = vshll.u32 %v238, 16
    %v259 = vrot.slane %v257, 1
    %v260 = vor.u32 %v255, %v259
    %v262 = vshll.u32 %v239, 16
    %v264 = vrot.slane %v262, 1
    %v265 = vsel %vm253, %v260, %v264
    %v266 = vshrl.u32 %v239, 16
    %v268 = vor.u32 %v266, %v264
    %v270 = vshll.u32 %v240, 16
    %v272 = vrot.slane %v270, 1
    %v273 = vsel %vm253, %v268, %v272
    %v274 = vshrl.u32 %v240, 16
    %v276 = vor.u32 %v274, %v272
    %v278 = vshll.u32 %v241, 16
    %v280 = vrot.slane %v278, 1
    %v281 = vsel %vm253, %v276, %v280
    %v282 = vshrl.u32 %v241, 16
    %v284 = vor.u32 %v282, %v280
    %v286 = vshll.u32 %v242, 16
    %v288 = vrot.slane %v286, 1
    %v289 = vsel %vm253, %v284, %v288
    %v290 = vshrl.u32 %v242, 16
    %v292 = vor.u32 %v290, %v288
    %v294 = vshll.u32 %v243, 16
    %v296 = vrot.slane %v294, 1
    %v297 = vsel %vm253, %v292, %v296
    %v298 = vshrl.u32 %v243, 16
    %v300 = vor.u32 %v298, %v296
    %v302 = vshll.u32 %v244, 16
    %v304 = vrot.slane %v302, 1
    %v305 = vsel %vm253, %v300, %v304
    %v306 = vshrl.u32 %v244, 16
    %v308 = vor.u32 %v306, %v304
    %v310 = vshll.u32 %v245, 16
    %v312 = vrot.slane %v310, 1
    %v313 = vsel %vm253, %v308, %v312
    %v314 = vshrl.u32 %v245, 16
    %v316 = vor.u32 %v314, %v312
    %v318 = vshll.u32 %v246, 16
    %v320 = vrot.slane %v318, 1
    %v321 = vsel %vm253, %v316, %v320
    %v322 = vshrl.u32 %v246, 16
    %v324 = vor.u32 %v322, %v320
    %v326 = vshll.u32 %v247, 16
    %v328 = vrot.slane %v326, 1
    %v329 = vsel %vm253, %v324, %v328
    %v330 = vshrl.u32 %v247, 16
    %v332 = vor.u32 %v330, %v328
    %v334 = vshll.u32 %v248, 16
    %v336 = vrot.slane %v334, 1
    %v337 = vsel %vm253, %v332, %v336
    %v338 = vshrl.u32 %v248, 16
    %v340 = vor.u32 %v338, %v336
    %v342 = vshll.u32 %v249, 16
    %v344 = vrot.slane %v342, 1
    %v345 = vsel %vm253, %v340, %v344
    %v346 = vshrl.u32 %v249, 16
    %v348 = vor.u32 %v346, %v344
    %v350 = vshll.u32 %v250, 16
    %v352 = vrot.slane %v350, 1
    %v353 = vsel %vm253, %v348, %v352
    %v354 = vshrl.u32 %v250, 16
    %v356 = vor.u32 %v354, %v352
    %v358 = vshll.u32 %v251, 16
    %v360 = vrot.slane %v358, 1
    %v361 = vsel %vm253, %v356, %v360
    %v362 = vshrl.u32 %v251, 16
    %v364 = vor.u32 %v362, %v360
    %v366 = vshll.u32 %v252, 16
    %v368 = vrot.slane %v366, 1
    %v369 = vsel %vm253, %v364, %v368
    %v374 = vunpack.c.l.b16 %v176
    %v375 = vunpack.c.h.b16 %v176
    %v376 = vunpack.c.l.b16 %v177
    %v377 = vunpack.c.h.b16 %v177
    %v378 = vunpack.c.l.b16 %v178
    %v379 = vunpack.c.h.b16 %v178
    %v380 = vunpack.c.l.b16 %v179
    %v381 = vunpack.c.h.b16 %v179
    %v382 = vpack.c.b16 %v376, %v374
    %v383 = vpack.c.b16 %v377, %v375
    %v384 = vpack.c.b16 %v380, %v378
    %v385 = vpack.c.b16 %v381, %v379
    %vm388 = vcmask 228352
    %v390 = vsel %vm388, %v265, 0
    %v393 = vsel %vm388, %v273, 0
    %v396 = vsel %vm388, %v281, 0
    %v399 = vsel %vm388, %v289, 0
    %v402 = vsel %vm388, %v297, 0
    %v405 = vsel %vm388, %v305, 0
    %v408 = vsel %vm388, %v313, 0
    %v411 = vsel %vm388, %v321, 0
    %v414 = vsel %vm388, %v329, 0
    %v417 = vsel %vm388, %v337, 0
    %v420 = vsel %vm388, %v345, 0
    %v423 = vsel %vm388, %v353, 0
    %v426 = vsel %vm388, %v361, 0
    %v429 = vsel %vm388, %v369, 0
    %vm431 = vcmask 1045504
    %v433 = vsel %vm431, %v384, 0
    %v436 = vsel %vm431, %v385, 0
    %438 = vmatprep.subr.bf16.mxu0 %v383
    %439 = vmatpush1.bf16.msra.mxu0 %v382
    %440 = vmatprep.subr.bf16.mxu0 %v436
    %441 = vmatpush1.bf16.msra.mxu0 %v433
    %442 = vmatprep.subr.bf16.mxu0 0
    %443 = vmatpush1.bf16.msra.mxu0 0
    %444 = vmatprep.subr.bf16.mxu0 0
    %445 = vmatpush1.bf16.msra.mxu0 0
    %446 = vmatprep.subr.bf16.mxu0 0
    %447 = vmatpush1.bf16.msra.mxu0 0
    %448 = vmatprep.subr.bf16.mxu0 0
    %449 = vmatpush1.bf16.msra.mxu0 0
    %450 = vmatprep.subr.bf16.mxu0 0
    %451 = vmatpush1.bf16.msra.mxu0 0
    %452 = vmatprep.subr.bf16.mxu0 0
    %453 = vmatpush1.bf16.msra.mxu0 0
    %454 = vmatprep.subr.bf16.mxu0 0
    %455 = vmatpush1.bf16.msra.mxu0 0
    %456 = vmatprep.subr.bf16.mxu0 0
    %457 = vmatpush1.bf16.msra.mxu0 0
    %458 = vmatprep.subr.bf16.mxu0 0
    %459 = vmatpush1.bf16.msra.mxu0 0
    %460 = vmatprep.subr.bf16.mxu0 0
    %461 = vmatpush1.bf16.msra.mxu0 0
    %462 = vmatprep.subr.bf16.mxu0 0
    %463 = vmatpush1.bf16.msra.mxu0 0
    %464 = vmatprep.subr.bf16.mxu0 0
    %465 = vmatpush1.bf16.msra.mxu0 0
    %466 = vmatprep.subr.bf16.mxu0 0
    %467 = vmatpush1.bf16.msra.mxu0 0
    %468 = vmatprep.subr.bf16.mxu0 0
    %469 = vmatpush1.bf16.msra.mxu0 0
    %470 = vmatprep.mubr.bf16.mxu0 0
    %471 = vmatmul.mubr.bf16.gmra.mrb[0].mxu0 %v390
    %v472 = vpop.f32.mrb[0].mxu0
    %v473 = vadd.f32 0.0, %v472
    %v474 = vpop.f32.mrb[0].mxu0
    %v475 = vadd.f32 0.0, %v474
    %v476 = vpop.f32.mrb[0].mxu0
    %v477 = vadd.f32 0.0, %v476
    %v478 = vpop.f32.mrb[0].mxu0
    %v479 = vadd.f32 0.0, %v478
    %480 = vmatprep.mubr.bf16.mxu0 0
    %481 = vmatmul.mubr.bf16.gmra.mrb[0].mxu0 %v393
    %v482 = vpop.f32.mrb[0].mxu0
    %v483 = vadd.f32 0.0, %v482
    %v484 = vpop.f32.mrb[0].mxu0
    %v485 = vadd.f32 0.0, %v484
    %v486 = vpop.f32.mrb[0].mxu0
    %v487 = vadd.f32 0.0, %v486
    %v488 = vpop.f32.mrb[0].mxu0
    %v489 = vadd.f32 0.0, %v488
    %490 = vmatprep.mubr.bf16.mxu0 0
    %491 = vmatmul.mubr.bf16.gmra.mrb[0].mxu0 %v396
    %v492 = vpop.f32.mrb[0].mxu0
    %v493 = vadd.f32 0.0, %v492
    %v494 = vpop.f32.mrb[0].mxu0
    %v495 = vadd.f32 0.0, %v494
    %v496 = vpop.f32.mrb[0].mxu0
    %v497 = vadd.f32 0.0, %v496
    %v498 = vpop.f32.mrb[0].mxu0
    %v499 = vadd.f32 0.0, %v498
    %500 = vmatprep.mubr.bf16.mxu0 0
    %501 = vmatmul.mubr.bf16.gmra.mrb[0].mxu0 %v399
    %v502 = vpop.f32.mrb[0].mxu0
    %v503 = vadd.f32 0.0, %v502
    %v504 = vpop.f32.mrb[0].mxu0
    %v505 = vadd.f32 0.0, %v504
    %v506 = vpop.f32.mrb[0].mxu0
    %v507 = vadd.f32 0.0, %v506
    %v508 = vpop.f32.mrb[0].mxu0
    %v509 = vadd.f32 0.0, %v508
    %510 = vmatprep.mubr.bf16.mxu0 0
    %511 = vmatmul.mubr.bf16.gmra.mrb[0].mxu0 %v402
    %v512 = vpop.f32.mrb[0].mxu0
    %v513 = vadd.f32 0.0, %v512
    %v514 = vpop.f32.mrb[0].mxu0
    %v515 = vadd.f32 0.0, %v514
    %v516 = vpop.f32.mrb[0].mxu0
    %v517 = vadd.f32 0.0, %v516
    %v518 = vpop.f32.mrb[0].mxu0
    %v519 = vadd.f32 0.0, %v518
    %520 = vmatprep.mubr.bf16.mxu0 0
    %521 = vmatmul.mubr.bf16.gmra.mrb[0].mxu0 %v405
    %v522 = vpop.f32.mrb[0].mxu0
    %v523 = vadd.f32 0.0, %v522
    %v524 = vpop.f32.mrb[0].mxu0
    %v525 = vadd.f32 0.0, %v524
    %v526 = vpop.f32.mrb[0].mxu0
    %v527 = vadd.f32 0.0, %v526
    %v528 = vpop.f32.mrb[0].mxu0
    %v529 = vadd.f32 0.0, %v528
    %530 = vmatprep.mubr.bf16.mxu0 0
    %531 = vmatmul.mubr.bf16.gmra.mrb[0].mxu0 %v408
    %v532 = vpop.f32.mrb[0].mxu0
    %v533 = vadd.f32 0.0, %v532
    %v534 = vpop.f32.mrb[0].mxu0
    %v535 = vadd.f32 0.0, %v534
    %v536 = vpop.f32.mrb[0].mxu0
    %v537 = vadd.f32 0.0, %v536
    %v538 = vpop.f32.mrb[0].mxu0
    %v539 = vadd.f32 0.0, %v538
    %540 = vmatprep.mubr.bf16.mxu0 0
    %541 = vmatmul.mubr.bf16.gmra.mrb[0].mxu0 %v411
    %v542 = vpop.f32.mrb[0].mxu0
    %v543 = vadd.f32 0.0, %v542
    %v544 = vpop.f32.mrb[0].mxu0
    %v545 = vadd.f32 0.0, %v544
    %v546 = vpop.f32.mrb[0].mxu0
    %v547 = vadd.f32 0.0, %v546
    %v548 = vpop.f32.mrb[0].mxu0
    %v549 = vadd.f32 0.0, %v548
    %550 = vmatprep.mubr.bf16.mxu0 0
    %551 = vmatmul.mubr.bf16.gmra.mrb[0].mxu0 %v414
    %v552 = vpop.f32.mrb[0].mxu0
    %v553 = vadd.f32 0.0, %v552
    %v554 = vpop.f32.mrb[0].mxu0
    %v555 = vadd.f32 0.0, %v554
    %v556 = vpop.f32.mrb[0].mxu0
    %v557 = vadd.f32 0.0, %v556
    %v558 = vpop.f32.mrb[0].mxu0
    %v559 = vadd.f32 0.0, %v558
    %560 = vmatprep.mubr.bf16.mxu0 0
    %561 = vmatmul.mubr.bf16.gmra.mrb[0].mxu0 %v417
    %v562 = vpop.f32.mrb[0].mxu0
    %v563 = vadd.f32 0.0, %v562
    %v564 = vpop.f32.mrb[0].mxu0
    %v565 = vadd.f32 0.0, %v564
    %v566 = vpop.f32.mrb[0].mxu0
    %v567 = vadd.f32 0.0, %v566
    %v568 = vpop.f32.mrb[0].mxu0
    %v569 = vadd.f32 0.0, %v568
    %570 = vmatprep.mubr.bf16.mxu0 0
    %571 = vmatmul.mubr.bf16.gmra.mrb[0].mxu0 %v420
    %v572 = vpop.f32.mrb[0].mxu0
    %v573 = vadd.f32 0.0, %v572
    %v574 = vpop.f32.mrb[0].mxu0
    %v575 = vadd.f32 0.0, %v574
    %v576 = vpop.f32.mrb[0].mxu0
    %v577 = vadd.f32 0.0, %v576
    %v578 = vpop.f32.mrb[0].mxu0
    %v579 = vadd.f32 0.0, %v578
    %580 = vmatprep.mubr.bf16.mxu0 0
    %581 = vmatmul.mubr.bf16.gmra.mrb[0].mxu0 %v423
    %v582 = vpop.f32.mrb[0].mxu0
    %v583 = vadd.f32 0.0, %v582
    %v584 = vpop.f32.mrb[0].mxu0
    %v585 = vadd.f32 0.0, %v584
    %v586 = vpop.f32.mrb[0].mxu0
    %v587 = vadd.f32 0.0, %v586
    %v588 = vpop.f32.mrb[0].mxu0
    %v589 = vadd.f32 0.0, %v588
    %590 = vmatprep.mubr.bf16.mxu0 0
    %591 = vmatmul.mubr.bf16.gmra.mrb[0].mxu0 %v426
    %v592 = vpop.f32.mrb[0].mxu0
    %v593 = vadd.f32 0.0, %v592
    %v594 = vpop.f32.mrb[0].mxu0
    %v595 = vadd.f32 0.0, %v594
    %v596 = vpop.f32.mrb[0].mxu0
    %v597 = vadd.f32 0.0, %v596
    %v598 = vpop.f32.mrb[0].mxu0
    %v599 = vadd.f32 0.0, %v598
    %600 = vmatprep.mubr.bf16.mxu0 0
    %601 = vmatmul.mubr.bf16.gmra.mrb[0].mxu0 %v429
    %v602 = vpop.f32.mrb[0].mxu0
    %v603 = vadd.f32 0.0, %v602
    %v604 = vpop.f32.mrb[0].mxu0
    %v605 = vadd.f32 0.0, %v604
    %v606 = vpop.f32.mrb[0].mxu0
    %v607 = vadd.f32 0.0, %v606
    %v608 = vpop.f32.mrb[0].mxu0
    %v609 = vadd.f32 0.0, %v608
    %610 = vdwg.mxu0
    %v639 = vunpack.c.l.b16 %v84
    %v640 = vunpack.c.l.b16 %v85
    %v641 = vunpack.c.l.b16 %v86
    %v642 = vunpack.c.l.b16 %v87
    %v643 = vunpack.c.l.b16 %v88
    %v644 = vunpack.c.l.b16 %v89
    %v645 = vunpack.c.l.b16 %v90
    %v646 = vunpack.c.l.b16 %v91
    %v647 = vunpack.c.l.b16 %v92
    %v648 = vunpack.c.l.b16 %v93
    %v649 = vunpack.c.l.b16 %v94
    %v650 = vunpack.c.l.b16 %v95
    %v651 = vunpack.c.l.b16 %v96
    %v652 = vunpack.c.l.b16 %v97
    %v653 = vunpack.c.l.b16 %v98
    %v654 = vunpack.c.l.b16 %v99
    %v655 = vunpack.c.l.b16 %v100
    %v656 = vunpack.c.l.b16 %v101
    %v657 = vunpack.c.l.b16 %v102
    %v658 = vunpack.c.l.b16 %v103
    %v659 = vunpack.c.l.b16 %v104
    %v660 = vunpack.c.l.b16 %v105
    %v661 = vunpack.c.l.b16 %v106
    %v662 = vunpack.c.l.b16 %v107
    %v663 = vunpack.c.l.b16 %v108
    %v664 = vunpack.c.l.b16 %v109
    %v665 = vunpack.c.l.b16 %v110
    %v666 = vunpack.c.l.b16 %v111
    %v667 = vpack.c.b16 %v640, %v639
    %v668 = vpack.c.b16 %v642, %v641
    %v669 = vpack.c.b16 %v644, %v643
    %v670 = vpack.c.b16 %v646, %v645
    %v671 = vpack.c.b16 %v648, %v647
    %v672 = vpack.c.b16 %v650, %v649
    %v673 = vpack.c.b16 %v652, %v651
    %v674 = vpack.c.b16 %v654, %v653
    %v675 = vpack.c.b16 %v656, %v655
    %v676 = vpack.c.b16 %v658, %v657
    %v677 = vpack.c.b16 %v660, %v659
    %v678 = vpack.c.b16 %v662, %v661
    %v679 = vpack.c.b16 %v664, %v663
    %v680 = vpack.c.b16 %v666, %v665
    %v685 = vunpack.c.l.b16 %v142
    %v686 = vunpack.c.h.b16 %v142
    %v687 = vunpack.c.l.b16 %v143
    %v688 = vunpack.c.h.b16 %v143
    %v689 = vunpack.c.l.b16 %v144
    %v690 = vunpack.c.h.b16 %v144
    %v691 = vunpack.c.l.b16 %v145
    %v692 = vunpack.c.h.b16 %v145
    %v693 = vpack.c.b16 %v687, %v685
    %v694 = vpack.c.b16 %v688, %v686
    %v695 = vpack.c.b16 %v691, %v689
    %v696 = vpack.c.b16 %v692, %v690
    %v700 = vsel %vm388, %v667, 0
    %v703 = vsel %vm388, %v668, 0
    %v706 = vsel %vm388, %v669, 0
    %v709 = vsel %vm388, %v670, 0
    %v712 = vsel %vm388, %v671, 0
    %v715 = vsel %vm388, %v672, 0
    %v718 = vsel %vm388, %v673, 0
    %v721 = vsel %vm388, %v674, 0
    %v724 = vsel %vm388, %v675, 0
    %v727 = vsel %vm388, %v676, 0
    %v730 = vsel %vm388, %v677, 0
    %v733 = vsel %vm388, %v678, 0
    %v736 = vsel %vm388, %v679, 0
    %v739 = vsel %vm388, %v680, 0
    %v742 = vsel %vm431, %v695, 0
    %v745 = vsel %vm431, %v696, 0
    %747 = vmatprep.subr.bf16.mxu0 %v694
    %748 = vmatpush1.bf16.msra.mxu0 %v693
    %749 = vmatprep.subr.bf16.mxu0 %v745
    %750 = vmatpush1.bf16.msra.mxu0 %v742
    %751 = vmatprep.subr.bf16.mxu0 0
    %752 = vmatpush1.bf16.msra.mxu0 0
    %753 = vmatprep.subr.bf16.mxu0 0
    %754 = vmatpush1.bf16.msra.mxu0 0
    %755 = vmatprep.subr.bf16.mxu0 0
    %756 = vmatpush1.bf16.msra.mxu0 0
    %757 = vmatprep.subr.bf16.mxu0 0
    %758 = vmatpush1.bf16.msra.mxu0 0
    %759 = vmatprep.subr.bf16.mxu0 0
    %760 = vmatpush1.bf16.msra.mxu0 0
    %761 = vmatprep.subr.bf16.mxu0 0
    %762 = vmatpush1.bf16.msra.mxu0 0
    %763 = vmatprep.subr.bf16.mxu0 0
    %764 = vmatpush1.bf16.msra.mxu0 0
    %765 = vmatprep.subr.bf16.mxu0 0
    %766 = vmatpush1.bf16.msra.mxu0 0
    %767 = vmatprep.subr.bf16.mxu0 0
    %768 = vmatpush1.bf16.msra.mxu0 0
    %769 = vmatprep.subr.bf16.mxu0 0
    %770 = vmatpush1.bf16.msra.mxu0 0
    %771 = vmatprep.subr.bf16.mxu0 0
    %772 = vmatpush1.bf16.msra.mxu0 0
    %773 = vmatprep.subr.bf16.mxu0 0
    %774 = vmatpush1.bf16.msra.mxu0 0
    %775 = vmatprep.subr.bf16.mxu0 0
    %776 = vmatpush1.bf16.msra.mxu0 0
    %777 = vmatprep.subr.bf16.mxu0 0
    %778 = vmatpush1.bf16.msra.mxu0 0
    %779 = vmatprep.mubr.bf16.mxu0 0
    %780 = vmatmul.mubr.bf16.gmra.mrb[0].mxu0 %v700
    %v781 = vpop.f32.mrb[0].mxu0
    %v782 = vadd.f32 %v473, %v781
    %v783 = vpop.f32.mrb[0].mxu0
    %v784 = vadd.f32 %v475, %v783
    %v785 = vpop.f32.mrb[0].mxu0
    %v786 = vadd.f32 %v477, %v785
    %v787 = vpop.f32.mrb[0].mxu0
    %v788 = vadd.f32 %v479, %v787
    %789 = vmatprep.mubr.bf16.mxu0 0
    %790 = vmatmul.mubr.bf16.gmra.mrb[0].mxu0 %v703
    %v791 = vpop.f32.mrb[0].mxu0
    %v792 = vadd.f32 %v483, %v791
    %v793 = vpop.f32.mrb[0].mxu0
    %v794 = vadd.f32 %v485, %v793
    %v795 = vpop.f32.mrb[0].mxu0
    %v796 = vadd.f32 %v487, %v795
    %v797 = vpop.f32.mrb[0].mxu0
    %v798 = vadd.f32 %v489, %v797
    %799 = vmatprep.mubr.bf16.mxu0 0
    %800 = vmatmul.mubr.bf16.gmra.mrb[0].mxu0 %v706
    %v801 = vpop.f32.mrb[0].mxu0
    %v802 = vadd.f32 %v493, %v801
    %v803 = vpop.f32.mrb[0].mxu0
    %v804 = vadd.f32 %v495, %v803
    %v805 = vpop.f32.mrb[0].mxu0
    %v806 = vadd.f32 %v497, %v805
    %v807 = vpop.f32.mrb[0].mxu0
    %v808 = vadd.f32 %v499, %v807
    %809 = vmatprep.mubr.bf16.mxu0 0
    %810 = vmatmul.mubr.bf16.gmra.mrb[0].mxu0 %v709
    %v811 = vpop.f32.mrb[0].mxu0
    %v812 = vadd.f32 %v503, %v811
    %v813 = vpop.f32.mrb[0].mxu0
    %v814 = vadd.f32 %v505, %v813
    %v815 = vpop.f32.mrb[0].mxu0
    %v816 = vadd.f32 %v507, %v815
    %v817 = vpop.f32.mrb[0].mxu0
    %v818 = vadd.f32 %v509, %v817
    %819 = vmatprep.mubr.bf16.mxu0 0
    %820 = vmatmul.mubr.bf16.gmra.mrb[0].mxu0 %v712
    %v821 = vpop.f32.mrb[0].mxu0
    %v822 = vadd.f32 %v513, %v821
    %v823 = vpop.f32.mrb[0].mxu0
    %v824 = vadd.f32 %v515, %v823
    %v825 = vpop.f32.mrb[0].mxu0
    %v826 = vadd.f32 %v517, %v825
    %v827 = vpop.f32.mrb[0].mxu0
    %v828 = vadd.f32 %v519, %v827
    %829 = vmatprep.mubr.bf16.mxu0 0
    %830 = vmatmul.mubr.bf16.gmra.mrb[0].mxu0 %v715
    %v831 = vpop.f32.mrb[0].mxu0
    %v832 = vadd.f32 %v523, %v831
    %v833 = vpop.f32.mrb[0].mxu0
    %v834 = vadd.f32 %v525, %v833
    %v835 = vpop.f32.mrb[0].mxu0
    %v836 = vadd.f32 %v527, %v835
    %v837 = vpop.f32.mrb[0].mxu0
    %v838 = vadd.f32 %v529, %v837
    %839 = vmatprep.mubr.bf16.mxu0 0
    %840 = vmatmul.mubr.bf16.gmra.mrb[0].mxu0 %v718
    %v841 = vpop.f32.mrb[0].mxu0
    %v842 = vadd.f32 %v533, %v841
    %v843 = vpop.f32.mrb[0].mxu0
    %v844 = vadd.f32 %v535, %v843
    %v845 = vpop.f32.mrb[0].mxu0
    %v846 = vadd.f32 %v537, %v845
    %v847 = vpop.f32.mrb[0].mxu0
    %v848 = vadd.f32 %v539, %v847
    %849 = vmatprep.mubr.bf16.mxu0 0
    %850 = vmatmul.mubr.bf16.gmra.mrb[0].mxu0 %v721
    %v851 = vpop.f32.mrb[0].mxu0
    %v852 = vadd.f32 %v543, %v851
    %v853 = vpop.f32.mrb[0].mxu0
    %v854 = vadd.f32 %v545, %v853
    %v855 = vpop.f32.mrb[0].mxu0
    %v856 = vadd.f32 %v547, %v855
    %v857 = vpop.f32.mrb[0].mxu0
    %v858 = vadd.f32 %v549, %v857
    %859 = vmatprep.mubr.bf16.mxu0 0
    %860 = vmatmul.mubr.bf16.gmra.mrb[0].mxu0 %v724
    %v861 = vpop.f32.mrb[0].mxu0
    %v862 = vadd.f32 %v553, %v861
    %v863 = vpop.f32.mrb[0].mxu0
    %v864 = vadd.f32 %v555, %v863
    %v865 = vpop.f32.mrb[0].mxu0
    %v866 = vadd.f32 %v557, %v865
    %v867 = vpop.f32.mrb[0].mxu0
    %v868 = vadd.f32 %v559, %v867
    %869 = vmatprep.mubr.bf16.mxu0 0
    %870 = vmatmul.mubr.bf16.gmra.mrb[0].mxu0 %v727
    %v871 = vpop.f32.mrb[0].mxu0
    %v872 = vadd.f32 %v563, %v871
    %v873 = vpop.f32.mrb[0].mxu0
    %v874 = vadd.f32 %v565, %v873
    %v875 = vpop.f32.mrb[0].mxu0
    %v876 = vadd.f32 %v567, %v875
    %v877 = vpop.f32.mrb[0].mxu0
    %v878 = vadd.f32 %v569, %v877
    %879 = vmatprep.mubr.bf16.mxu0 0
    %880 = vmatmul.mubr.bf16.gmra.mrb[0].mxu0 %v730
    %v881 = vpop.f32.mrb[0].mxu0
    %v882 = vadd.f32 %v573, %v881
    %v883 = vpop.f32.mrb[0].mxu0
    %v884 = vadd.f32 %v575, %v883
    %v885 = vpop.f32.mrb[0].mxu0
    %v886 = vadd.f32 %v577, %v885
    %v887 = vpop.f32.mrb[0].mxu0
    %v888 = vadd.f32 %v579, %v887
    %889 = vmatprep.mubr.bf16.mxu0 0
    %890 = vmatmul.mubr.bf16.gmra.mrb[0].mxu0 %v733
    %v891 = vpop.f32.mrb[0].mxu0
    %v892 = vadd.f32 %v583, %v891
    %v893 = vpop.f32.mrb[0].mxu0
    %v894 = vadd.f32 %v585, %v893
    %v895 = vpop.f32.mrb[0].mxu0
    %v896 = vadd.f32 %v587, %v895
    %v897 = vpop.f32.mrb[0].mxu0
    %v898 = vadd.f32 %v589, %v897
    %899 = vmatprep.mubr.bf16.mxu0 0
    %900 = vmatmul.mubr.bf16.gmra.mrb[0].mxu0 %v736
    %v901 = vpop.f32.mrb[0].mxu0
    %v902 = vadd.f32 %v593, %v901
    %v903 = vpop.f32.mrb[0].mxu0
    %v904 = vadd.f32 %v595, %v903
    %v905 = vpop.f32.mrb[0].mxu0
    %v906 = vadd.f32 %v597, %v905
    %v907 = vpop.f32.mrb[0].mxu0
    %v908 = vadd.f32 %v599, %v907
    %909 = vmatprep.mubr.bf16.mxu0 0
    %910 = vmatmul.mubr.bf16.gmra.mrb[0].mxu0 %v739
    %v911 = vpop.f32.mrb[0].mxu0
    %v912 = vadd.f32 %v603, %v911
    %v913 = vpop.f32.mrb[0].mxu0
    %v914 = vadd.f32 %v605, %v913
    %v915 = vpop.f32.mrb[0].mxu0
    %v916 = vadd.f32 %v607, %v915
    %v917 = vpop.f32.mrb[0].mxu0
    %v918 = vadd.f32 %v609, %v917
    %919 = vdwg.mxu0
    %v920 = vld [vmem:[#allocation2] sm:$0xe]
    %s921 = scalar_lea.vmem %s1, 64
    %v922 = vld [vmem:[%s921] sm:$0xff]
    %v923 = vld [vmem:[%s921 + $0x8] sm:$0xff]
    %v924 = vld [vmem:[%s921 + $0x10] sm:$0xff]
    %v925 = vld [vmem:[%s921 + $0x18] sm:$0x33]
    %v927 = vunpack.c.l.b16 %v920
    %v928 = vpack.c.b16 %v210, %v927
    %vm929 = vcmask 1046528
    %v930 = vrot.slane %v928, 1
    %v931 = vrot.slane %v239, 1
    %v932 = vsel %vm929, %v930, %v931
    %v933 = vrot.slane %v240, 1
    %v934 = vsel %vm929, %v931, %v933
    %v935 = vrot.slane %v241, 1
    %v936 = vsel %vm929, %v933, %v935
    %v937 = vrot.slane %v242, 1
    %v938 = vsel %vm929, %v935, %v937
    %v939 = vrot.slane %v243, 1
    %v940 = vsel %vm929, %v937, %v939
    %v941 = vrot.slane %v244, 1
    %v942 = vsel %vm929, %v939, %v941
    %v943 = vrot.slane %v245, 1
    %v944 = vsel %vm929, %v941, %v943
    %v945 = vrot.slane %v246, 1
    %v946 = vsel %vm929, %v943, %v945
    %v947 = vrot.slane %v247, 1
    %v948 = vsel %vm929, %v945, %v947
    %v949 = vrot.slane %v248, 1
    %v950 = vsel %vm929, %v947, %v949
    %v951 = vrot.slane %v249, 1
    %v952 = vsel %vm929, %v949, %v951
    %v953 = vrot.slane %v250, 1
    %v954 = vsel %vm929, %v951, %v953
    %v955 = vrot.slane %v251, 1
    %v956 = vsel %vm929, %v953, %v955
    %v957 = vrot.slane %v252, 1
    %v958 = vsel %vm929, %v955, %v957
    %v963 = vunpack.c.l.b16 %v922
    %v964 = vunpack.c.h.b16 %v922
    %v965 = vunpack.c.l.b16 %v923
    %v966 = vunpack.c.h.b16 %v923
    %v967 = vunpack.c.l.b16 %v924
    %v968 = vunpack.c.h.b16 %v924
    %v969 = vunpack.c.l.b16 %v925
    %v970 = vunpack.c.h.b16 %v925
    %v971 = vpack.c.b16 %v965, %v963
    %v972 = vpack.c.b16 %v966, %v964
    %v973 = vpack.c.b16 %v969, %v967
    %v974 = vpack.c.b16 %v970, %v968
    %v978 = vsel %vm388, %v932, 0
    %v981 = vsel %vm388, %v934, 0
    %v984 = vsel %vm388, %v936, 0
    %v987 = vsel %vm388, %v938, 0
    %v990 = vsel %vm388, %v940, 0
    %v993 = vsel %vm388, %v942, 0
    %v996 = vsel %vm388, %v944, 0
    %v999 = vsel %vm388, %v946, 0
    %v1002 = vsel %vm388, %v948, 0
    %v1005 = vsel %vm388, %v950, 0
    %v1008 = vsel %vm388, %v952, 0
    %v1011 = vsel %vm388, %v954, 0
    %v1014 = vsel %vm388, %v956, 0
    %v1017 = vsel %vm388, %v958, 0
    %v1020 = vsel %vm431, %v973, 0
    %v1023 = vsel %vm431, %v974, 0
    %1025 = vmatprep.subr.bf16.mxu0 %v972
    %1026 = vmatpush1.bf16.msra.mxu0 %v971
    %1027 = vmatprep.subr.bf16.mxu0 %v1023
    %1028 = vmatpush1.bf16.msra.mxu0 %v1020
    %1029 = vmatprep.subr.bf16.mxu0 0
    %1030 = vmatpush1.bf16.msra.mxu0 0
    %1031 = vmatprep.subr.bf16.mxu0 0
    %1032 = vmatpush1.bf16.msra.mxu0 0
    %1033 = vmatprep.subr.bf16.mxu0 0
    %1034 = vmatpush1.bf16.msra.mxu0 0
    %1035 = vmatprep.subr.bf16.mxu0 0
    %1036 = vmatpush1.bf16.msra.mxu0 0
    %1037 = vmatprep.subr.bf16.mxu0 0
    %1038 = vmatpush1.bf16.msra.mxu0 0
    %1039 = vmatprep.subr.bf16.mxu0 0
    %1040 = vmatpush1.bf16.msra.mxu0 0
    %1041 = vmatprep.subr.bf16.mxu0 0
    %1042 = vmatpush1.bf16.msra.mxu0 0
    %1043 = vmatprep.subr.bf16.mxu0 0
    %1044 = vmatpush1.bf16.msra.mxu0 0
    %1045 = vmatprep.subr.bf16.mxu0 0
    %1046 = vmatpush1.bf16.msra.mxu0 0
    %1047 = vmatprep.subr.bf16.mxu0 0
    %1048 = vmatpush1.bf16.msra.mxu0 0
    %1049 = vmatprep.subr.bf16.mxu0 0
    %1050 = vmatpush1.bf16.msra.mxu0 0
    %1051 = vmatprep.subr.bf16.mxu0 0
    %1052 = vmatpush1.bf16.msra.mxu0 0
    %1053 = vmatprep.subr.bf16.mxu0 0
    %1054 = vmatpush1.bf16.msra.mxu0 0
    %1055 = vmatprep.subr.bf16.mxu0 0
    %1056 = vmatpush1.bf16.msra.mxu0 0
    %1057 = vmatprep.mubr.bf16.mxu0 0
    %1058 = vmatmul.mubr.bf16.gmra.mrb[0].mxu0 %v978
    %v1059 = vpop.f32.mrb[0].mxu0
    %v1060 = vadd.f32 0.0, %v1059
    %v1061 = vpop.f32.mrb[0].mxu0
    %v1062 = vadd.f32 0.0, %v1061
    %v1063 = vpop.f32.mrb[0].mxu0
    %v1064 = vadd.f32 0.0, %v1063
    %v1065 = vpop.f32.mrb[0].mxu0
    %v1066 = vadd.f32 0.0, %v1065
    %1067 = vmatprep.mubr.bf16.mxu0 0
    %1068 = vmatmul.mubr.bf16.gmra.mrb[0].mxu0 %v981
    %v1069 = vpop.f32.mrb[0].mxu0
    %v1070 = vadd.f32 0.0, %v1069
    %v1071 = vpop.f32.mrb[0].mxu0
    %v1072 = vadd.f32 0.0, %v1071
    %v1073 = vpop.f32.mrb[0].mxu0
    %v1074 = vadd.f32 0.0, %v1073
    %v1075 = vpop.f32.mrb[0].mxu0
    %v1076 = vadd.f32 0.0, %v1075
    %1077 = vmatprep.mubr.bf16.mxu0 0
    %1078 = vmatmul.mubr.bf16.gmra.mrb[0].mxu0 %v984
    %v1079 = vpop.f32.mrb[0].mxu0
    %v1080 = vadd.f32 0.0, %v1079
    %v1081 = vpop.f32.mrb[0].mxu0
    %v1082 = vadd.f32 0.0, %v1081
    %v1083 = vpop.f32.mrb[0].mxu0
    %v1084 = vadd.f32 0.0, %v1083
    %v1085 = vpop.f32.mrb[0].mxu0
    %v1086 = vadd.f32 0.0, %v1085
    %1087 = vmatprep.mubr.bf16.mxu0 0
    %1088 = vmatmul.mubr.bf16.gmra.mrb[0].mxu0 %v987
    %v1089 = vpop.f32.mrb[0].mxu0
    %v1090 = vadd.f32 0.0, %v1089
    %v1091 = vpop.f32.mrb[0].mxu0
    %v1092 = vadd.f32 0.0, %v1091
    %v1093 = vpop.f32.mrb[0].mxu0
    %v1094 = vadd.f32 0.0, %v1093
    %v1095 = vpop.f32.mrb[0].mxu0
    %v1096 = vadd.f32 0.0, %v1095
    %1097 = vmatprep.mubr.bf16.mxu0 0
    %1098 = vmatmul.mubr.bf16.gmra.mrb[0].mxu0 %v990
    %v1099 = vpop.f32.mrb[0].mxu0
    %v1100 = vadd.f32 0.0, %v1099
    %v1101 = vpop.f32.mrb[0].mxu0
    %v1102 = vadd.f32 0.0, %v1101
    %v1103 = vpop.f32.mrb[0].mxu0
    %v1104 = vadd.f32 0.0, %v1103
    %v1105 = vpop.f32.mrb[0].mxu0
    %v1106 = vadd.f32 0.0, %v1105
    %1107 = vmatprep.mubr.bf16.mxu0 0
    %1108 = vmatmul.mubr.bf16.gmra.mrb[0].mxu0 %v993
    %v1109 = vpop.f32.mrb[0].mxu0
    %v1110 = vadd.f32 0.0, %v1109
    %v1111 = vpop.f32.mrb[0].mxu0
    %v1112 = vadd.f32 0.0, %v1111
    %v1113 = vpop.f32.mrb[0].mxu0
    %v1114 = vadd.f32 0.0, %v1113
    %v1115 = vpop.f32.mrb[0].mxu0
    %v1116 = vadd.f32 0.0, %v1115
    %1117 = vmatprep.mubr.bf16.mxu0 0
    %1118 = vmatmul.mubr.bf16.gmra.mrb[0].mxu0 %v996
    %v1119 = vpop.f32.mrb[0].mxu0
    %v1120 = vadd.f32 0.0, %v1119
    %v1121 = vpop.f32.mrb[0].mxu0
    %v1122 = vadd.f32 0.0, %v1121
    %v1123 = vpop.f32.mrb[0].mxu0
    %v1124 = vadd.f32 0.0, %v1123
    %v1125 = vpop.f32.mrb[0].mxu0
    %v1126 = vadd.f32 0.0, %v1125
    %1127 = vmatprep.mubr.bf16.mxu0 0
    %1128 = vmatmul.mubr.bf16.gmra.mrb[0].mxu0 %v999
    %v1129 = vpop.f32.mrb[0].mxu0
    %v1130 = vadd.f32 0.0, %v1129
    %v1131 = vpop.f32.mrb[0].mxu0
    %v1132 = vadd.f32 0.0, %v1131
    %v1133 = vpop.f32.mrb[0].mxu0
    %v1134 = vadd.f32 0.0, %v1133
    %v1135 = vpop.f32.mrb[0].mxu0
    %v1136 = vadd.f32 0.0, %v1135
    %1137 = vmatprep.mubr.bf16.mxu0 0
    %1138 = vmatmul.mubr.bf16.gmra.mrb[0].mxu0 %v1002
    %v1139 = vpop.f32.mrb[0].mxu0
    %v1140 = vadd.f32 0.0, %v1139
    %v1141 = vpop.f32.mrb[0].mxu0
    %v1142 = vadd.f32 0.0, %v1141
    %v1143 = vpop.f32.mrb[0].mxu0
    %v1144 = vadd.f32 0.0, %v1143
    %v1145 = vpop.f32.mrb[0].mxu0
    %v1146 = vadd.f32 0.0, %v1145
    %1147 = vmatprep.mubr.bf16.mxu0 0
    %1148 = vmatmul.mubr.bf16.gmra.mrb[0].mxu0 %v1005
    %v1149 = vpop.f32.mrb[0].mxu0
    %v1150 = vadd.f32 0.0, %v1149
    %v1151 = vpop.f32.mrb[0].mxu0
    %v1152 = vadd.f32 0.0, %v1151
    %v1153 = vpop.f32.mrb[0].mxu0
    %v1154 = vadd.f32 0.0, %v1153
    %v1155 = vpop.f32.mrb[0].mxu0
    %v1156 = vadd.f32 0.0, %v1155
    %1157 = vmatprep.mubr.bf16.mxu0 0
    %1158 = vmatmul.mubr.bf16.gmra.mrb[0].mxu0 %v1008
    %v1159 = vpop.f32.mrb[0].mxu0
    %v1160 = vadd.f32 0.0, %v1159
    %v1161 = vpop.f32.mrb[0].mxu0
    %v1162 = vadd.f32 0.0, %v1161
    %v1163 = vpop.f32.mrb[0].mxu0
    %v1164 = vadd.f32 0.0, %v1163
    %v1165 = vpop.f32.mrb[0].mxu0
    %v1166 = vadd.f32 0.0, %v1165
    %1167 = vmatprep.mubr.bf16.mxu0 0
    %1168 = vmatmul.mubr.bf16.gmra.mrb[0].mxu0 %v1011
    %v1169 = vpop.f32.mrb[0].mxu0
    %v1170 = vadd.f32 0.0, %v1169
    %v1171 = vpop.f32.mrb[0].mxu0
    %v1172 = vadd.f32 0.0, %v1171
    %v1173 = vpop.f32.mrb[0].mxu0
    %v1174 = vadd.f32 0.0, %v1173
    %v1175 = vpop.f32.mrb[0].mxu0
    %v1176 = vadd.f32 0.0, %v1175
    %1177 = vmatprep.mubr.bf16.mxu0 0
    %1178 = vmatmul.mubr.bf16.gmra.mrb[0].mxu0 %v1014
    %v1179 = vpop.f32.mrb[0].mxu0
    %v1180 = vadd.f32 0.0, %v1179
    %v1181 = vpop.f32.mrb[0].mxu0
    %v1182 = vadd.f32 0.0, %v1181
    %v1183 = vpop.f32.mrb[0].mxu0
    %v1184 = vadd.f32 0.0, %v1183
    %v1185 = vpop.f32.mrb[0].mxu0
    %v1186 = vadd.f32 0.0, %v1185
    %1187 = vmatprep.mubr.bf16.mxu0 0
    %1188 = vmatmul.mubr.bf16.gmra.mrb[0].mxu0 %v1017
    %v1189 = vpop.f32.mrb[0].mxu0
    %v1190 = vadd.f32 0.0, %v1189
    %v1191 = vpop.f32.mrb[0].mxu0
    %v1192 = vadd.f32 0.0, %v1191
    %v1193 = vpop.f32.mrb[0].mxu0
    %v1194 = vadd.f32 0.0, %v1193
    %v1195 = vpop.f32.mrb[0].mxu0
    %v1196 = vadd.f32 0.0, %v1195
    %1197 = vdwg.mxu0
    %v1198 = vadd.f32 %v782, %v1060
    %v1199 = vadd.f32 %v784, %v1062
    %v1200 = vadd.f32 %v786, %v1064
    %v1201 = vadd.f32 %v788, %v1066
    %v1202 = vadd.f32 %v792, %v1070
    %v1203 = vadd.f32 %v794, %v1072
    %v1204 = vadd.f32 %v796, %v1074
    %v1205 = vadd.f32 %v798, %v1076
    %v1206 = vadd.f32 %v802, %v1080
    %v1207 = vadd.f32 %v804, %v1082
    %v1208 = vadd.f32 %v806, %v1084
    %v1209 = vadd.f32 %v808, %v1086
    %v1210 = vadd.f32 %v812, %v1090
    %v1211 = vadd.f32 %v814, %v1092
    %v1212 = vadd.f32 %v816, %v1094
    %v1213 = vadd.f32 %v818, %v1096
    %v1214 = vadd.f32 %v822, %v1100
    %v1215 = vadd.f32 %v824, %v1102
    %v1216 = vadd.f32 %v826, %v1104
    %v1217 = vadd.f32 %v828, %v1106
    %v1218 = vadd.f32 %v832, %v1110
    %v1219 = vadd.f32 %v834, %v1112
    %v1220 = vadd.f32 %v836, %v1114
    %v1221 = vadd.f32 %v838, %v1116
    %v1222 = vadd.f32 %v842, %v1120
    %v1223 = vadd.f32 %v844, %v1122
    %v1224 = vadd.f32 %v846, %v1124
    %v1225 = vadd.f32 %v848, %v1126
    %v1226 = vadd.f32 %v852, %v1130
    %v1227 = vadd.f32 %v854, %v1132
    %v1228 = vadd.f32 %v856, %v1134
    %v1229 = vadd.f32 %v858, %v1136
    %v1230 = vadd.f32 %v862, %v1140
    %v1231 = vadd.f32 %v864, %v1142
    %v1232 = vadd.f32 %v866, %v1144
    %v1233 = vadd.f32 %v868, %v1146
    %v1234 = vadd.f32 %v872, %v1150
    %v1235 = vadd.f32 %v874, %v1152
    %v1236 = vadd.f32 %v876, %v1154
    %v1237 = vadd.f32 %v878, %v1156
    %v1238 = vadd.f32 %v882, %v1160
    %v1239 = vadd.f32 %v884, %v1162
    %v1240 = vadd.f32 %v886, %v1164
    %v1241 = vadd.f32 %v888, %v1166
    %v1242 = vadd.f32 %v892, %v1170
    %v1243 = vadd.f32 %v894, %v1172
    %v1244 = vadd.f32 %v896, %v1174
    %v1245 = vadd.f32 %v898, %v1176
    %v1246 = vadd.f32 %v902, %v1180
    %v1247 = vadd.f32 %v904, %v1182
    %v1248 = vadd.f32 %v906, %v1184
    %v1249 = vadd.f32 %v908, %v1186
    %v1250 = vadd.f32 %v912, %v1190
    %v1251 = vadd.f32 %v914, %v1192
    %v1252 = vadd.f32 %v916, %v1194
    %v1253 = vadd.f32 %v918, %v1196
    %v1254 = vld [vmem:[#allocation2 + $0x70] sm:$0x3]
    %s1255 = scalar_lea.vmem %s1, 96
    %v1256 = vld [vmem:[%s1255] sm:$0xff]
    %v1257 = vld [vmem:[%s1255 + $0x8] sm:$0xff]
    %v1258 = vld [vmem:[%s1255 + $0x10] sm:$0xff]
    %v1259 = vld [vmem:[%s1255 + $0x18] sm:$0x33]
    %v1261 = vunpack.c.l.b16 %v1254
    %v1262 = vpack.c.b16 %v1261, %v1261
    %vm1263 = vsmask.f32 6400
    %v1265 = vshrl.u32 %v928, 16
    %v1267 = vrot.slane %v1265, 1
    %v1268 = vshll.u32 %v928, 16
    %v1270 = vrot.slane %v1268, 2
    %v1271 = vor.u32 %v1267, %v1270
    %v1272 = vrot.slane %v266, 1
    %v1273 = vrot.slane %v262, 2
    %v1274 = vor.u32 %v1272, %v1273
    %v1275 = vsel %vm1263, %v1271, %v1274
    %v1276 = vrot.slane %v274, 1
    %v1277 = vrot.slane %v270, 2
    %v1278 = vor.u32 %v1276, %v1277
    %v1279 = vsel %vm1263, %v1274, %v1278
    %v1280 = vrot.slane %v282, 1
    %v1281 = vrot.slane %v278, 2
    %v1282 = vor.u32 %v1280, %v1281
    %v1283 = vsel %vm1263, %v1278, %v1282
    %v1284 = vrot.slane %v290, 1
    %v1285 = vrot.slane %v286, 2
    %v1286 = vor.u32 %v1284, %v1285
    %v1287 = vsel %vm1263, %v1282, %v1286
    %v1288 = vrot.slane %v298, 1
    %v1289 = vrot.slane %v294, 2
    %v1290 = vor.u32 %v1288, %v1289
    %v1291 = vsel %vm1263, %v1286, %v1290
    %v1292 = vrot.slane %v306, 1
    %v1293 = vrot.slane %v302, 2
    %v1294 = vor.u32 %v1292, %v1293
    %v1295 = vsel %vm1263, %v1290, %v1294
    %v1296 = vrot.slane %v314, 1
    %v1297 = vrot.slane %v310, 2
    %v1298 = vor.u32 %v1296, %v1297
    %v1299 = vsel %vm1263, %v1294, %v1298
    %v1300 = vrot.slane %v322, 1
    %v1301 = vrot.slane %v318, 2
    %v1302 = vor.u32 %v1300, %v1301
    %v1303 = vsel %vm1263, %v1298, %v1302
    %v1304 = vrot.slane %v330, 1
    %v1305 = vrot.slane %v326, 2
    %v1306 = vor.u32 %v1304, %v1305
    %v1307 = vsel %vm1263, %v1302, %v1306
    %v1308 = vrot.slane %v338, 1
    %v1309 = vrot.slane %v334, 2
    %v1310 = vor.u32 %v1308, %v1309
    %v1311 = vsel %vm1263, %v1306, %v1310
    %v1312 = vrot.slane %v346, 1
    %v1313 = vrot.slane %v342, 2
    %v1314 = vor.u32 %v1312, %v1313
    %v1315 = vsel %vm1263, %v1310, %v1314
    %v1316 = vrot.slane %v354, 1
    %v1317 = vrot.slane %v350, 2
    %v1318 = vor.u32 %v1316, %v1317
    %v1319 = vsel %vm1263, %v1314, %v1318
    %v1320 = vrot.slane %v362, 1
    %v1321 = vrot.slane %v358, 2
    %v1322 = vor.u32 %v1320, %v1321
    %v1323 = vsel %vm1263, %v1318, %v1322
    %v1325 = vshrl.u32 %v1262, 16
    %v1327 = vrot.slane %v1325, 1
    %v1328 = vshll.u32 %v1262, 16
    %v1330 = vrot.slane %v1328, 2
    %v1331 = vor.u32 %v1327, %v1330
    %v1332 = vsel %vm1263, %v1322, %v1331
    %v1337 = vunpack.c.l.b16 %v1256
    %v1338 = vunpack.c.h.b16 %v1256
    %v1339 = vunpack.c.l.b16 %v1257
    %v1340 = vunpack.c.h.b16 %v1257
    %v1341 = vunpack.c.l.b16 %v1258
    %v1342 = vunpack.c.h.b16 %v1258
    %v1343 = vunpack.c.l.b16 %v1259
    %v1344 = vunpack.c.h.b16 %v1259
    %v1345 = vpack.c.b16 %v1339, %v1337
    %v1346 = vpack.c.b16 %v1340, %v1338
    %v1347 = vpack.c.b16 %v1343, %v1341
    %v1348 = vpack.c.b16 %v1344, %v1342
    %v1352 = vsel %vm388, %v1275, 0
    %v1355 = vsel %vm388, %v1279, 0
    %v1358 = vsel %vm388, %v1283, 0
    %v1361 = vsel %vm388, %v1287, 0
    %v1364 = vsel %vm388, %v1291, 0
    %v1367 = vsel %vm388, %v1295, 0
    %v1370 = vsel %vm388, %v1299, 0
    %v1373 = vsel %vm388, %v1303, 0
    %v1376 = vsel %vm388, %v1307, 0
    %v1379 = vsel %vm388, %v1311, 0
    %v1382 = vsel %vm388, %v1315, 0
    %v1385 = vsel %vm388, %v1319, 0
    %v1388 = vsel %vm388, %v1323, 0
    %v1391 = vsel %vm388, %v1332, 0
    %v1394 = vsel %vm431, %v1347, 0
    %v1397 = vsel %vm431, %v1348, 0
    %1399 = vmatprep.subr.bf16.mxu0 %v1346
    %1400 = vmatpush1.bf16.msra.mxu0 %v1345
    %1401 = vmatprep.subr.bf16.mxu0 %v1397
    %1402 = vmatpush1.bf16.msra.mxu0 %v1394
    %1403 = vmatprep.subr.bf16.mxu0 0
    %1404 = vmatpush1.bf16.msra.mxu0 0
    %1405 = vmatprep.subr.bf16.mxu0 0
    %1406 = vmatpush1.bf16.msra.mxu0 0
    %1407 = vmatprep.subr.bf16.mxu0 0
    %1408 = vmatpush1.bf16.msra.mxu0 0
    %1409 = vmatprep.subr.bf16.mxu0 0
    %1410 = vmatpush1.bf16.msra.mxu0 0
    %1411 = vmatprep.subr.bf16.mxu0 0
    %1412 = vmatpush1.bf16.msra.mxu0 0
    %1413 = vmatprep.subr.bf16.mxu0 0
    %1414 = vmatpush1.bf16.msra.mxu0 0
    %1415 = vmatprep.subr.bf16.mxu0 0
    %1416 = vmatpush1.bf16.msra.mxu0 0
    %1417 = vmatprep.subr.bf16.mxu0 0
    %1418 = vmatpush1.bf16.msra.mxu0 0
    %1419 = vmatprep.subr.bf16.mxu0 0
    %1420 = vmatpush1.bf16.msra.mxu0 0
    %1421 = vmatprep.subr.bf16.mxu0 0
    %1422 = vmatpush1.bf16.msra.mxu0 0
    %1423 = vmatprep.subr.bf16.mxu0 0
    %1424 = vmatpush1.bf16.msra.mxu0 0
    %1425 = vmatprep.subr.bf16.mxu0 0
    %1426 = vmatpush1.bf16.msra.mxu0 0
    %1427 = vmatprep.subr.bf16.mxu0 0
    %1428 = vmatpush1.bf16.msra.mxu0 0
    %1429 = vmatprep.subr.bf16.mxu0 0
    %1430 = vmatpush1.bf16.msra.mxu0 0
    %1431 = vmatprep.mubr.bf16.mxu0 0
    %1432 = vmatmul.mubr.bf16.gmra.mrb[0].mxu0 %v1352
    %v1433 = vpop.f32.mrb[0].mxu0
    %v1434 = vadd.f32 0.0, %v1433
    %v1435 = vpop.f32.mrb[0].mxu0
    %v1436 = vadd.f32 0.0, %v1435
    %v1437 = vpop.f32.mrb[0].mxu0
    %v1438 = vadd.f32 0.0, %v1437
    %v1439 = vpop.f32.mrb[0].mxu0
    %v1440 = vadd.f32 0.0, %v1439
    %1441 = vmatprep.mubr.bf16.mxu0 0
    %1442 = vmatmul.mubr.bf16.gmra.mrb[0].mxu0 %v1355
    %v1443 = vpop.f32.mrb[0].mxu0
    %v1444 = vadd.f32 0.0, %v1443
    %v1445 = vpop.f32.mrb[0].mxu0
    %v1446 = vadd.f32 0.0, %v1445
    %v1447 = vpop.f32.mrb[0].mxu0
    %v1448 = vadd.f32 0.0, %v1447
    %v1449 = vpop.f32.mrb[0].mxu0
    %v1450 = vadd.f32 0.0, %v1449
    %1451 = vmatprep.mubr.bf16.mxu0 0
    %1452 = vmatmul.mubr.bf16.gmra.mrb[0].mxu0 %v1358
    %v1453 = vpop.f32.mrb[0].mxu0
    %v1454 = vadd.f32 0.0, %v1453
    %v1455 = vpop.f32.mrb[0].mxu0
    %v1456 = vadd.f32 0.0, %v1455
    %v1457 = vpop.f32.mrb[0].mxu0
    %v1458 = vadd.f32 0.0, %v1457
    %v1459 = vpop.f32.mrb[0].mxu0
    %v1460 = vadd.f32 0.0, %v1459
    %1461 = vmatprep.mubr.bf16.mxu0 0
    %1462 = vmatmul.mubr.bf16.gmra.mrb[0].mxu0 %v1361
    %v1463 = vpop.f32.mrb[0].mxu0
    %v1464 = vadd.f32 0.0, %v1463
    %v1465 = vpop.f32.mrb[0].mxu0
    %v1466 = vadd.f32 0.0, %v1465
    %v1467 = vpop.f32.mrb[0].mxu0
    %v1468 = vadd.f32 0.0, %v1467
    %v1469 = vpop.f32.mrb[0].mxu0
    %v1470 = vadd.f32 0.0, %v1469
    %1471 = vmatprep.mubr.bf16.mxu0 0
    %1472 = vmatmul.mubr.bf16.gmra.mrb[0].mxu0 %v1364
    %v1473 = vpop.f32.mrb[0].mxu0
    %v1474 = vadd.f32 0.0, %v1473
    %v1475 = vpop.f32.mrb[0].mxu0
    %v1476 = vadd.f32 0.0, %v1475
    %v1477 = vpop.f32.mrb[0].mxu0
    %v1478 = vadd.f32 0.0, %v1477
    %v1479 = vpop.f32.mrb[0].mxu0
    %v1480 = vadd.f32 0.0, %v1479
    %1481 = vmatprep.mubr.bf16.mxu0 0
    %1482 = vmatmul.mubr.bf16.gmra.mrb[0].mxu0 %v1367
    %v1483 = vpop.f32.mrb[0].mxu0
    %v1484 = vadd.f32 0.0, %v1483
    %v1485 = vpop.f32.mrb[0].mxu0
    %v1486 = vadd.f32 0.0, %v1485
    %v1487 = vpop.f32.mrb[0].mxu0
    %v1488 = vadd.f32 0.0, %v1487
    %v1489 = vpop.f32.mrb[0].mxu0
    %v1490 = vadd.f32 0.0, %v1489
    %1491 = vmatprep.mubr.bf16.mxu0 0
    %1492 = vmatmul.mubr.bf16.gmra.mrb[0].mxu0 %v1370
    %v1493 = vpop.f32.mrb[0].mxu0
    %v1494 = vadd.f32 0.0, %v1493
    %v1495 = vpop.f32.mrb[0].mxu0
    %v1496 = vadd.f32 0.0, %v1495
    %v1497 = vpop.f32.mrb[0].mxu0
    %v1498 = vadd.f32 0.0, %v1497
    %v1499 = vpop.f32.mrb[0].mxu0
    %v1500 = vadd.f32 0.0, %v1499
    %1501 = vmatprep.mubr.bf16.mxu0 0
    %1502 = vmatmul.mubr.bf16.gmra.mrb[0].mxu0 %v1373
    %v1503 = vpop.f32.mrb[0].mxu0
    %v1504 = vadd.f32 0.0, %v1503
    %v1505 = vpop.f32.mrb[0].mxu0
    %v1506 = vadd.f32 0.0, %v1505
    %v1507 = vpop.f32.mrb[0].mxu0
    %v1508 = vadd.f32 0.0, %v1507
    %v1509 = vpop.f32.mrb[0].mxu0
    %v1510 = vadd.f32 0.0, %v1509
    %1511 = vmatprep.mubr.bf16.mxu0 0
    %1512 = vmatmul.mubr.bf16.gmra.mrb[0].mxu0 %v1376
    %v1513 = vpop.f32.mrb[0].mxu0
    %v1514 = vadd.f32 0.0, %v1513
    %v1515 = vpop.f32.mrb[0].mxu0
    %v1516 = vadd.f32 0.0, %v1515
    %v1517 = vpop.f32.mrb[0].mxu0
    %v1518 = vadd.f32 0.0, %v1517
    %v1519 = vpop.f32.mrb[0].mxu0
    %v1520 = vadd.f32 0.0, %v1519
    %1521 = vmatprep.mubr.bf16.mxu0 0
    %1522 = vmatmul.mubr.bf16.gmra.mrb[0].mxu0 %v1379
    %v1523 = vpop.f32.mrb[0].mxu0
    %v1524 = vadd.f32 0.0, %v1523
    %v1525 = vpop.f32.mrb[0].mxu0
    %v1526 = vadd.f32 0.0, %v1525
    %v1527 = vpop.f32.mrb[0].mxu0
    %v1528 = vadd.f32 0.0, %v1527
    %v1529 = vpop.f32.mrb[0].mxu0
    %v1530 = vadd.f32 0.0, %v1529
    %1531 = vmatprep.mubr.bf16.mxu0 0
    %1532 = vmatmul.mubr.bf16.gmra.mrb[0].mxu0 %v1382
    %v1533 = vpop.f32.mrb[0].mxu0
    %v1534 = vadd.f32 0.0, %v1533
    %v1535 = vpop.f32.mrb[0].mxu0
    %v1536 = vadd.f32 0.0, %v1535
    %v1537 = vpop.f32.mrb[0].mxu0
    %v1538 = vadd.f32 0.0, %v1537
    %v1539 = vpop.f32.mrb[0].mxu0
    %v1540 = vadd.f32 0.0, %v1539
    %1541 = vmatprep.mubr.bf16.mxu0 0
    %1542 = vmatmul.mubr.bf16.gmra.mrb[0].mxu0 %v1385
    %v1543 = vpop.f32.mrb[0].mxu0
    %v1544 = vadd.f32 0.0, %v1543
    %v1545 = vpop.f32.mrb[0].mxu0
    %v1546 = vadd.f32 0.0, %v1545
    %v1547 = vpop.f32.mrb[0].mxu0
    %v1548 = vadd.f32 0.0, %v1547
    %v1549 = vpop.f32.mrb[0].mxu0
    %v1550 = vadd.f32 0.0, %v1549
    %1551 = vmatprep.mubr.bf16.mxu0 0
    %1552 = vmatmul.mubr.bf16.gmra.mrb[0].mxu0 %v1388
    %v1553 = vpop.f32.mrb[0].mxu0
    %v1554 = vadd.f32 0.0, %v1553
    %v1555 = vpop.f32.mrb[0].mxu0
    %v1556 = vadd.f32 0.0, %v1555
    %v1557 = vpop.f32.mrb[0].mxu0
    %v1558 = vadd.f32 0.0, %v1557
    %v1559 = vpop.f32.mrb[0].mxu0
    %v1560 = vadd.f32 0.0, %v1559
    %1561 = vmatprep.mubr.bf16.mxu0 0
    %1562 = vmatmul.mubr.bf16.gmra.mrb[0].mxu0 %v1391
    %v1563 = vpop.f32.mrb[0].mxu0
    %v1564 = vadd.f32 0.0, %v1563
    %v1565 = vpop.f32.mrb[0].mxu0
    %v1566 = vadd.f32 0.0, %v1565
    %v1567 = vpop.f32.mrb[0].mxu0
    %v1568 = vadd.f32 0.0, %v1567
    %v1569 = vpop.f32.mrb[0].mxu0
    %v1570 = vadd.f32 0.0, %v1569
    %1571 = vdwg.mxu0
    %v1572 = vadd.f32 %v1198, %v1434
    %v1573 = vadd.f32 %v1199, %v1436
    %v1574 = vadd.f32 %v1200, %v1438
    %v1575 = vadd.f32 %v1201, %v1440
    %v1576 = vadd.f32 %v1202, %v1444
    %v1577 = vadd.f32 %v1203, %v1446
    %v1578 = vadd.f32 %v1204, %v1448
    %v1579 = vadd.f32 %v1205, %v1450
    %v1580 = vadd.f32 %v1206, %v1454
    %v1581 = vadd.f32 %v1207, %v1456
    %v1582 = vadd.f32 %v1208, %v1458
    %v1583 = vadd.f32 %v1209, %v1460
    %v1584 = vadd.f32 %v1210, %v1464
    %v1585 = vadd.f32 %v1211, %v1466
    %v1586 = vadd.f32 %v1212, %v1468
    %v1587 = vadd.f32 %v1213, %v1470
    %v1588 = vadd.f32 %v1214, %v1474
    %v1589 = vadd.f32 %v1215, %v1476
    %v1590 = vadd.f32 %v1216, %v1478
    %v1591 = vadd.f32 %v1217, %v1480
    %v1592 = vadd.f32 %v1218, %v1484
    %v1593 = vadd.f32 %v1219, %v1486
    %v1594 = vadd.f32 %v1220, %v1488
    %v1595 = vadd.f32 %v1221, %v1490
    %v1596 = vadd.f32 %v1222, %v1494
    %v1597 = vadd.f32 %v1223, %v1496
    %v1598 = vadd.f32 %v1224, %v1498
    %v1599 = vadd.f32 %v1225, %v1500
    %v1600 = vadd.f32 %v1226, %v1504
    %v1601 = vadd.f32 %v1227, %v1506
    %v1602 = vadd.f32 %v1228, %v1508
    %v1603 = vadd.f32 %v1229, %v1510
    %v1604 = vadd.f32 %v1230, %v1514
    %v1605 = vadd.f32 %v1231, %v1516
    %v1606 = vadd.f32 %v1232, %v1518
    %v1607 = vadd.f32 %v1233, %v1520
    %v1608 = vadd.f32 %v1234, %v1524
    %v1609 = vadd.f32 %v1235, %v1526
    %v1610 = vadd.f32 %v1236, %v1528
    %v1611 = vadd.f32 %v1237, %v1530
    %v1612 = vadd.f32 %v1238, %v1534
    %v1613 = vadd.f32 %v1239, %v1536
    %v1614 = vadd.f32 %v1240, %v1538
    %v1615 = vadd.f32 %v1241, %v1540
    %v1616 = vadd.f32 %v1242, %v1544
    %v1617 = vadd.f32 %v1243, %v1546
    %v1618 = vadd.f32 %v1244, %v1548
    %v1619 = vadd.f32 %v1245, %v1550
    %v1620 = vadd.f32 %v1246, %v1554
    %v1621 = vadd.f32 %v1247, %v1556
    %v1622 = vadd.f32 %v1248, %v1558
    %v1623 = vadd.f32 %v1249, %v1560
    %v1624 = vadd.f32 %v1250, %v1564
    %v1625 = vadd.f32 %v1251, %v1566
    %v1626 = vadd.f32 %v1252, %v1568
    %v1627 = vadd.f32 %v1253, %v1570
    %v1628 = vld [vmem:[#allocation2] sm:$0xc]
    %s1629 = scalar_lea.vmem %s1, 128
    %v1630 = vld [vmem:[%s1629] sm:$0xff]
    %v1631 = vld [vmem:[%s1629 + $0x8] sm:$0xff]
    %v1632 = vld [vmem:[%s1629 + $0x10] sm:$0xff]
    %v1633 = vld [vmem:[%s1629 + $0x18] sm:$0x33]
    %v1635 = vunpack.c.l.b16 %v1628
    %v1636 = vpack.c.b16 %v210, %v1635
    %vm1637 = vcmask 1045504
    %v1638 = vrot.slane %v1636, 2
    %v1639 = vrot.slane %v239, 2
    %v1640 = vsel %vm1637, %v1638, %v1639
    %v1641 = vrot.slane %v240, 2
    %v1642 = vsel %vm1637, %v1639, %v1641
    %v1643 = vrot.slane %v241, 2
    %v1644 = vsel %vm1637, %v1641, %v1643
    %v1645 = vrot.slane %v242, 2
    %v1646 = vsel %vm1637, %v1643, %v1645
    %v1647 = vrot.slane %v243, 2
    %v1648 = vsel %vm1637, %v1645, %v1647
    %v1649 = vrot.slane %v244, 2
    %v1650 = vsel %vm1637, %v1647, %v1649
    %v1651 = vrot.slane %v245, 2
    %v1652 = vsel %vm1637, %v1649, %v1651
    %v1653 = vrot.slane %v246, 2
    %v1654 = vsel %vm1637, %v1651, %v1653
    %v1655 = vrot.slane %v247, 2
    %v1656 = vsel %vm1637, %v1653, %v1655
    %v1657 = vrot.slane %v248, 2
    %v1658 = vsel %vm1637, %v1655, %v1657
    %v1659 = vrot.slane %v249, 2
    %v1660 = vsel %vm1637, %v1657, %v1659
    %v1661 = vrot.slane %v250, 2
    %v1662 = vsel %vm1637, %v1659, %v1661
    %v1663 = vrot.slane %v251, 2
    %v1664 = vsel %vm1637, %v1661, %v1663
    %v1665 = vrot.slane %v1262, 2
    %v1666 = vsel %vm1637, %v1663, %v1665
    %v1671 = vunpack.c.l.b16 %v1630
    %v1672 = vunpack.c.h.b16 %v1630
    %v1673 = vunpack.c.l.b16 %v1631
    %v1674 = vunpack.c.h.b16 %v1631
    %v1675 = vunpack.c.l.b16 %v1632
    %v1676 = vunpack.c.h.b16 %v1632
    %v1677 = vunpack.c.l.b16 %v1633
    %v1678 = vunpack.c.h.b16 %v1633
    %v1679 = vpack.c.b16 %v1673, %v1671
    %v1680 = vpack.c.b16 %v1674, %v1672
    %v1681 = vpack.c.b16 %v1677, %v1675
    %v1682 = vpack.c.b16 %v1678, %v1676
    %v1686 = vsel %vm388, %v1640, 0
    %v1689 = vsel %vm388, %v1642, 0
    %v1692 = vsel %vm388, %v1644, 0
    %v1695 = vsel %vm388, %v1646, 0
    %v1698 = vsel %vm388, %v1648, 0
    %v1701 = vsel %vm388, %v1650, 0
    %v1704 = vsel %vm388, %v1652, 0
    %v1707 = vsel %vm388, %v1654, 0
    %v1710 = vsel %vm388, %v1656, 0
    %v1713 = vsel %vm388, %v1658, 0
    %v1716 = vsel %vm388, %v1660, 0
    %v1719 = vsel %vm388, %v1662, 0
    %v1722 = vsel %vm388, %v1664, 0
    %v1725 = vsel %vm388, %v1666, 0
    %v1728 = vsel %vm431, %v1681, 0
    %v1731 = vsel %vm431, %v1682, 0
    %1733 = vmatprep.subr.bf16.mxu0 %v1680
    %1734 = vmatpush1.bf16.msra.mxu0 %v1679
    %1735 = vmatprep.subr.bf16.mxu0 %v1731
    %1736 = vmatpush1.bf16.msra.mxu0 %v1728
    %1737 = vmatprep.subr.bf16.mxu0 0
    %1738 = vmatpush1.bf16.msra.mxu0 0
    %1739 = vmatprep.subr.bf16.mxu0 0
    %1740 = vmatpush1.bf16.msra.mxu0 0
    %1741 = vmatprep.subr.bf16.mxu0 0
    %1742 = vmatpush1.bf16.msra.mxu0 0
    %1743 = vmatprep.subr.bf16.mxu0 0
    %1744 = vmatpush1.bf16.msra.mxu0 0
    %1745 = vmatprep.subr.bf16.mxu0 0
    %1746 = vmatpush1.bf16.msra.mxu0 0
    %1747 = vmatprep.subr.bf16.mxu0 0
    %1748 = vmatpush1.bf16.msra.mxu0 0
    %1749 = vmatprep.subr.bf16.mxu0 0
    %1750 = vmatpush1.bf16.msra.mxu0 0
    %1751 = vmatprep.subr.bf16.mxu0 0
    %1752 = vmatpush1.bf16.msra.mxu0 0
    %1753 = vmatprep.subr.bf16.mxu0 0
    %1754 = vmatpush1.bf16.msra.mxu0 0
    %1755 = vmatprep.subr.bf16.mxu0 0
    %1756 = vmatpush1.bf16.msra.mxu0 0
    %1757 = vmatprep.subr.bf16.mxu0 0
    %1758 = vmatpush1.bf16.msra.mxu0 0
    %1759 = vmatprep.subr.bf16.mxu0 0
    %1760 = vmatpush1.bf16.msra.mxu0 0
    %1761 = vmatprep.subr.bf16.mxu0 0
    %1762 = vmatpush1.bf16.msra.mxu0 0
    %1763 = vmatprep.subr.bf16.mxu0 0
    %1764 = vmatpush1.bf16.msra.mxu0 0
    %1765 = vmatprep.mubr.bf16.mxu0 0
    %1766 = vmatmul.mubr.bf16.gmra.mrb[0].mxu0 %v1686
    %v1767 = vpop.f32.mrb[0].mxu0
    %v1768 = vadd.f32 0.0, %v1767
    %v1769 = vpop.f32.mrb[0].mxu0
    %v1770 = vadd.f32 0.0, %v1769
    %v1771 = vpop.f32.mrb[0].mxu0
    %v1772 = vadd.f32 0.0, %v1771
    %v1773 = vpop.f32.mrb[0].mxu0
    %v1774 = vadd.f32 0.0, %v1773
    %1775 = vmatprep.mubr.bf16.mxu0 0
    %1776 = vmatmul.mubr.bf16.gmra.mrb[0].mxu0 %v1689
    %v1777 = vpop.f32.mrb[0].mxu0
    %v1778 = vadd.f32 0.0, %v1777
    %v1779 = vpop.f32.mrb[0].mxu0
    %v1780 = vadd.f32 0.0, %v1779
    %v1781 = vpop.f32.mrb[0].mxu0
    %v1782 = vadd.f32 0.0, %v1781
    %v1783 = vpop.f32.mrb[0].mxu0
    %v1784 = vadd.f32 0.0, %v1783
    %1785 = vmatprep.mubr.bf16.mxu0 0
    %1786 = vmatmul.mubr.bf16.gmra.mrb[0].mxu0 %v1692
    %v1787 = vpop.f32.mrb[0].mxu0
    %v1788 = vadd.f32 0.0, %v1787
    %v1789 = vpop.f32.mrb[0].mxu0
    %v1790 = vadd.f32 0.0, %v1789
    %v1791 = vpop.f32.mrb[0].mxu0
    %v1792 = vadd.f32 0.0, %v1791
    %v1793 = vpop.f32.mrb[0].mxu0
    %v1794 = vadd.f32 0.0, %v1793
    %1795 = vmatprep.mubr.bf16.mxu0 0
    %1796 = vmatmul.mubr.bf16.gmra.mrb[0].mxu0 %v1695
    %v1797 = vpop.f32.mrb[0].mxu0
    %v1798 = vadd.f32 0.0, %v1797
    %v1799 = vpop.f32.mrb[0].mxu0
    %v1800 = vadd.f32 0.0, %v1799
    %v1801 = vpop.f32.mrb[0].mxu0
    %v1802 = vadd.f32 0.0, %v1801
    %v1803 = vpop.f32.mrb[0].mxu0
    %v1804 = vadd.f32 0.0, %v1803
    %1805 = vmatprep.mubr.bf16.mxu0 0
    %1806 = vmatmul.mubr.bf16.gmra.mrb[0].mxu0 %v1698
    %v1807 = vpop.f32.mrb[0].mxu0
    %v1808 = vadd.f32 0.0, %v1807
    %v1809 = vpop.f32.mrb[0].mxu0
    %v1810 = vadd.f32 0.0, %v1809
    %v1811 = vpop.f32.mrb[0].mxu0
    %v1812 = vadd.f32 0.0, %v1811
    %v1813 = vpop.f32.mrb[0].mxu0
    %v1814 = vadd.f32 0.0, %v1813
    %1815 = vmatprep.mubr.bf16.mxu0 0
    %1816 = vmatmul.mubr.bf16.gmra.mrb[0].mxu0 %v1701
    %v1817 = vpop.f32.mrb[0].mxu0
    %v1818 = vadd.f32 0.0, %v1817
    %v1819 = vpop.f32.mrb[0].mxu0
    %v1820 = vadd.f32 0.0, %v1819
    %v1821 = vpop.f32.mrb[0].mxu0
    %v1822 = vadd.f32 0.0, %v1821
    %v1823 = vpop.f32.mrb[0].mxu0
    %v1824 = vadd.f32 0.0, %v1823
    %1825 = vmatprep.mubr.bf16.mxu0 0
    %1826 = vmatmul.mubr.bf16.gmra.mrb[0].mxu0 %v1704
    %v1827 = vpop.f32.mrb[0].mxu0
    %v1828 = vadd.f32 0.0, %v1827
    %v1829 = vpop.f32.mrb[0].mxu0
    %v1830 = vadd.f32 0.0, %v1829
    %v1831 = vpop.f32.mrb[0].mxu0
    %v1832 = vadd.f32 0.0, %v1831
    %v1833 = vpop.f32.mrb[0].mxu0
    %v1834 = vadd.f32 0.0, %v1833
    %1835 = vmatprep.mubr.bf16.mxu0 0
    %1836 = vmatmul.mubr.bf16.gmra.mrb[0].mxu0 %v1707
    %v1837 = vpop.f32.mrb[0].mxu0
    %v1838 = vadd.f32 0.0, %v1837
    %v1839 = vpop.f32.mrb[0].mxu0
    %v1840 = vadd.f32 0.0, %v1839
    %v1841 = vpop.f32.mrb[0].mxu0
    %v1842 = vadd.f32 0.0, %v1841
    %v1843 = vpop.f32.mrb[0].mxu0
    %v1844 = vadd.f32 0.0, %v1843
    %1845 = vmatprep.mubr.bf16.mxu0 0
    %1846 = vmatmul.mubr.bf16.gmra.mrb[0].mxu0 %v1710
    %v1847 = vpop.f32.mrb[0].mxu0
    %v1848 = vadd.f32 0.0, %v1847
    %v1849 = vpop.f32.mrb[0].mxu0
    %v1850 = vadd.f32 0.0, %v1849
    %v1851 = vpop.f32.mrb[0].mxu0
    %v1852 = vadd.f32 0.0, %v1851
    %v1853 = vpop.f32.mrb[0].mxu0
    %v1854 = vadd.f32 0.0, %v1853
    %1855 = vmatprep.mubr.bf16.mxu0 0
    %1856 = vmatmul.mubr.bf16.gmra.mrb[0].mxu0 %v1713
    %v1857 = vpop.f32.mrb[0].mxu0
    %v1858 = vadd.f32 0.0, %v1857
    %v1859 = vpop.f32.mrb[0].mxu0
    %v1860 = vadd.f32 0.0, %v1859
    %v1861 = vpop.f32.mrb[0].mxu0
    %v1862 = vadd.f32 0.0, %v1861
    %v1863 = vpop.f32.mrb[0].mxu0
    %v1864 = vadd.f32 0.0, %v1863
    %1865 = vmatprep.mubr.bf16.mxu0 0
    %1866 = vmatmul.mubr.bf16.gmra.mrb[0].mxu0 %v1716
    %v1867 = vpop.f32.mrb[0].mxu0
    %v1868 = vadd.f32 0.0, %v1867
    %v1869 = vpop.f32.mrb[0].mxu0
    %v1870 = vadd.f32 0.0, %v1869
    %v1871 = vpop.f32.mrb[0].mxu0
    %v1872 = vadd.f32 0.0, %v1871
    %v1873 = vpop.f32.mrb[0].mxu0
    %v1874 = vadd.f32 0.0, %v1873
    %1875 = vmatprep.mubr.bf16.mxu0 0
    %1876 = vmatmul.mubr.bf16.gmra.mrb[0].mxu0 %v1719
    %v1877 = vpop.f32.mrb[0].mxu0
    %v1878 = vadd.f32 0.0, %v1877
    %v1879 = vpop.f32.mrb[0].mxu0
    %v1880 = vadd.f32 0.0, %v1879
    %v1881 = vpop.f32.mrb[0].mxu0
    %v1882 = vadd.f32 0.0, %v1881
    %v1883 = vpop.f32.mrb[0].mxu0
    %v1884 = vadd.f32 0.0, %v1883
    %1885 = vmatprep.mubr.bf16.mxu0 0
    %1886 = vmatmul.mubr.bf16.gmra.mrb[0].mxu0 %v1722
    %v1887 = vpop.f32.mrb[0].mxu0
    %v1888 = vadd.f32 0.0, %v1887
    %v1889 = vpop.f32.mrb[0].mxu0
    %v1890 = vadd.f32 0.0, %v1889
    %v1891 = vpop.f32.mrb[0].mxu0
    %v1892 = vadd.f32 0.0, %v1891
    %v1893 = vpop.f32.mrb[0].mxu0
    %v1894 = vadd.f32 0.0, %v1893
    %1895 = vmatprep.mubr.bf16.mxu0 0
    %1896 = vmatmul.mubr.bf16.gmra.mrb[0].mxu0 %v1725
    %v1897 = vpop.f32.mrb[0].mxu0
    %v1898 = vadd.f32 0.0, %v1897
    %v1899 = vpop.f32.mrb[0].mxu0
    %v1900 = vadd.f32 0.0, %v1899
    %v1901 = vpop.f32.mrb[0].mxu0
    %v1902 = vadd.f32 0.0, %v1901
    %v1903 = vpop.f32.mrb[0].mxu0
    %v1904 = vadd.f32 0.0, %v1903
    %1905 = vdwg.mxu0
    %v1906 = vadd.f32 %v1572, %v1768
    %v1907 = vadd.f32 %v1573, %v1770
    %v1908 = vadd.f32 %v1574, %v1772
    %v1909 = vadd.f32 %v1575, %v1774
    %v1910 = vadd.f32 %v1576, %v1778
    %v1911 = vadd.f32 %v1577, %v1780
    %v1912 = vadd.f32 %v1578, %v1782
    %v1913 = vadd.f32 %v1579, %v1784
    %v1914 = vadd.f32 %v1580, %v1788
    %v1915 = vadd.f32 %v1581, %v1790
    %v1916 = vadd.f32 %v1582, %v1792
    %v1917 = vadd.f32 %v1583, %v1794
    %v1918 = vadd.f32 %v1584, %v1798
    %v1919 = vadd.f32 %v1585, %v1800
    %v1920 = vadd.f32 %v1586, %v1802
    %v1921 = vadd.f32 %v1587, %v1804
    %v1922 = vadd.f32 %v1588, %v1808
    %v1923 = vadd.f32 %v1589, %v1810
    %v1924 = vadd.f32 %v1590, %v1812
    %v1925 = vadd.f32 %v1591, %v1814
    %v1926 = vadd.f32 %v1592, %v1818
    %v1927 = vadd.f32 %v1593, %v1820
    %v1928 = vadd.f32 %v1594, %v1822
    %v1929 = vadd.f32 %v1595, %v1824
    %v1930 = vadd.f32 %v1596, %v1828
    %v1931 = vadd.f32 %v1597, %v1830
    %v1932 = vadd.f32 %v1598, %v1832
    %v1933 = vadd.f32 %v1599, %v1834
    %v1934 = vadd.f32 %v1600, %v1838
    %v1935 = vadd.f32 %v1601, %v1840
    %v1936 = vadd.f32 %v1602, %v1842
    %v1937 = vadd.f32 %v1603, %v1844
    %v1938 = vadd.f32 %v1604, %v1848
    %v1939 = vadd.f32 %v1605, %v1850
    %v1940 = vadd.f32 %v1606, %v1852
    %v1941 = vadd.f32 %v1607, %v1854
    %v1942 = vadd.f32 %v1608, %v1858
    %v1943 = vadd.f32 %v1609, %v1860
    %v1944 = vadd.f32 %v1610, %v1862
    %v1945 = vadd.f32 %v1611, %v1864
    %v1946 = vadd.f32 %v1612, %v1868
    %v1947 = vadd.f32 %v1613, %v1870
    %v1948 = vadd.f32 %v1614, %v1872
    %v1949 = vadd.f32 %v1615, %v1874
    %v1950 = vadd.f32 %v1616, %v1878
    %v1951 = vadd.f32 %v1617, %v1880
    %v1952 = vadd.f32 %v1618, %v1882
    %v1953 = vadd.f32 %v1619, %v1884
    %v1954 = vadd.f32 %v1620, %v1888
    %v1955 = vadd.f32 %v1621, %v1890
    %v1956 = vadd.f32 %v1622, %v1892
    %v1957 = vadd.f32 %v1623, %v1894
    %v1958 = vadd.f32 %v1624, %v1898
    %v1959 = vadd.f32 %v1625, %v1900
    %v1960 = vadd.f32 %v1626, %v1902
    %v1961 = vadd.f32 %v1627, %v1904
    %v1962 = vld [vmem:[#allocation6] sm:$0x3]
    %v1964 = vlaneseq
    %v1965 = vshrl.u32 %v1964, 7
    %v1966 = vsub.s32 0, %v1965
    %v1967 = vrot.slane %v1962, %v1966
    %v1968 = vlaneseq
    %v1969 = vshrl.u32 %v1968, 7
    %v1970 = vsub.s32 1, %v1969
    %v1971 = vrot.slane %v1962, %v1970
    %v1974 = vadd.f32 %v1906, %v1967
    %v1975 = vadd.f32 %v1907, %v1971
    %v1976 = vadd.f32 %v1908, %v1967
    %v1977 = vadd.f32 %v1909, %v1971
    %v1978 = vadd.f32 %v1910, %v1967
    %v1979 = vadd.f32 %v1911, %v1971
    %v1980 = vadd.f32 %v1912, %v1967
    %v1981 = vadd.f32 %v1913, %v1971
    %v1982 = vadd.f32 %v1914, %v1967
    %v1983 = vadd.f32 %v1915, %v1971
    %v1984 = vadd.f32 %v1916, %v1967
    %v1985 = vadd.f32 %v1917, %v1971
    %v1986 = vadd.f32 %v1918, %v1967
    %v1987 = vadd.f32 %v1919, %v1971
    %v1988 = vadd.f32 %v1920, %v1967
    %v1989 = vadd.f32 %v1921, %v1971
    %v1990 = vadd.f32 %v1922, %v1967
    %v1991 = vadd.f32 %v1923, %v1971
    %v1992 = vadd.f32 %v1924, %v1967
    %v1993 = vadd.f32 %v1925, %v1971
    %v1994 = vadd.f32 %v1926, %v1967
    %v1995 = vadd.f32 %v1927, %v1971
    %v1996 = vadd.f32 %v1928, %v1967
    %v1997 = vadd.f32 %v1929, %v1971
    %v1998 = vadd.f32 %v1930, %v1967
    %v1999 = vadd.f32 %v1931, %v1971
    %v2000 = vadd.f32 %v1932, %v1967
    %v2001 = vadd.f32 %v1933, %v1971
    %v2002 = vadd.f32 %v1934, %v1967
    %v2003 = vadd.f32 %v1935, %v1971
    %v2004 = vadd.f32 %v1936, %v1967
    %v2005 = vadd.f32 %v1937, %v1971
    %v2006 = vadd.f32 %v1938, %v1967
    %v2007 = vadd.f32 %v1939, %v1971
    %v2008 = vadd.f32 %v1940, %v1967
    %v2009 = vadd.f32 %v1941, %v1971
    %v2010 = vadd.f32 %v1942, %v1967
    %v2011 = vadd.f32 %v1943, %v1971
    %v2012 = vadd.f32 %v1944, %v1967
    %v2013 = vadd.f32 %v1945, %v1971
    %v2014 = vadd.f32 %v1946, %v1967
    %v2015 = vadd.f32 %v1947, %v1971
    %v2016 = vadd.f32 %v1948, %v1967
    %v2017 = vadd.f32 %v1949, %v1971
    %v2018 = vadd.f32 %v1950, %v1967
    %v2019 = vadd.f32 %v1951, %v1971
    %v2020 = vadd.f32 %v1952, %v1967
    %v2021 = vadd.f32 %v1953, %v1971
    %v2022 = vadd.f32 %v1954, %v1967
    %v2023 = vadd.f32 %v1955, %v1971
    %v2024 = vadd.f32 %v1956, %v1967
    %v2025 = vadd.f32 %v1957, %v1971
    %v2026 = vadd.f32 %v1958, %v1967
    %v2027 = vadd.f32 %v1959, %v1971
    %v2028 = vadd.f32 %v1960, %v1967
    %v2029 = vadd.f32 %v1961, %v1971
    %v2030 = vmax.f32 %v1974, 0.0
    %v2031 = vmax.f32 %v1975, 0.0
    %v2032 = vmax.f32 %v1976, 0.0
    %v2033 = vmax.f32 %v1977, 0.0
    %v2034 = vmax.f32 %v1978, 0.0
    %v2035 = vmax.f32 %v1979, 0.0
    %v2036 = vmax.f32 %v1980, 0.0
    %v2037 = vmax.f32 %v1981, 0.0
    %v2038 = vmax.f32 %v1982, 0.0
    %v2039 = vmax.f32 %v1983, 0.0
    %v2040 = vmax.f32 %v1984, 0.0
    %v2041 = vmax.f32 %v1985, 0.0
    %v2042 = vmax.f32 %v1986, 0.0
    %v2043 = vmax.f32 %v1987, 0.0
    %v2044 = vmax.f32 %v1988, 0.0
    %v2045 = vmax.f32 %v1989, 0.0
    %v2046 = vmax.f32 %v1990, 0.0
    %v2047 = vmax.f32 %v1991, 0.0
    %v2048 = vmax.f32 %v1992, 0.0
    %v2049 = vmax.f32 %v1993, 0.0
    %v2050 = vmax.f32 %v1994, 0.0
    %v2051 = vmax.f32 %v1995, 0.0
    %v2052 = vmax.f32 %v1996, 0.0
    %v2053 = vmax.f32 %v1997, 0.0
    %v2054 = vmax.f32 %v1998, 0.0
    %v2055 = vmax.f32 %v1999, 0.0
    %v2056 = vmax.f32 %v2000, 0.0
    %v2057 = vmax.f32 %v2001, 0.0
    %v2058 = vmax.f32 %v2002, 0.0
    %v2059 = vmax.f32 %v2003, 0.0
    %v2060 = vmax.f32 %v2004, 0.0
    %v2061 = vmax.f32 %v2005, 0.0
    %v2062 = vmax.f32 %v2006, 0.0
    %v2063 = vmax.f32 %v2007, 0.0
    %v2064 = vmax.f32 %v2008, 0.0
    %v2065 = vmax.f32 %v2009, 0.0
    %v2066 = vmax.f32 %v2010, 0.0
    %v2067 = vmax.f32 %v2011, 0.0
    %v2068 = vmax.f32 %v2012, 0.0
    %v2069 = vmax.f32 %v2013, 0.0
    %v2070 = vmax.f32 %v2014, 0.0
    %v2071 = vmax.f32 %v2015, 0.0
    %v2072 = vmax.f32 %v2016, 0.0
    %v2073 = vmax.f32 %v2017, 0.0
    %v2074 = vmax.f32 %v2018, 0.0
    %v2075 = vmax.f32 %v2019, 0.0
    %v2076 = vmax.f32 %v2020, 0.0
    %v2077 = vmax.f32 %v2021, 0.0
    %v2078 = vmax.f32 %v2022, 0.0
    %v2079 = vmax.f32 %v2023, 0.0
    %v2080 = vmax.f32 %v2024, 0.0
    %v2081 = vmax.f32 %v2025, 0.0
    %v2082 = vmax.f32 %v2026, 0.0
    %v2083 = vmax.f32 %v2027, 0.0
    %v2084 = vmax.f32 %v2028, 0.0
    %v2085 = vmax.f32 %v2029, 0.0
    %v2086 = vpack.c.bf16 %v2032, %v2030
    %v2087 = vpack.c.bf16 %v2033, %v2031
    %v2088 = vpack.c.bf16 %v2036, %v2034
    %v2089 = vpack.c.bf16 %v2037, %v2035
    %v2090 = vpack.c.bf16 %v2040, %v2038
    %v2091 = vpack.c.bf16 %v2041, %v2039
    %v2092 = vpack.c.bf16 %v2044, %v2042
    %v2093 = vpack.c.bf16 %v2045, %v2043
    %v2094 = vpack.c.bf16 %v2048, %v2046
    %v2095 = vpack.c.bf16 %v2049, %v2047
    %v2096 = vpack.c.bf16 %v2052, %v2050
    %v2097 = vpack.c.bf16 %v2053, %v2051
    %v2098 = vpack.c.bf16 %v2056, %v2054
    %v2099 = vpack.c.bf16 %v2057, %v2055
    %v2100 = vpack.c.bf16 %v2060, %v2058
    %v2101 = vpack.c.bf16 %v2061, %v2059
    %v2102 = vpack.c.bf16 %v2064, %v2062
    %v2103 = vpack.c.bf16 %v2065, %v2063
    %v2104 = vpack.c.bf16 %v2068, %v2066
    %v2105 = vpack.c.bf16 %v2069, %v2067
    %v2106 = vpack.c.bf16 %v2072, %v2070
    %v2107 = vpack.c.bf16 %v2073, %v2071
    %v2108 = vpack.c.bf16 %v2076, %v2074
    %v2109 = vpack.c.bf16 %v2077, %v2075
    %v2110 = vpack.c.bf16 %v2080, %v2078
    %v2111 = vpack.c.bf16 %v2081, %v2079
    %v2112 = vpack.c.bf16 %v2084, %v2082
    %v2113 = vpack.c.bf16 %v2085, %v2083
    %v2142 = vunpack.c.l.b16 %v2086
    %v2143 = vunpack.c.l.b16 %v2087
    %v2144 = vunpack.c.h.b16 %v2086
    %v2145 = vunpack.c.h.b16 %v2087
    %v2146 = vunpack.c.l.b16 %v2088
    %v2147 = vunpack.c.l.b16 %v2089
    %v2148 = vunpack.c.h.b16 %v2088
    %v2149 = vunpack.c.h.b16 %v2089
    %v2150 = vunpack.c.l.b16 %v2090
    %v2151 = vunpack.c.l.b16 %v2091
    %v2152 = vunpack.c.h.b16 %v2090
    %v2153 = vunpack.c.h.b16 %v2091
    %v2154 = vunpack.c.l.b16 %v2092
    %v2155 = vunpack.c.l.b16 %v2093
    %v2156 = vunpack.c.h.b16 %v2092
    %v2157 = vunpack.c.h.b16 %v2093
    %v2158 = vunpack.c.l.b16 %v2094
    %v2159 = vunpack.c.l.b16 %v2095
    %v2160 = vunpack.c.h.b16 %v2094
    %v2161 = vunpack.c.h.b16 %v2095
    %v2162 = vunpack.c.l.b16 %v2096
    %v2163 = vunpack.c.l.b16 %v2097
    %v2164 = vunpack.c.h.b16 %v2096
    %v2165 = vunpack.c.h.b16 %v2097
    %v2166 = vunpack.c.l.b16 %v2098
    %v2167 = vunpack.c.l.b16 %v2099
    %v2168 = vunpack.c.h.b16 %v2098
    %v2169 = vunpack.c.h.b16 %v2099
    %v2170 = vunpack.c.l.b16 %v2100
    %v2171 = vunpack.c.l.b16 %v2101
    %v2172 = vunpack.c.h.b16 %v2100
    %v2173 = vunpack.c.h.b16 %v2101
    %v2174 = vunpack.c.l.b16 %v2102
    %v2175 = vunpack.c.l.b16 %v2103
    %v2176 = vunpack.c.h.b16 %v2102
    %v2177 = vunpack.c.h.b16 %v2103
    %v2178 = vunpack.c.l.b16 %v2104
    %v2179 = vunpack.c.l.b16 %v2105
    %v2180 = vunpack.c.h.b16 %v2104
    %v2181 = vunpack.c.h.b16 %v2105
    %v2182 = vunpack.c.l.b16 %v2106
    %v2183 = vunpack.c.l.b16 %v2107
    %v2184 = vunpack.c.h.b16 %v2106
    %v2185 = vunpack.c.h.b16 %v2107
    %v2186 = vunpack.c.l.b16 %v2108
    %v2187 = vunpack.c.l.b16 %v2109
    %v2188 = vunpack.c.h.b16 %v2108
    %v2189 = vunpack.c.h.b16 %v2109
    %v2190 = vunpack.c.l.b16 %v2110
    %v2191 = vunpack.c.l.b16 %v2111
    %v2192 = vunpack.c.h.b16 %v2110
    %v2193 = vunpack.c.h.b16 %v2111
    %v2194 = vunpack.c.l.b16 %v2112
    %v2195 = vunpack.c.l.b16 %v2113
    %v2196 = vunpack.c.h.b16 %v2112
    %v2197 = vunpack.c.h.b16 %v2113
    %v2198 = vpack.c.b16 %v2143, %v2142
    %v2199 = vpack.c.b16 %v2145, %v2144
    %v2200 = vpack.c.b16 %v2147, %v2146
    %v2201 = vpack.c.b16 %v2149, %v2148
    %v2202 = vpack.c.b16 %v2151, %v2150
    %v2203 = vpack.c.b16 %v2153, %v2152
    %v2204 = vpack.c.b16 %v2155, %v2154
    %v2205 = vpack.c.b16 %v2157, %v2156
    %v2206 = vpack.c.b16 %v2159, %v2158
    %v2207 = vpack.c.b16 %v2161, %v2160
    %v2208 = vpack.c.b16 %v2163, %v2162
    %v2209 = vpack.c.b16 %v2165, %v2164
    %v2210 = vpack.c.b16 %v2167, %v2166
    %v2211 = vpack.c.b16 %v2169, %v2168
    %v2212 = vpack.c.b16 %v2171, %v2170
    %v2213 = vpack.c.b16 %v2173, %v2172
    %v2214 = vpack.c.b16 %v2175, %v2174
    %v2215 = vpack.c.b16 %v2177, %v2176
    %v2216 = vpack.c.b16 %v2179, %v2178
    %v2217 = vpack.c.b16 %v2181, %v2180
    %v2218 = vpack.c.b16 %v2183, %v2182
    %v2219 = vpack.c.b16 %v2185, %v2184
    %v2220 = vpack.c.b16 %v2187, %v2186
    %v2221 = vpack.c.b16 %v2189, %v2188
    %v2222 = vpack.c.b16 %v2191, %v2190
    %v2223 = vpack.c.b16 %v2193, %v2192
    %v2224 = vpack.c.b16 %v2195, %v2194
    %v2225 = vpack.c.b16 %v2197, %v2196
    %vm2254 = vcmask 1043456
    %vm2255 = vcmask 130052
    %vm2256 = vmor %vm2255, %vm2254
    %2257 = vst.msk [vmem:[#allocation3] sm:$0xff] %vm2256, %v2198
    %2258 = vst.msk [vmem:[#allocation3 + $0x8] sm:$0xff] %vm2256, %v2199
    %2259 = vst.msk [vmem:[#allocation3 + $0x10] sm:$0xff] %vm2256, %v2200
    %2260 = vst.msk [vmem:[#allocation3 + $0x18] sm:$0xff] %vm2256, %v2201
    %2261 = vst.msk [vmem:[#allocation3 + $0x20] sm:$0xff] %vm2256, %v2202
    %2262 = vst.msk [vmem:[#allocation3 + $0x28] sm:$0xff] %vm2256, %v2203
    %2263 = vst.msk [vmem:[#allocation3 + $0x30] sm:$0xff] %vm2256, %v2204
    %2264 = vst.msk [vmem:[#allocation3 + $0x38] sm:$0xff] %vm2256, %v2205
    %2265 = vst.msk [vmem:[#allocation3 + $0x40] sm:$0xff] %vm2256, %v2206
    %2266 = vst.msk [vmem:[#allocation3 + $0x48] sm:$0xff] %vm2256, %v2207
    %2267 = vst.msk [vmem:[#allocation3 + $0x50] sm:$0xff] %vm2256, %v2208
    %2268 = vst.msk [vmem:[#allocation3 + $0x58] sm:$0xff] %vm2256, %v2209
    %2269 = vst.msk [vmem:[#allocation3 + $0x60] sm:$0xff] %vm2256, %v2210
    %2270 = vst.msk [vmem:[#allocation3 + $0x68] sm:$0xff] %vm2256, %v2211
    %2271 = vst.msk [vmem:[#allocation3 + $0x70] sm:$0xff] %vm2256, %v2212
    %2272 = vst.msk [vmem:[#allocation3 + $0x78] sm:$0xff] %vm2256, %v2213
    %2273 = vst.msk [vmem:[#allocation3 + $0x80] sm:$0xff] %vm2256, %v2214
    %2274 = vst.msk [vmem:[#allocation3 + $0x88] sm:$0xff] %vm2256, %v2215
    %2275 = vst.msk [vmem:[#allocation3 + $0x90] sm:$0xff] %vm2256, %v2216
    %2276 = vst.msk [vmem:[#allocation3 + $0x98] sm:$0xff] %vm2256, %v2217
    %2277 = vst.msk [vmem:[#allocation3 + $0xa0] sm:$0xff] %vm2256, %v2218
    %2278 = vst.msk [vmem:[#allocation3 + $0xa8] sm:$0xff] %vm2256, %v2219
    %2279 = vst.msk [vmem:[#allocation3 + $0xb0] sm:$0xff] %vm2256, %v2220
    %2280 = vst.msk [vmem:[#allocation3 + $0xb8] sm:$0xff] %vm2256, %v2221
    %2281 = vst.msk [vmem:[#allocation3 + $0xc0] sm:$0xff] %vm2256, %v2222
    %2282 = vst.msk [vmem:[#allocation3 + $0xc8] sm:$0xff] %vm2256, %v2223
    %2283 = vst.msk [vmem:[#allocation3 + $0xd0] sm:$0xff] %vm2256, %v2224
    %2284 = vst.msk [vmem:[#allocation3 + $0xd8] sm:$0xff] %vm2256, %v2225
    %2285 = vst.msk [vmem:[#allocation3 + $0xe0] sm:$0xff] %vm2256, 0
    %v2286 = vld [vmem:[#allocation3] sm:$0xff]
    %v2287 = vld [vmem:[#allocation3 + $0x8] sm:$0xff]
    %v2288 = vld [vmem:[#allocation3 + $0x10] sm:$0xff]
    %v2289 = vld [vmem:[#allocation3 + $0x18] sm:$0xff]
    %v2290 = vld [vmem:[#allocation3 + $0x20] sm:$0xff]
    %v2291 = vld [vmem:[#allocation3 + $0x28] sm:$0xff]
    %v2292 = vld [vmem:[#allocation3 + $0x30] sm:$0xff]
    %v2293 = vld [vmem:[#allocation3 + $0x38] sm:$0xff]
    %v2294 = vld [vmem:[#allocation3 + $0x40] sm:$0xff]
    %v2295 = vld [vmem:[#allocation3 + $0x48] sm:$0xff]
    %v2296 = vld [vmem:[#allocation3 + $0x50] sm:$0xff]
    %v2297 = vld [vmem:[#allocation3 + $0x58] sm:$0xff]
    %v2298 = vld [vmem:[#allocation3 + $0x60] sm:$0xff]
    %v2299 = vld [vmem:[#allocation3 + $0x68] sm:$0xff]
    %v2300 = vld [vmem:[#allocation3 + $0x70] sm:$0xff]
    %v2301 = vld [vmem:[#allocation3 + $0x78] sm:$0xff]
    %v2302 = vld [vmem:[#allocation3 + $0x80] sm:$0xff]
    %v2303 = vld [vmem:[#allocation3 + $0x88] sm:$0xff]
    %v2304 = vld [vmem:[#allocation3 + $0x90] sm:$0xff]
    %v2305 = vld [vmem:[#allocation3 + $0x98] sm:$0xff]
    %v2306 = vld [vmem:[#allocation3 + $0xa0] sm:$0xff]
    %v2307 = vld [vmem:[#allocation3 + $0xa8] sm:$0xff]
    %v2308 = vld [vmem:[#allocation3 + $0xb0] sm:$0xff]
    %v2309 = vld [vmem:[#allocation3 + $0xb8] sm:$0xff]
    %v2310 = vld [vmem:[#allocation3 + $0xc0] sm:$0xff]
    %v2311 = vld [vmem:[#allocation3 + $0xc8] sm:$0xff]
    %v2312 = vld [vmem:[#allocation3 + $0xd0] sm:$0xff]
    %v2313 = vld [vmem:[#allocation3 + $0xd8] sm:$0xff]
    %v2314 = vld [vmem:[#allocation3 + $0xe0] sm:$0x11]
    %v2344 = vunpack.c.l.b16 %v2286
    %v2345 = vunpack.c.h.b16 %v2286
    %v2346 = vunpack.c.l.b16 %v2287
    %v2347 = vunpack.c.h.b16 %v2287
    %v2348 = vunpack.c.l.b16 %v2288
    %v2349 = vunpack.c.h.b16 %v2288
    %v2350 = vunpack.c.l.b16 %v2289
    %v2351 = vunpack.c.h.b16 %v2289
    %v2352 = vunpack.c.l.b16 %v2290
    %v2353 = vunpack.c.h.b16 %v2290
    %v2354 = vunpack.c.l.b16 %v2291
    %v2355 = vunpack.c.h.b16 %v2291
    %v2356 = vunpack.c.l.b16 %v2292
    %v2357 = vunpack.c.h.b16 %v2292
    %v2358 = vunpack.c.l.b16 %v2293
    %v2359 = vunpack.c.h.b16 %v2293
    %v2360 = vunpack.c.l.b16 %v2294
    %v2361 = vunpack.c.h.b16 %v2294
    %v2362 = vunpack.c.l.b16 %v2295
    %v2363 = vunpack.c.h.b16 %v2295
    %v2364 = vunpack.c.l.b16 %v2296
    %v2365 = vunpack.c.h.b16 %v2296
    %v2366 = vunpack.c.l.b16 %v2297
    %v2367 = vunpack.c.h.b16 %v2297
    %v2368 = vunpack.c.l.b16 %v2298
    %v2369 = vunpack.c.h.b16 %v2298
    %v2370 = vunpack.c.l.b16 %v2299
    %v2371 = vunpack.c.h.b16 %v2299
    %v2372 = vunpack.c.l.b16 %v2300
    %v2373 = vunpack.c.h.b16 %v2300
    %v2374 = vunpack.c.l.b16 %v2301
    %v2375 = vunpack.c.h.b16 %v2301
    %v2376 = vunpack.c.l.b16 %v2302
    %v2377 = vunpack.c.h.b16 %v2302
    %v2378 = vunpack.c.l.b16 %v2303
    %v2379 = vunpack.c.h.b16 %v2303
    %v2380 = vunpack.c.l.b16 %v2304
    %v2381 = vunpack.c.h.b16 %v2304
    %v2382 = vunpack.c.l.b16 %v2305
    %v2383 = vunpack.c.h.b16 %v2305
    %v2384 = vunpack.c.l.b16 %v2306
    %v2385 = vunpack.c.h.b16 %v2306
    %v2386 = vunpack.c.l.b16 %v2307
    %v2387 = vunpack.c.h.b16 %v2307
    %v2388 = vunpack.c.l.b16 %v2308
    %v2389 = vunpack.c.h.b16 %v2308
    %v2390 = vunpack.c.l.b16 %v2309
    %v2391 = vunpack.c.h.b16 %v2309
    %v2392 = vunpack.c.l.b16 %v2310
    %v2393 = vunpack.c.h.b16 %v2310
    %v2394 = vunpack.c.l.b16 %v2311
    %v2395 = vunpack.c.h.b16 %v2311
    %v2396 = vunpack.c.l.b16 %v2312
    %v2397 = vunpack.c.h.b16 %v2312
    %v2398 = vunpack.c.l.b16 %v2313
    %v2399 = vunpack.c.h.b16 %v2313
    %v2400 = vunpack.c.l.b16 %v2314
    %v2401 = vunpack.c.h.b16 %v2314
    %v2402 = vpack.c.b16 %v2346, %v2344
    %v2403 = vpack.c.b16 %v2347, %v2345
    %v2404 = vpack.c.b16 %v2350, %v2348
    %v2405 = vpack.c.b16 %v2351, %v2349
    %v2406 = vpack.c.b16 %v2354, %v2352
    %v2407 = vpack.c.b16 %v2355, %v2353
    %v2408 = vpack.c.b16 %v2358, %v2356
    %v2409 = vpack.c.b16 %v2359, %v2357
    %v2410 = vpack.c.b16 %v2362, %v2360
    %v2411 = vpack.c.b16 %v2363, %v2361
    %v2412 = vpack.c.b16 %v2366, %v2364
    %v2413 = vpack.c.b16 %v2367, %v2365
    %v2414 = vpack.c.b16 %v2370, %v2368
    %v2415 = vpack.c.b16 %v2371, %v2369
    %v2416 = vpack.c.b16 %v2374, %v2372
    %v2417 = vpack.c.b16 %v2375, %v2373
    %v2418 = vpack.c.b16 %v2378, %v2376
    %v2419 = vpack.c.b16 %v2379, %v2377
    %v2420 = vpack.c.b16 %v2382, %v2380
    %v2421 = vpack.c.b16 %v2383, %v2381
    %v2422 = vpack.c.b16 %v2386, %v2384
    %v2423 = vpack.c.b16 %v2387, %v2385
    %v2424 = vpack.c.b16 %v2390, %v2388
    %v2425 = vpack.c.b16 %v2391, %v2389
    %v2426 = vpack.c.b16 %v2394, %v2392
    %v2427 = vpack.c.b16 %v2395, %v2393
    %v2428 = vpack.c.b16 %v2398, %v2396
    %v2429 = vpack.c.b16 %v2399, %v2397
    %v2430 = vpack.c.b16 %v2400, %v2400
    %v2431 = vpack.c.b16 %v2401, %v2401
    %v2433 = vshrl.u32 %v2402, 16
    %v2435 = vshll.u32 %v2402, 16
    %v2437 = vrot.slane %v2435, 1
    %v2438 = vor.u32 %v2433, %v2437
    %v2440 = vshll.u32 %v2404, 16
    %v2442 = vrot.slane %v2440, 1
    %v2443 = vsel %vm253, %v2438, %v2442
    %v2445 = vshrl.u32 %v2403, 16
    %v2447 = vshll.u32 %v2403, 16
    %v2449 = vrot.slane %v2447, 1
    %v2450 = vor.u32 %v2445, %v2449
    %v2452 = vshll.u32 %v2405, 16
    %v2454 = vrot.slane %v2452, 1
    %v2455 = vsel %vm253, %v2450, %v2454
    %v2456 = vshrl.u32 %v2404, 16
    %v2458 = vor.u32 %v2456, %v2442
    %v2460 = vshll.u32 %v2406, 16
    %v2462 = vrot.slane %v2460, 1
    %v2463 = vsel %vm253, %v2458, %v2462
    %v2464 = vshrl.u32 %v2405, 16
    %v2466 = vor.u32 %v2464, %v2454
    %v2468 = vshll.u32 %v2407, 16
    %v2470 = vrot.slane %v2468, 1
    %v2471 = vsel %vm253, %v2466, %v2470
    %v2472 = vshrl.u32 %v2406, 16
    %v2474 = vor.u32 %v2472, %v2462
    %v2476 = vshll.u32 %v2408, 16
    %v2478 = vrot.slane %v2476, 1
    %v2479 = vsel %vm253, %v2474, %v2478
    %v2480 = vshrl.u32 %v2407, 16
    %v2482 = vor.u32 %v2480, %v2470
    %v2484 = vshll.u32 %v2409, 16
    %v2486 = vrot.slane %v2484, 1
    %v2487 = vsel %vm253, %v2482, %v2486
    %v2488 = vshrl.u32 %v2408, 16
    %v2490 = vor.u32 %v2488, %v2478
    %v2492 = vshll.u32 %v2410, 16
    %v2494 = vrot.slane %v2492, 1
    %v2495 = vsel %vm253, %v2490, %v2494
    %v2496 = vshrl.u32 %v2409, 16
    %v2498 = vor.u32 %v2496, %v2486
    %v2500 = vshll.u32 %v2411, 16
    %v2502 = vrot.slane %v2500, 1
    %v2503 = vsel %vm253, %v2498, %v2502
    %v2504 = vshrl.u32 %v2410, 16
    %v2506 = vor.u32 %v2504, %v2494
    %v2508 = vshll.u32 %v2412, 16
    %v2510 = vrot.slane %v2508, 1
    %v2511 = vsel %vm253, %v2506, %v2510
    %v2512 = vshrl.u32 %v2411, 16
    %v2514 = vor.u32 %v2512, %v2502
    %v2516 = vshll.u32 %v2413, 16
    %v2518 = vrot.slane %v2516, 1
    %v2519 = vsel %vm253, %v2514, %v2518
    %v2520 = vshrl.u32 %v2412, 16
    %v2522 = vor.u32 %v2520, %v2510
    %v2524 = vshll.u32 %v2414, 16
    %v2526 = vrot.slane %v2524, 1
    %v2527 = vsel %vm253, %v2522, %v2526
    %v2528 = vshrl.u32 %v2413, 16
    %v2530 = vor.u32 %v2528, %v2518
    %v2532 = vshll.u32 %v2415, 16
    %v2534 = vrot.slane %v2532, 1
    %v2535 = vsel %vm253, %v2530, %v2534
    %v2536 = vshrl.u32 %v2414, 16
    %v2538 = vor.u32 %v2536, %v2526
    %v2540 = vshll.u32 %v2416, 16
    %v2542 = vrot.slane %v2540, 1
    %v2543 = vsel %vm253, %v2538, %v2542
    %v2544 = vshrl.u32 %v2415, 16
    %v2546 = vor.u32 %v2544, %v2534
    %v2548 = vshll.u32 %v2417, 16
    %v2550 = vrot.slane %v2548, 1
    %v2551 = vsel %vm253, %v2546, %v2550
    %v2552 = vshrl.u32 %v2416, 16
    %v2554 = vor.u32 %v2552, %v2542
    %v2556 = vshll.u32 %v2418, 16
    %v2558 = vrot.slane %v2556, 1
    %v2559 = vsel %vm253, %v2554, %v2558
    %v2560 = vshrl.u32 %v2417, 16
    %v2562 = vor.u32 %v2560, %v2550
    %v2564 = vshll.u32 %v2419, 16
    %v2566 = vrot.slane %v2564, 1
    %v2567 = vsel %vm253, %v2562, %v2566
    %v2568 = vshrl.u32 %v2418, 16
    %v2570 = vor.u32 %v2568, %v2558
    %v2572 = vshll.u32 %v2420, 16
    %v2574 = vrot.slane %v2572, 1
    %v2575 = vsel %vm253, %v2570, %v2574
    %v2576 = vshrl.u32 %v2419, 16
    %v2578 = vor.u32 %v2576, %v2566
    %v2580 = vshll.u32 %v2421, 16
    %v2582 = vrot.slane %v2580, 1
    %v2583 = vsel %vm253, %v2578, %v2582
    %v2584 = vshrl.u32 %v2420, 16
    %v2586 = vor.u32 %v2584, %v2574
    %v2588 = vshll.u32 %v2422, 16
    %v2590 = vrot.slane %v2588, 1
    %v2591 = vsel %vm253, %v2586, %v2590
    %v2592 = vshrl.u32 %v2421, 16
    %v2594 = vor.u32 %v2592, %v2582
    %v2596 = vshll.u32 %v2423, 16
    %v2598 = vrot.slane %v2596, 1
    %v2599 = vsel %vm253, %v2594, %v2598
    %v2600 = vshrl.u32 %v2422, 16
    %v2602 = vor.u32 %v2600, %v2590
    %v2604 = vshll.u32 %v2424, 16
    %v2606 = vrot.slane %v2604, 1
    %v2607 = vsel %vm253, %v2602, %v2606
    %v2608 = vshrl.u32 %v2423, 16
    %v2610 = vor.u32 %v2608, %v2598
    %v2612 = vshll.u32 %v2425, 16
    %v2614 = vrot.slane %v2612, 1
    %v2615 = vsel %vm253, %v2610, %v2614
    %v2616 = vshrl.u32 %v2424, 16
    %v2618 = vor.u32 %v2616, %v2606
    %v2620 = vshll.u32 %v2426, 16
    %v2622 = vrot.slane %v2620, 1
    %v2623 = vsel %vm253, %v2618, %v2622
    %v2624 = vshrl.u32 %v2425, 16
    %v2626 = vor.u32 %v2624, %v2614
    %v2628 = vshll.u32 %v2427, 16
    %v2630 = vrot.slane %v2628, 1
    %v2631 = vsel %vm253, %v2626, %v2630
    %v2632 = vshrl.u32 %v2426, 16
    %v2634 = vor.u32 %v2632, %v2622
    %v2636 = vshll.u32 %v2428, 16
    %v2638 = vrot.slane %v2636, 1
    %v2639 = vsel %vm253, %v2634, %v2638
    %v2640 = vshrl.u32 %v2427, 16
    %v2642 = vor.u32 %v2640, %v2630
    %v2644 = vshll.u32 %v2429, 16
    %v2646 = vrot.slane %v2644, 1
    %v2647 = vsel %vm253, %v2642, %v2646
    %v2648 = vshrl.u32 %v2428, 16
    %v2650 = vor.u32 %v2648, %v2638
    %v2652 = vshll.u32 %v2430, 16
    %v2654 = vrot.slane %v2652, 1
    %v2655 = vsel %vm253, %v2650, %v2654
    %v2656 = vshrl.u32 %v2429, 16
    %v2658 = vor.u32 %v2656, %v2646
    %v2660 = vshll.u32 %v2431, 16
    %v2662 = vrot.slane %v2660, 1
    %v2663 = vsel %vm253, %v2658, %v2662
    %v2692 = vmax.bf16 %v2086, %v2443
    %v2693 = vmax.bf16 %v2087, %v2455
    %v2694 = vmax.bf16 %v2088, %v2463
    %v2695 = vmax.bf16 %v2089, %v2471
    %v2696 = vmax.bf16 %v2090, %v2479
    %v2697 = vmax.bf16 %v2091, %v2487
    %v2698 = vmax.bf16 %v2092, %v2495
    %v2699 = vmax.bf16 %v2093, %v2503
    %v2700 = vmax.bf16 %v2094, %v2511
    %v2701 = vmax.bf16 %v2095, %v2519
    %v2702 = vmax.bf16 %v2096, %v2527
    %v2703 = vmax.bf16 %v2097, %v2535
    %v2704 = vmax.bf16 %v2098, %v2543
    %v2705 = vmax.bf16 %v2099, %v2551
    %v2706 = vmax.bf16 %v2100, %v2559
    %v2707 = vmax.bf16 %v2101, %v2567
    %v2708 = vmax.bf16 %v2102, %v2575
    %v2709 = vmax.bf16 %v2103, %v2583
    %v2710 = vmax.bf16 %v2104, %v2591
    %v2711 = vmax.bf16 %v2105, %v2599
    %v2712 = vmax.bf16 %v2106, %v2607
    %v2713 = vmax.bf16 %v2107, %v2615
    %v2714 = vmax.bf16 %v2108, %v2623
    %v2715 = vmax.bf16 %v2109, %v2631
    %v2716 = vmax.bf16 %v2110, %v2639
    %v2717 = vmax.bf16 %v2111, %v2647
    %v2718 = vmax.bf16 %v2112, %v2655
    %v2719 = vmax.bf16 %v2113, %v2663
    %v2720 = vld [vmem:[%s2] sm:$0xff]
    %v2721 = vld [vmem:[%s2 + $0x8] sm:$0xff]
    %v2722 = vld [vmem:[%s2 + $0x10] sm:$0xff]
    %v2723 = vld [vmem:[%s2 + $0x18] sm:$0xff]
    %v2724 = vld [vmem:[%s2 + $0x20] sm:$0xff]
    %v2725 = vld [vmem:[%s2 + $0x28] sm:$0xff]
    %v2726 = vld [vmem:[%s2 + $0x30] sm:$0xff]
    %v2727 = vld [vmem:[%s2 + $0x38] sm:$0xff]
    %v2728 = vld [vmem:[%s2 + $0x40] sm:$0xff]
    %v2729 = vld [vmem:[%s2 + $0x48] sm:$0xff]
    %v2730 = vld [vmem:[%s2 + $0x50] sm:$0xff]
    %v2731 = vld [vmem:[%s2 + $0x58] sm:$0xff]
    %v2744 = vunpack.c.l.b16 %v2720
    %v2745 = vunpack.c.h.b16 %v2720
    %v2746 = vunpack.c.l.b16 %v2721
    %v2747 = vunpack.c.h.b16 %v2721
    %v2748 = vunpack.c.l.b16 %v2722
    %v2749 = vunpack.c.h.b16 %v2722
    %v2750 = vunpack.c.l.b16 %v2723
    %v2751 = vunpack.c.h.b16 %v2723
    %v2752 = vunpack.c.l.b16 %v2724
    %v2753 = vunpack.c.h.b16 %v2724
    %v2754 = vunpack.c.l.b16 %v2725
    %v2755 = vunpack.c.h.b16 %v2725
    %v2756 = vunpack.c.l.b16 %v2726
    %v2757 = vunpack.c.h.b16 %v2726
    %v2758 = vunpack.c.l.b16 %v2727
    %v2759 = vunpack.c.h.b16 %v2727
    %v2760 = vunpack.c.l.b16 %v2728
    %v2761 = vunpack.c.h.b16 %v2728
    %v2762 = vunpack.c.l.b16 %v2729
    %v2763 = vunpack.c.h.b16 %v2729
    %v2764 = vunpack.c.l.b16 %v2730
    %v2765 = vunpack.c.h.b16 %v2730
    %v2766 = vunpack.c.l.b16 %v2731
    %v2767 = vunpack.c.h.b16 %v2731
    %v2768 = vpack.c.b16 %v2746, %v2744
    %v2769 = vpack.c.b16 %v2747, %v2745
    %v2770 = vpack.c.b16 %v2750, %v2748
    %v2771 = vpack.c.b16 %v2751, %v2749
    %v2772 = vpack.c.b16 %v2754, %v2752
    %v2773 = vpack.c.b16 %v2755, %v2753
    %v2774 = vpack.c.b16 %v2758, %v2756
    %v2775 = vpack.c.b16 %v2759, %v2757
    %v2776 = vpack.c.b16 %v2762, %v2760
    %v2777 = vpack.c.b16 %v2763, %v2761
    %v2778 = vpack.c.b16 %v2766, %v2764
    %v2779 = vpack.c.b16 %v2767, %v2765
    %vm2786 = vcmask 785408
    %v2788 = vsel %vm2786, %v2769, 0
    %v2791 = vsel %vm2786, %v2771, 0
    %v2794 = vsel %vm2786, %v2773, 0
    %v2797 = vsel %vm2786, %v2775, 0
    %v2800 = vsel %vm2786, %v2777, 0
    %v2803 = vsel %vm2786, %v2779, 0
    %2805 = vmatprep.subr.bf16.mxu0 %v2693
    %2806 = vmatpush1.bf16.msra.mxu0 %v2692
    %2807 = vmatprep.subr.bf16.mxu0 %v2695
    %2808 = vmatpush1.bf16.msra.mxu0 %v2694
    %2809 = vmatprep.subr.bf16.mxu0 %v2697
    %2810 = vmatpush1.bf16.msra.mxu0 %v2696
    %2811 = vmatprep.subr.bf16.mxu0 %v2699
    %2812 = vmatpush1.bf16.msra.mxu0 %v2698
    %2813 = vmatprep.subr.bf16.mxu0 %v2701
    %2814 = vmatpush1.bf16.msra.mxu0 %v2700
    %2815 = vmatprep.subr.bf16.mxu0 %v2703
    %2816 = vmatpush1.bf16.msra.mxu0 %v2702
    %2817 = vmatprep.subr.bf16.mxu0 %v2705
    %2818 = vmatpush1.bf16.msra.mxu0 %v2704
    %2819 = vmatprep.subr.bf16.mxu0 %v2707
    %2820 = vmatpush1.bf16.msra.mxu0 %v2706
    %2821 = vmatprep.subr.bf16.mxu0 %v2709
    %2822 = vmatpush1.bf16.msra.mxu0 %v2708
    %2823 = vmatprep.subr.bf16.mxu0 %v2711
    %2824 = vmatpush1.bf16.msra.mxu0 %v2710
    %2825 = vmatprep.subr.bf16.mxu0 %v2713
    %2826 = vmatpush1.bf16.msra.mxu0 %v2712
    %2827 = vmatprep.subr.bf16.mxu0 %v2715
    %2828 = vmatpush1.bf16.msra.mxu0 %v2714
    %2829 = vmatprep.subr.bf16.mxu0 %v2717
    %2830 = vmatpush1.bf16.msra.mxu0 %v2716
    %2831 = vmatprep.subr.bf16.mxu0 %v2719
    %2832 = vmatpush1.bf16.msra.mxu0 %v2718
    %2833 = vmatprep.subr.bf16.mxu0 0
    %2834 = vmatpush1.bf16.msra.mxu0 0
    %2835 = vmatprep.subr.bf16.mxu0 0
    %2836 = vmatpush1.bf16.msra.mxu0 0
    %2837 = vmatprep.mubr.bf16.mxu0 %v2788
    %2838 = vmatmul.mubr.bf16.gmra.mrb[0].mxu0 %v2768
    %v2839 = vpop.f32.mrb[0].mxu0
    %v2840 = vadd.f32 0.0, %v2839
    %v2841 = vpop.f32.mrb[0].mxu0
    %v2842 = vadd.f32 0.0, %v2841
    %v2843 = vpop.f32.mrb[0].mxu0
    %v2844 = vadd.f32 0.0, %v2843
    %v2845 = vpop.f32.mrb[0].mxu0
    %v2846 = vadd.f32 0.0, %v2845
    %2847 = vmatprep.mubr.bf16.mxu0 %v2791
    %2848 = vmatmul.mubr.bf16.gmra.mrb[0].mxu0 %v2770
    %v2849 = vpop.f32.mrb[0].mxu0
    %v2850 = vadd.f32 0.0, %v2849
    %v2851 = vpop.f32.mrb[0].mxu0
    %v2852 = vadd.f32 0.0, %v2851
    %v2853 = vpop.f32.mrb[0].mxu0
    %v2854 = vadd.f32 0.0, %v2853
    %v2855 = vpop.f32.mrb[0].mxu0
    %v2856 = vadd.f32 0.0, %v2855
    %2857 = vmatprep.mubr.bf16.mxu0 %v2794
    %2858 = vmatmul.mubr.bf16.gmra.mrb[0].mxu0 %v2772
    %v2859 = vpop.f32.mrb[0].mxu0
    %v2860 = vadd.f32 0.0, %v2859
    %v2861 = vpop.f32.mrb[0].mxu0
    %v2862 = vadd.f32 0.0, %v2861
    %v2863 = vpop.f32.mrb[0].mxu0
    %v2864 = vadd.f32 0.0, %v2863
    %v2865 = vpop.f32.mrb[0].mxu0
    %v2866 = vadd.f32 0.0, %v2865
    %2867 = vmatprep.mubr.bf16.mxu0 %v2797
    %2868 = vmatmul.mubr.bf16.gmra.mrb[0].mxu0 %v2774
    %v2869 = vpop.f32.mrb[0].mxu0
    %v2870 = vadd.f32 0.0, %v2869
    %v2871 = vpop.f32.mrb[0].mxu0
    %v2872 = vadd.f32 0.0, %v2871
    %v2873 = vpop.f32.mrb[0].mxu0
    %v2874 = vadd.f32 0.0, %v2873
    %v2875 = vpop.f32.mrb[0].mxu0
    %v2876 = vadd.f32 0.0, %v2875
    %2877 = vmatprep.mubr.bf16.mxu0 %v2800
    %2878 = vmatmul.mubr.bf16.gmra.mrb[0].mxu0 %v2776
    %v2879 = vpop.f32.mrb[0].mxu0
    %v2880 = vadd.f32 0.0, %v2879
    %v2881 = vpop.f32.mrb[0].mxu0
    %v2882 = vadd.f32 0.0, %v2881
    %v2883 = vpop.f32.mrb[0].mxu0
    %v2884 = vadd.f32 0.0, %v2883
    %v2885 = vpop.f32.mrb[0].mxu0
    %v2886 = vadd.f32 0.0, %v2885
    %2887 = vmatprep.mubr.bf16.mxu0 %v2803
    %2888 = vmatmul.mubr.bf16.gmra.mrb[0].mxu0 %v2778
    %v2889 = vpop.f32.mrb[0].mxu0
    %v2890 = vadd.f32 0.0, %v2889
    %v2891 = vpop.f32.mrb[0].mxu0
    %v2892 = vadd.f32 0.0, %v2891
    %v2893 = vpop.f32.mrb[0].mxu0
    %v2894 = vadd.f32 0.0, %v2893
    %v2895 = vpop.f32.mrb[0].mxu0
    %v2896 = vadd.f32 0.0, %v2895
    %2897 = vdwg.mxu0
    %v2898 = vld [vmem:[%s3] sm:$0xf]
    %v2899 = vld [vmem:[%s3 + $0x4] sm:$0xf]
    %v2900 = vld [vmem:[%s3 + $0x8] sm:$0xf]
    %v2901 = vld [vmem:[%s3 + $0xc] sm:$0xf]
    %v2902 = vld [vmem:[%s3 + $0x10] sm:$0xf]
    %v2903 = vld [vmem:[%s3 + $0x14] sm:$0xf]
    %v2904 = vld [vmem:[%s3 + $0x18] sm:$0xf]
    %v2905 = vld [vmem:[%s3 + $0x1c] sm:$0xf]
    %v2906 = vld [vmem:[%s3 + $0x20] sm:$0xf]
    %v2907 = vld [vmem:[%s3 + $0x24] sm:$0xf]
    %v2908 = vld [vmem:[%s3 + $0x28] sm:$0xf]
    %v2909 = vld [vmem:[%s3 + $0x2c] sm:$0xf]
    %v2910 = vld [vmem:[%s3 + $0x30] sm:$0xf]
    %v2911 = vld [vmem:[%s3 + $0x34] sm:$0xf]
    %v2912 = vld [vmem:[%s3 + $0x38] sm:$0xf]
    %v2913 = vld [vmem:[%s3 + $0x3c] sm:$0xf]
    %v2914 = vld [vmem:[%s3 + $0x40] sm:$0xf]
    %v2915 = vld [vmem:[%s3 + $0x44] sm:$0xf]
    %v2916 = vpack.c.bf16 %v2844, %v2840
    %v2917 = vpack.c.bf16 %v2846, %v2842
    %v2918 = vpack.c.bf16 %v2854, %v2850
    %v2919 = vpack.c.bf16 %v2856, %v2852
    %v2920 = vpack.c.bf16 %v2864, %v2860
    %v2921 = vpack.c.bf16 %v2866, %v2862
    %v2922 = vpack.c.bf16 %v2874, %v2870
    %v2923 = vpack.c.bf16 %v2876, %v2872
    %v2924 = vpack.c.bf16 %v2884, %v2880
    %v2925 = vpack.c.bf16 %v2886, %v2882
    %v2926 = vpack.c.bf16 %v2894, %v2890
    %v2927 = vpack.c.bf16 %v2896, %v2892
    %v2946 = vunpack.c.l.b16 %v2898
    %v2947 = vunpack.c.l.b16 %v2899
    %v2948 = vunpack.c.l.b16 %v2900
    %v2949 = vunpack.c.l.b16 %v2901
    %v2950 = vunpack.c.l.b16 %v2902
    %v2951 = vunpack.c.l.b16 %v2903
    %v2952 = vunpack.c.l.b16 %v2904
    %v2953 = vunpack.c.l.b16 %v2905
    %v2954 = vunpack.c.l.b16 %v2906
    %v2955 = vunpack.c.l.b16 %v2907
    %v2956 = vunpack.c.l.b16 %v2908
    %v2957 = vunpack.c.l.b16 %v2909
    %v2958 = vunpack.c.l.b16 %v2910
    %v2959 = vunpack.c.l.b16 %v2911
    %v2960 = vunpack.c.l.b16 %v2912
    %v2961 = vunpack.c.l.b16 %v2913
    %v2962 = vunpack.c.l.b16 %v2914
    %v2963 = vunpack.c.l.b16 %v2915
    %v2964 = vpack.c.b16 %v2947, %v2946
    %v2965 = vpack.c.b16 %v2949, %v2948
    %v2966 = vpack.c.b16 %v2951, %v2950
    %v2967 = vpack.c.b16 %v2953, %v2952
    %v2968 = vpack.c.b16 %v2955, %v2954
    %v2969 = vpack.c.b16 %v2957, %v2956
    %v2970 = vpack.c.b16 %v2959, %v2958
    %v2971 = vpack.c.b16 %v2961, %v2960
    %v2972 = vpack.c.b16 %v2963, %v2962
    %vm2982 = vcmask 130048
    %v2984 = vsel %vm2982, %v2917, 0
    %v2987 = vsel %vm2982, %v2919, 0
    %v2990 = vsel %vm2982, %v2921, 0
    %v2993 = vsel %vm2982, %v2923, 0
    %v2996 = vsel %vm2982, %v2925, 0
    %v2999 = vsel %vm2982, %v2927, 0
    %3001 = vmatprep.subr.bf16.mxu0 0
    %3002 = vmatpush1.bf16.msra.mxu0 %v2964
    %3003 = vmatprep.subr.bf16.mxu0 0
    %3004 = vmatpush1.bf16.msra.mxu0 %v2965
    %3005 = vmatprep.subr.bf16.mxu0 0
    %3006 = vmatpush1.bf16.msra.mxu0 %v2966
    %3007 = vmatprep.subr.bf16.mxu0 0
    %3008 = vmatpush1.bf16.msra.mxu0 %v2967
    %3009 = vmatprep.subr.bf16.mxu0 0
    %3010 = vmatpush1.bf16.msra.mxu0 %v2968
    %3011 = vmatprep.subr.bf16.mxu0 0
    %3012 = vmatpush1.bf16.msra.mxu0 %v2969
    %3013 = vmatprep.subr.bf16.mxu0 0
    %3014 = vmatpush1.bf16.msra.mxu0 %v2970
    %3015 = vmatprep.subr.bf16.mxu0 0
    %3016 = vmatpush1.bf16.msra.mxu0 %v2971
    %3017 = vmatprep.subr.bf16.mxu0 0
    %3018 = vmatpush1.bf16.msra.mxu0 %v2972
    %3019 = vmatprep.subr.bf16.mxu0 0
    %3020 = vmatpush1.bf16.msra.mxu0 0
    %3021 = vmatprep.subr.bf16.mxu0 0
    %3022 = vmatpush1.bf16.msra.mxu0 0
    %3023 = vmatprep.subr.bf16.mxu0 0
    %3024 = vmatpush1.bf16.msra.mxu0 0
    %3025 = vmatprep.subr.bf16.mxu0 0
    %3026 = vmatpush1.bf16.msra.mxu0 0
    %3027 = vmatprep.subr.bf16.mxu0 0
    %3028 = vmatpush1.bf16.msra.mxu0 0
    %3029 = vmatprep.subr.bf16.mxu0 0
    %3030 = vmatpush1.bf16.msra.mxu0 0
    %3031 = vmatprep.subr.bf16.mxu0 0
    %3032 = vmatpush1.bf16.msra.mxu0 0
    %3033 = vmatprep.mubr.bf16.mxu0 %v2984
    %3034 = vmatmul.mubr.bf16.gmra.mrb[0].mxu0 %v2916
    %v3035 = vpop.f32.mrb[0].mxu0
    %v3036 = vadd.f32 0.0, %v3035
    %v3037 = vpop.f32.mrb[0].mxu0
    %v3038 = vpop.f32.mrb[0].mxu0
    %v3039 = vadd.f32 0.0, %v3038
    %v3040 = vpop.f32.mrb[0].mxu0
    %3041 = vmatprep.mubr.bf16.mxu0 %v2987
    %3042 = vmatmul.mubr.bf16.gmra.mrb[0].mxu0 %v2918
    %v3043 = vpop.f32.mrb[0].mxu0
    %v3044 = vadd.f32 0.0, %v3043
    %v3045 = vpop.f32.mrb[0].mxu0
    %v3046 = vpop.f32.mrb[0].mxu0
    %v3047 = vadd.f32 0.0, %v3046
    %v3048 = vpop.f32.mrb[0].mxu0
    %3049 = vmatprep.mubr.bf16.mxu0 %v2990
    %3050 = vmatmul.mubr.bf16.gmra.mrb[0].mxu0 %v2920
    %v3051 = vpop.f32.mrb[0].mxu0
    %v3052 = vadd.f32 0.0, %v3051
    %v3053 = vpop.f32.mrb[0].mxu0
    %v3054 = vpop.f32.mrb[0].mxu0
    %v3055 = vadd.f32 0.0, %v3054
    %v3056 = vpop.f32.mrb[0].mxu0
    %3057 = vmatprep.mubr.bf16.mxu0 %v2993
    %3058 = vmatmul.mubr.bf16.gmra.mrb[0].mxu0 %v2922
    %v3059 = vpop.f32.mrb[0].mxu0
    %v3060 = vadd.f32 0.0, %v3059
    %v3061 = vpop.f32.mrb[0].mxu0
    %v3062 = vpop.f32.mrb[0].mxu0
    %v3063 = vadd.f32 0.0, %v3062
    %v3064 = vpop.f32.mrb[0].mxu0
    %3065 = vmatprep.mubr.bf16.mxu0 %v2996
    %3066 = vmatmul.mubr.bf16.gmra.mrb[0].mxu0 %v2924
    %v3067 = vpop.f32.mrb[0].mxu0
    %v3068 = vadd.f32 0.0, %v3067
    %v3069 = vpop.f32.mrb[0].mxu0
    %v3070 = vpop.f32.mrb[0].mxu0
    %v3071 = vadd.f32 0.0, %v3070
    %v3072 = vpop.f32.mrb[0].mxu0
    %3073 = vmatprep.mubr.bf16.mxu0 %v2999
    %3074 = vmatmul.mubr.bf16.gmra.mrb[0].mxu0 %v2926
    %v3075 = vpop.f32.mrb[0].mxu0
    %v3076 = vadd.f32 0.0, %v3075
    %v3077 = vpop.f32.mrb[0].mxu0
    %v3078 = vpop.f32.mrb[0].mxu0
    %v3079 = vadd.f32 0.0, %v3078
    %v3080 = vpop.f32.mrb[0].mxu0
    %3081 = vdwg.mxu0
    %s3082 = scalar_lea.vmem %s3, 72
    %v3083 = vld [vmem:[%s3082] sm:$0xf]
    %v3084 = vld [vmem:[%s3082 + $0x4] sm:$0xf]
    %v3085 = vld [vmem:[%s3082 + $0x8] sm:$0xf]
    %v3086 = vld [vmem:[%s3082 + $0xc] sm:$0xf]
    %v3087 = vld [vmem:[%s3082 + $0x10] sm:$0xf]
    %v3088 = vld [vmem:[%s3082 + $0x14] sm:$0xf]
    %v3089 = vld [vmem:[%s3082 + $0x18] sm:$0xf]
    %v3090 = vld [vmem:[%s3082 + $0x1c] sm:$0xf]
    %v3091 = vld [vmem:[%s3082 + $0x20] sm:$0xf]
    %v3092 = vld [vmem:[%s3082 + $0x24] sm:$0xf]
    %v3093 = vld [vmem:[%s3082 + $0x28] sm:$0xf]
    %v3094 = vld [vmem:[%s3082 + $0x2c] sm:$0xf]
    %v3095 = vld [vmem:[%s3082 + $0x30] sm:$0xf]
    %v3096 = vld [vmem:[%s3082 + $0x34] sm:$0xf]
    %v3097 = vld [vmem:[%s3082 + $0x38] sm:$0xf]
    %v3098 = vld [vmem:[%s3082 + $0x3c] sm:$0xf]
    %v3099 = vld [vmem:[%s3082 + $0x40] sm:$0xf]
    %v3100 = vld [vmem:[%s3082 + $0x44] sm:$0xf]
    %v3119 = vunpack.c.l.b16 %v3083
    %v3120 = vunpack.c.l.b16 %v3084
    %v3121 = vunpack.c.l.b16 %v3085
    %v3122 = vunpack.c.l.b16 %v3086
    %v3123 = vunpack.c.l.b16 %v3087
    %v3124 = vunpack.c.l.b16 %v3088
    %v3125 = vunpack.c.l.b16 %v3089
    %v3126 = vunpack.c.l.b16 %v3090
    %v3127 = vunpack.c.l.b16 %v3091
    %v3128 = vunpack.c.l.b16 %v3092
    %v3129 = vunpack.c.l.b16 %v3093
    %v3130 = vunpack.c.l.b16 %v3094
    %v3131 = vunpack.c.l.b16 %v3095
    %v3132 = vunpack.c.l.b16 %v3096
    %v3133 = vunpack.c.l.b16 %v3097
    %v3134 = vunpack.c.l.b16 %v3098
    %v3135 = vunpack.c.l.b16 %v3099
    %v3136 = vunpack.c.l.b16 %v3100
    %v3137 = vpack.c.b16 %v3120, %v3119
    %v3138 = vpack.c.b16 %v3122, %v3121
    %v3139 = vpack.c.b16 %v3124, %v3123
    %v3140 = vpack.c.b16 %v3126, %v3125
    %v3141 = vpack.c.b16 %v3128, %v3127
    %v3142 = vpack.c.b16 %v3130, %v3129
    %v3143 = vpack.c.b16 %v3132, %v3131
    %v3144 = vpack.c.b16 %v3134, %v3133
    %v3145 = vpack.c.b16 %v3136, %v3135
    %3155 = vmatprep.subr.bf16.mxu0 0
    %3156 = vmatpush1.bf16.msra.mxu0 %v3137
    %3157 = vmatprep.subr.bf16.mxu0 0
    %3158 = vmatpush1.bf16.msra.mxu0 %v3138
    %3159 = vmatprep.subr.bf16.mxu0 0
    %3160 = vmatpush1.bf16.msra.mxu0 %v3139
    %3161 = vmatprep.subr.bf16.mxu0 0
    %3162 = vmatpush1.bf16.msra.mxu0 %v3140
    %3163 = vmatprep.subr.bf16.mxu0 0
    %3164 = vmatpush1.bf16.msra.mxu0 %v3141
    %3165 = vmatprep.subr.bf16.mxu0 0
    %3166 = vmatpush1.bf16.msra.mxu0 %v3142
    %3167 = vmatprep.subr.bf16.mxu0 0
    %3168 = vmatpush1.bf16.msra.mxu0 %v3143
    %3169 = vmatprep.subr.bf16.mxu0 0
    %3170 = vmatpush1.bf16.msra.mxu0 %v3144
    %3171 = vmatprep.subr.bf16.mxu0 0
    %3172 = vmatpush1.bf16.msra.mxu0 %v3145
    %3173 = vmatprep.subr.bf16.mxu0 0
    %3174 = vmatpush1.bf16.msra.mxu0 0
    %3175 = vmatprep.subr.bf16.mxu0 0
    %3176 = vmatpush1.bf16.msra.mxu0 0
    %3177 = vmatprep.subr.bf16.mxu0 0
    %3178 = vmatpush1.bf16.msra.mxu0 0
    %3179 = vmatprep.subr.bf16.mxu0 0
    %3180 = vmatpush1.bf16.msra.mxu0 0
    %3181 = vmatprep.subr.bf16.mxu0 0
    %3182 = vmatpush1.bf16.msra.mxu0 0
    %3183 = vmatprep.subr.bf16.mxu0 0
    %3184 = vmatpush1.bf16.msra.mxu0 0
    %3185 = vmatprep.subr.bf16.mxu0 0
    %3186 = vmatpush1.bf16.msra.mxu0 0
    %3187 = vmatprep.mubr.bf16.mxu0 %v2984
    %3188 = vmatmul.mubr.bf16.gmra.mrb[0].mxu0 %v2916
    %v3189 = vpop.f32.mrb[0].mxu0
    %v3190 = vadd.f32 0.0, %v3189
    %v3191 = vpop.f32.mrb[0].mxu0
    %v3192 = vpop.f32.mrb[0].mxu0
    %v3193 = vadd.f32 0.0, %v3192
    %v3194 = vpop.f32.mrb[0].mxu0
    %3195 = vmatprep.mubr.bf16.mxu0 %v2987
    %3196 = vmatmul.mubr.bf16.gmra.mrb[0].mxu0 %v2918
    %v3197 = vpop.f32.mrb[0].mxu0
    %v3198 = vadd.f32 0.0, %v3197
    %v3199 = vpop.f32.mrb[0].mxu0
    %v3200 = vpop.f32.mrb[0].mxu0
    %v3201 = vadd.f32 0.0, %v3200
    %v3202 = vpop.f32.mrb[0].mxu0
    %3203 = vmatprep.mubr.bf16.mxu0 %v2990
    %3204 = vmatmul.mubr.bf16.gmra.mrb[0].mxu0 %v2920
    %v3205 = vpop.f32.mrb[0].mxu0
    %v3206 = vadd.f32 0.0, %v3205
    %v3207 = vpop.f32.mrb[0].mxu0
    %v3208 = vpop.f32.mrb[0].mxu0
    %v3209 = vadd.f32 0.0, %v3208
    %v3210 = vpop.f32.mrb[0].mxu0
    %3211 = vmatprep.mubr.bf16.mxu0 %v2993
    %3212 = vmatmul.mubr.bf16.gmra.mrb[0].mxu0 %v2922
    %v3213 = vpop.f32.mrb[0].mxu0
    %v3214 = vadd.f32 0.0, %v3213
    %v3215 = vpop.f32.mrb[0].mxu0
    %v3216 = vpop.f32.mrb[0].mxu0
    %v3217 = vadd.f32 0.0, %v3216
    %v3218 = vpop.f32.mrb[0].mxu0
    %3219 = vmatprep.mubr.bf16.mxu0 %v2996
    %3220 = vmatmul.mubr.bf16.gmra.mrb[0].mxu0 %v2924
    %v3221 = vpop.f32.mrb[0].mxu0
    %v3222 = vadd.f32 0.0, %v3221
    %v3223 = vpop.f32.mrb[0].mxu0
    %v3224 = vpop.f32.mrb[0].mxu0
    %v3225 = vadd.f32 0.0, %v3224
    %v3226 = vpop.f32.mrb[0].mxu0
    %3227 = vmatprep.mubr.bf16.mxu0 %v2999
    %3228 = vmatmul.mubr.bf16.gmra.mrb[0].mxu0 %v2926
    %v3229 = vpop.f32.mrb[0].mxu0
    %v3230 = vadd.f32 0.0, %v3229
    %v3231 = vpop.f32.mrb[0].mxu0
    %v3232 = vpop.f32.mrb[0].mxu0
    %v3233 = vadd.f32 0.0, %v3232
    %v3234 = vpop.f32.mrb[0].mxu0
    %3235 = vdwg.mxu0
    %v3236 = vmax.f32 %v3036, %v3190
    %v3237 = vmax.f32 %v3039, %v3193
    %v3238 = vmax.f32 %v3044, %v3198
    %v3239 = vmax.f32 %v3047, %v3201
    %v3240 = vmax.f32 %v3052, %v3206
    %v3241 = vmax.f32 %v3055, %v3209
    %v3242 = vmax.f32 %v3060, %v3214
    %v3243 = vmax.f32 %v3063, %v3217
    %v3244 = vmax.f32 %v3068, %v3222
    %v3245 = vmax.f32 %v3071, %v3225
    %v3246 = vmax.f32 %v3076, %v3230
    %v3247 = vmax.f32 %v3079, %v3233
    %v3248 = vpack.c.bf16 %v3237, %v3236
    %v3249 = vpack.c.bf16 %v3239, %v3238
    %v3250 = vpack.c.bf16 %v3241, %v3240
    %v3251 = vpack.c.bf16 %v3243, %v3242
    %v3252 = vpack.c.bf16 %v3245, %v3244
    %v3253 = vpack.c.bf16 %v3247, %v3246
    %v3260 = vunpack.c.l.b16 %v3248
    %v3261 = vunpack.c.h.b16 %v3248
    %v3262 = vunpack.c.l.b16 %v3249
    %v3263 = vunpack.c.h.b16 %v3249
    %v3264 = vunpack.c.l.b16 %v3250
    %v3265 = vunpack.c.h.b16 %v3250
    %v3266 = vunpack.c.l.b16 %v3251
    %v3267 = vunpack.c.h.b16 %v3251
    %v3268 = vunpack.c.l.b16 %v3252
    %v3269 = vunpack.c.h.b16 %v3252
    %v3270 = vunpack.c.l.b16 %v3253
    %v3271 = vunpack.c.h.b16 %v3253
    %v3272 = vpack.c.b16 %v3260, %v3260
    %v3273 = vpack.c.b16 %v3261, %v3261
    %v3274 = vpack.c.b16 %v3262, %v3262
    %v3275 = vpack.c.b16 %v3263, %v3263
    %v3276 = vpack.c.b16 %v3264, %v3264
    %v3277 = vpack.c.b16 %v3265, %v3265
    %v3278 = vpack.c.b16 %v3266, %v3266
    %v3279 = vpack.c.b16 %v3267, %v3267
    %v3280 = vpack.c.b16 %v3268, %v3268
    %v3281 = vpack.c.b16 %v3269, %v3269
    %v3282 = vpack.c.b16 %v3270, %v3270
    %v3283 = vpack.c.b16 %v3271, %v3271
    %vm3296 = vcmask 584704
    %3297 = vst.msk [vmem:[#allocation4] sm:$0xf] %vm3296, %v3272
    %3298 = vst.msk [vmem:[#allocation4 + $0x4] sm:$0xf] %vm3296, %v3273
    %3299 = vst.msk [vmem:[#allocation4 + $0x8] sm:$0xf] %vm3296, %v3274
    %3300 = vst.msk [vmem:[#allocation4 + $0xc] sm:$0xf] %vm3296, %v3275
    %3301 = vst.msk [vmem:[#allocation4 + $0x10] sm:$0xf] %vm3296, %v3276
    %3302 = vst.msk [vmem:[#allocation4 + $0x14] sm:$0xf] %vm3296, %v3277
    %3303 = vst.msk [vmem:[#allocation4 + $0x18] sm:$0xf] %vm3296, %v3278
    %3304 = vst.msk [vmem:[#allocation4 + $0x1c] sm:$0xf] %vm3296, %v3279
    %3305 = vst.msk [vmem:[#allocation4 + $0x20] sm:$0xf] %vm3296, %v3280
    %3306 = vst.msk [vmem:[#allocation4 + $0x24] sm:$0xf] %vm3296, %v3281
    %3307 = vst.msk [vmem:[#allocation4 + $0x28] sm:$0xf] %vm3296, %v3282
    %3308 = vst.msk [vmem:[#allocation4 + $0x2c] sm:$0xf] %vm3296, %v3283
    %3309 = vst.msk [vmem:[#allocation4 + $0x30] sm:$0xf] %vm3296, 0
    %v3310 = vld [vmem:[%s5] sm:$0xf]
    %v3311 = vld [vmem:[%s5 + $0x4] sm:$0xf]
    %v3312 = vld [vmem:[%s5 + $0x8] sm:$0xf]
    %v3313 = vld [vmem:[%s5 + $0xc] sm:$0xf]
    %v3314 = vld [vmem:[%s5 + $0x10] sm:$0xf]
    %v3315 = vld [vmem:[%s5 + $0x14] sm:$0xf]
    %v3316 = vld [vmem:[%s5 + $0x18] sm:$0xf]
    %v3317 = vld [vmem:[%s5 + $0x1c] sm:$0xf]
    %v3318 = vld [vmem:[%s5 + $0x20] sm:$0xf]
    %v3319 = vld [vmem:[#allocation4] sm:$0xf]
    %v3320 = vld [vmem:[#allocation4 + $0x4] sm:$0xf]
    %v3321 = vld [vmem:[#allocation4 + $0x8] sm:$0xf]
    %v3322 = vld [vmem:[#allocation4 + $0xc] sm:$0xf]
    %v3323 = vld [vmem:[#allocation4 + $0x10] sm:$0xf]
    %v3324 = vld [vmem:[#allocation4 + $0x14] sm:$0xf]
    %v3325 = vld [vmem:[#allocation4 + $0x18] sm:$0xf]
    %v3326 = vld [vmem:[#allocation4 + $0x1c] sm:$0xf]
    %v3327 = vld [vmem:[#allocation4 + $0x20] sm:$0xf]
    %v3328 = vld [vmem:[#allocation4 + $0x24] sm:$0xf]
    %v3329 = vld [vmem:[#allocation4 + $0x28] sm:$0xf]
    %v3330 = vld [vmem:[#allocation4 + $0x2c] sm:$0xf]
    %v3331 = vld [vmem:[#allocation4 + $0x30] sm:$0x1]
    %s3332 = scalar_lea.vmem %s5, 36
    %v3333 = vld [vmem:[%s3332] sm:$0xf]
    %v3334 = vld [vmem:[%s3332 + $0x4] sm:$0xf]
    %v3335 = vld [vmem:[%s3332 + $0x8] sm:$0xf]
    %v3336 = vld [vmem:[%s3332 + $0xc] sm:$0xf]
    %v3337 = vld [vmem:[%s3332 + $0x10] sm:$0xf]
    %v3338 = vld [vmem:[%s3332 + $0x14] sm:$0xf]
    %v3339 = vld [vmem:[%s3332 + $0x18] sm:$0xf]
    %v3340 = vld [vmem:[%s3332 + $0x1c] sm:$0xf]
    %v3341 = vld [vmem:[%s3332 + $0x20] sm:$0xf]
    %v3355 = vunpack.c.l.b16 %v3319
    %v3356 = vunpack.c.l.b16 %v3320
    %v3357 = vunpack.c.l.b16 %v3321
    %v3358 = vunpack.c.l.b16 %v3322
    %v3359 = vunpack.c.l.b16 %v3323
    %v3360 = vunpack.c.l.b16 %v3324
    %v3361 = vunpack.c.l.b16 %v3325
    %v3362 = vunpack.c.l.b16 %v3326
    %v3363 = vunpack.c.l.b16 %v3327
    %v3364 = vunpack.c.l.b16 %v3328
    %v3365 = vunpack.c.l.b16 %v3329
    %v3366 = vunpack.c.l.b16 %v3330
    %v3367 = vunpack.c.l.b16 %v3331
    %v3368 = vpack.c.b16 %v3356, %v3355
    %v3369 = vpack.c.b16 %v3358, %v3357
    %v3370 = vpack.c.b16 %v3360, %v3359
    %v3371 = vpack.c.b16 %v3362, %v3361
    %v3372 = vpack.c.b16 %v3364, %v3363
    %v3373 = vpack.c.b16 %v3366, %v3365
    %v3374 = vpack.c.b16 %v3367, %v3367
    %v3376 = vshrl.u32 %v3368, 16
    %v3378 = vshll.u32 %v3368, 16
    %v3380 = vrot.slane %v3378, 1
    %v3381 = vor.u32 %v3376, %v3380
    %v3383 = vshll.u32 %v3369, 16
    %v3385 = vrot.slane %v3383, 1
    %v3386 = vsel %vm253, %v3381, %v3385
    %v3387 = vshrl.u32 %v3369, 16
    %v3389 = vor.u32 %v3387, %v3385
    %v3391 = vshll.u32 %v3370, 16
    %v3393 = vrot.slane %v3391, 1
    %v3394 = vsel %vm253, %v3389, %v3393
    %v3395 = vshrl.u32 %v3370, 16
    %v3397 = vor.u32 %v3395, %v3393
    %v3399 = vshll.u32 %v3371, 16
    %v3401 = vrot.slane %v3399, 1
    %v3402 = vsel %vm253, %v3397, %v3401
    %v3403 = vshrl.u32 %v3371, 16
    %v3405 = vor.u32 %v3403, %v3401
    %v3407 = vshll.u32 %v3372, 16
    %v3409 = vrot.slane %v3407, 1
    %v3410 = vsel %vm253, %v3405, %v3409
    %v3411 = vshrl.u32 %v3372, 16
    %v3413 = vor.u32 %v3411, %v3409
    %v3415 = vshll.u32 %v3373, 16
    %v3417 = vrot.slane %v3415, 1
    %v3418 = vsel %vm253, %v3413, %v3417
    %v3419 = vshrl.u32 %v3373, 16
    %v3421 = vor.u32 %v3419, %v3417
    %v3423 = vshll.u32 %v3374, 16
    %v3425 = vrot.slane %v3423, 1
    %v3426 = vsel %vm253, %v3421, %v3425
    %v3436 = vunpack.c.l.b16 %v3333
    %v3437 = vunpack.c.l.b16 %v3334
    %v3438 = vunpack.c.l.b16 %v3335
    %v3439 = vunpack.c.l.b16 %v3336
    %v3440 = vunpack.c.l.b16 %v3337
    %v3441 = vunpack.c.l.b16 %v3338
    %v3442 = vunpack.c.l.b16 %v3339
    %v3443 = vunpack.c.l.b16 %v3340
    %v3444 = vunpack.c.l.b16 %v3341
    %v3445 = vpack.c.b16 %v3437, %v3436
    %v3446 = vpack.c.b16 %v3439, %v3438
    %v3447 = vpack.c.b16 %v3441, %v3440
    %v3448 = vpack.c.b16 %v3443, %v3442
    %v3449 = vpack.c.b16 %v3444, %v3444
    %vm3454 = vcmask 588800
    %v3456 = vsel %vm3454, %v3386, 0
    %v3459 = vsel %vm3454, %v3394, 0
    %v3462 = vsel %vm3454, %v3402, 0
    %v3465 = vsel %vm3454, %v3410, 0
    %v3468 = vsel %vm3454, %v3418, 0
    %v3471 = vsel %vm3454, %v3426, 0
    %v3474 = vsel %vm2254, %v3449, 0
    %3476 = vmatprep.subr.bf16.mxu0 0
    %3477 = vmatpush1.bf16.msra.mxu0 %v3445
    %3478 = vmatprep.subr.bf16.mxu0 0
    %3479 = vmatpush1.bf16.msra.mxu0 %v3446
    %3480 = vmatprep.subr.bf16.mxu0 0
    %3481 = vmatpush1.bf16.msra.mxu0 %v3447
    %3482 = vmatprep.subr.bf16.mxu0 0
    %3483 = vmatpush1.bf16.msra.mxu0 %v3448
    %3484 = vmatprep.subr.bf16.mxu0 0
    %3485 = vmatpush1.bf16.msra.mxu0 %v3474
    %3486 = vmatprep.subr.bf16.mxu0 0
    %3487 = vmatpush1.bf16.msra.mxu0 0
    %3488 = vmatprep.subr.bf16.mxu0 0
    %3489 = vmatpush1.bf16.msra.mxu0 0
    %3490 = vmatprep.subr.bf16.mxu0 0
    %3491 = vmatpush1.bf16.msra.mxu0 0
    %3492 = vmatprep.subr.bf16.mxu0 0
    %3493 = vmatpush1.bf16.msra.mxu0 0
    %3494 = vmatprep.subr.bf16.mxu0 0
    %3495 = vmatpush1.bf16.msra.mxu0 0
    %3496 = vmatprep.subr.bf16.mxu0 0
    %3497 = vmatpush1.bf16.msra.mxu0 0
    %3498 = vmatprep.subr.bf16.mxu0 0
    %3499 = vmatpush1.bf16.msra.mxu0 0
    %3500 = vmatprep.subr.bf16.mxu0 0
    %3501 = vmatpush1.bf16.msra.mxu0 0
    %3502 = vmatprep.subr.bf16.mxu0 0
    %3503 = vmatpush1.bf16.msra.mxu0 0
    %3504 = vmatprep.subr.bf16.mxu0 0
    %3505 = vmatpush1.bf16.msra.mxu0 0
    %3506 = vmatprep.subr.bf16.mxu0 0
    %3507 = vmatpush1.bf16.msra.mxu0 0
    %3508 = vmatprep.mubr.bf16.mxu0 0
    %3509 = vmatmul.mubr.bf16.gmra.mrb[0].mxu0 %v3456
    %v3510 = vpop.f32.mrb[0].mxu0
    %v3511 = vadd.f32 0.0, %v3510
    %v3512 = vpop.f32.mrb[0].mxu0
    %v3513 = vpop.f32.mrb[0].mxu0
    %v3514 = vadd.f32 0.0, %v3513
    %v3515 = vpop.f32.mrb[0].mxu0
    %3516 = vmatprep.mubr.bf16.mxu0 0
    %3517 = vmatmul.mubr.bf16.gmra.mrb[0].mxu0 %v3459
    %v3518 = vpop.f32.mrb[0].mxu0
    %v3519 = vadd.f32 0.0, %v3518
    %v3520 = vpop.f32.mrb[0].mxu0
    %v3521 = vpop.f32.mrb[0].mxu0
    %v3522 = vadd.f32 0.0, %v3521
    %v3523 = vpop.f32.mrb[0].mxu0
    %3524 = vmatprep.mubr.bf16.mxu0 0
    %3525 = vmatmul.mubr.bf16.gmra.mrb[0].mxu0 %v3462
    %v3526 = vpop.f32.mrb[0].mxu0
    %v3527 = vadd.f32 0.0, %v3526
    %v3528 = vpop.f32.mrb[0].mxu0
    %v3529 = vpop.f32.mrb[0].mxu0
    %v3530 = vadd.f32 0.0, %v3529
    %v3531 = vpop.f32.mrb[0].mxu0
    %3532 = vmatprep.mubr.bf16.mxu0 0
    %3533 = vmatmul.mubr.bf16.gmra.mrb[0].mxu0 %v3465
    %v3534 = vpop.f32.mrb[0].mxu0
    %v3535 = vadd.f32 0.0, %v3534
    %v3536 = vpop.f32.mrb[0].mxu0
    %v3537 = vpop.f32.mrb[0].mxu0
    %v3538 = vadd.f32 0.0, %v3537
    %v3539 = vpop.f32.mrb[0].mxu0
    %3540 = vmatprep.mubr.bf16.mxu0 0
    %3541 = vmatmul.mubr.bf16.gmra.mrb[0].mxu0 %v3468
    %v3542 = vpop.f32.mrb[0].mxu0
    %v3543 = vadd.f32 0.0, %v3542
    %v3544 = vpop.f32.mrb[0].mxu0
    %v3545 = vpop.f32.mrb[0].mxu0
    %v3546 = vadd.f32 0.0, %v3545
    %v3547 = vpop.f32.mrb[0].mxu0
    %3548 = vmatprep.mubr.bf16.mxu0 0
    %3549 = vmatmul.mubr.bf16.gmra.mrb[0].mxu0 %v3471
    %v3550 = vpop.f32.mrb[0].mxu0
    %v3551 = vadd.f32 0.0, %v3550
    %v3552 = vpop.f32.mrb[0].mxu0
    %v3553 = vpop.f32.mrb[0].mxu0
    %v3554 = vadd.f32 0.0, %v3553
    %v3555 = vpop.f32.mrb[0].mxu0
    %3556 = vdwg.mxu0
    %v3566 = vunpack.c.l.b16 %v3310
    %v3567 = vunpack.c.l.b16 %v3311
    %v3568 = vunpack.c.l.b16 %v3312
    %v3569 = vunpack.c.l.b16 %v3313
    %v3570 = vunpack.c.l.b16 %v3314
    %v3571 = vunpack.c.l.b16 %v3315
    %v3572 = vunpack.c.l.b16 %v3316
    %v3573 = vunpack.c.l.b16 %v3317
    %v3574 = vunpack.c.l.b16 %v3318
    %v3575 = vpack.c.b16 %v3567, %v3566
    %v3576 = vpack.c.b16 %v3569, %v3568
    %v3577 = vpack.c.b16 %v3571, %v3570
    %v3578 = vpack.c.b16 %v3573, %v3572
    %v3579 = vpack.c.b16 %v3574, %v3574
    %v3585 = vsel %vm3454, %v3248, 0
    %v3588 = vsel %vm3454, %v3249, 0
    %v3591 = vsel %vm3454, %v3250, 0
    %v3594 = vsel %vm3454, %v3251, 0
    %v3597 = vsel %vm3454, %v3252, 0
    %v3600 = vsel %vm3454, %v3253, 0
    %v3603 = vsel %vm2254, %v3579, 0
    %3605 = vmatprep.subr.bf16.mxu0 0
    %3606 = vmatpush1.bf16.msra.mxu0 %v3575
    %3607 = vmatprep.subr.bf16.mxu0 0
    %3608 = vmatpush1.bf16.msra.mxu0 %v3576
    %3609 = vmatprep.subr.bf16.mxu0 0
    %3610 = vmatpush1.bf16.msra.mxu0 %v3577
    %3611 = vmatprep.subr.bf16.mxu0 0
    %3612 = vmatpush1.bf16.msra.mxu0 %v3578
    %3613 = vmatprep.subr.bf16.mxu0 0
    %3614 = vmatpush1.bf16.msra.mxu0 %v3603
    %3615 = vmatprep.subr.bf16.mxu0 0
    %3616 = vmatpush1.bf16.msra.mxu0 0
    %3617 = vmatprep.subr.bf16.mxu0 0
    %3618 = vmatpush1.bf16.msra.mxu0 0
    %3619 = vmatprep.subr.bf16.mxu0 0
    %3620 = vmatpush1.bf16.msra.mxu0 0
    %3621 = vmatprep.subr.bf16.mxu0 0
    %3622 = vmatpush1.bf16.msra.mxu0 0
    %3623 = vmatprep.subr.bf16.mxu0 0
    %3624 = vmatpush1.bf16.msra.mxu0 0
    %3625 = vmatprep.subr.bf16.mxu0 0
    %3626 = vmatpush1.bf16.msra.mxu0 0
    %3627 = vmatprep.subr.bf16.mxu0 0
    %3628 = vmatpush1.bf16.msra.mxu0 0
    %3629 = vmatprep.subr.bf16.mxu0 0
    %3630 = vmatpush1.bf16.msra.mxu0 0
    %3631 = vmatprep.subr.bf16.mxu0 0
    %3632 = vmatpush1.bf16.msra.mxu0 0
    %3633 = vmatprep.subr.bf16.mxu0 0
    %3634 = vmatpush1.bf16.msra.mxu0 0
    %3635 = vmatprep.subr.bf16.mxu0 0
    %3636 = vmatpush1.bf16.msra.mxu0 0
    %3637 = vmatprep.mubr.bf16.mxu0 0
    %3638 = vmatmul.mubr.bf16.gmra.mrb[0].mxu0 %v3585
    %v3639 = vpop.f32.mrb[0].mxu0
    %v3640 = vadd.f32 %v3511, %v3639
    %v3641 = vpop.f32.mrb[0].mxu0
    %v3642 = vpop.f32.mrb[0].mxu0
    %v3643 = vadd.f32 %v3514, %v3642
    %v3644 = vpop.f32.mrb[0].mxu0
    %3645 = vmatprep.mubr.bf16.mxu0 0
    %3646 = vmatmul.mubr.bf16.gmra.mrb[0].mxu0 %v3588
    %v3647 = vpop.f32.mrb[0].mxu0
    %v3648 = vadd.f32 %v3519, %v3647
    %v3649 = vpop.f32.mrb[0].mxu0
    %v3650 = vpop.f32.mrb[0].mxu0
    %v3651 = vadd.f32 %v3522, %v3650
    %v3652 = vpop.f32.mrb[0].mxu0
    %3653 = vmatprep.mubr.bf16.mxu0 0
    %3654 = vmatmul.mubr.bf16.gmra.mrb[0].mxu0 %v3591
    %v3655 = vpop.f32.mrb[0].mxu0
    %v3656 = vadd.f32 %v3527, %v3655
    %v3657 = vpop.f32.mrb[0].mxu0
    %v3658 = vpop.f32.mrb[0].mxu0
    %v3659 = vadd.f32 %v3530, %v3658
    %v3660 = vpop.f32.mrb[0].mxu0
    %3661 = vmatprep.mubr.bf16.mxu0 0
    %3662 = vmatmul.mubr.bf16.gmra.mrb[0].mxu0 %v3594
    %v3663 = vpop.f32.mrb[0].mxu0
    %v3664 = vadd.f32 %v3535, %v3663
    %v3665 = vpop.f32.mrb[0].mxu0
    %v3666 = vpop.f32.mrb[0].mxu0
    %v3667 = vadd.f32 %v3538, %v3666
    %v3668 = vpop.f32.mrb[0].mxu0
    %3669 = vmatprep.mubr.bf16.mxu0 0
    %3670 = vmatmul.mubr.bf16.gmra.mrb[0].mxu0 %v3597
    %v3671 = vpop.f32.mrb[0].mxu0
    %v3672 = vadd.f32 %v3543, %v3671
    %v3673 = vpop.f32.mrb[0].mxu0
    %v3674 = vpop.f32.mrb[0].mxu0
    %v3675 = vadd.f32 %v3546, %v3674
    %v3676 = vpop.f32.mrb[0].mxu0
    %3677 = vmatprep.mubr.bf16.mxu0 0
    %3678 = vmatmul.mubr.bf16.gmra.mrb[0].mxu0 %v3600
    %v3679 = vpop.f32.mrb[0].mxu0
    %v3680 = vadd.f32 %v3551, %v3679
    %v3681 = vpop.f32.mrb[0].mxu0
    %v3682 = vpop.f32.mrb[0].mxu0
    %v3683 = vadd.f32 %v3554, %v3682
    %v3684 = vpop.f32.mrb[0].mxu0
    %3685 = vdwg.mxu0
    %v3686 = vld [vmem:[#allocation4] sm:$0xe]
    %s3687 = scalar_lea.vmem %s5, 72
    %v3688 = vld [vmem:[%s3687] sm:$0xf]
    %v3689 = vld [vmem:[%s3687 + $0x4] sm:$0xf]
    %v3690 = vld [vmem:[%s3687 + $0x8] sm:$0xf]
    %v3691 = vld [vmem:[%s3687 + $0xc] sm:$0xf]
    %v3692 = vld [vmem:[%s3687 + $0x10] sm:$0xf]
    %v3693 = vld [vmem:[%s3687 + $0x14] sm:$0xf]
    %v3694 = vld [vmem:[%s3687 + $0x18] sm:$0xf]
    %v3695 = vld [vmem:[%s3687 + $0x1c] sm:$0xf]
    %v3696 = vld [vmem:[%s3687 + $0x20] sm:$0xf]
    %v3698 = vunpack.c.l.b16 %v3686
    %v3699 = vpack.c.b16 %v3356, %v3698
    %v3700 = vrot.slane %v3699, 1
    %v3701 = vrot.slane %v3369, 1
    %v3702 = vsel %vm929, %v3700, %v3701
    %v3703 = vrot.slane %v3370, 1
    %v3704 = vsel %vm929, %v3701, %v3703
    %v3705 = vrot.slane %v3371, 1
    %v3706 = vsel %vm929, %v3703, %v3705
    %v3707 = vrot.slane %v3372, 1
    %v3708 = vsel %vm929, %v3705, %v3707
    %v3709 = vrot.slane %v3373, 1
    %v3710 = vsel %vm929, %v3707, %v3709
    %v3711 = vrot.slane %v3374, 1
    %v3712 = vsel %vm929, %v3709, %v3711
    %v3722 = vunpack.c.l.b16 %v3688
    %v3723 = vunpack.c.l.b16 %v3689
    %v3724 = vunpack.c.l.b16 %v3690
    %v3725 = vunpack.c.l.b16 %v3691
    %v3726 = vunpack.c.l.b16 %v3692
    %v3727 = vunpack.c.l.b16 %v3693
    %v3728 = vunpack.c.l.b16 %v3694
    %v3729 = vunpack.c.l.b16 %v3695
    %v3730 = vunpack.c.l.b16 %v3696
    %v3731 = vpack.c.b16 %v3723, %v3722
    %v3732 = vpack.c.b16 %v3725, %v3724
    %v3733 = vpack.c.b16 %v3727, %v3726
    %v3734 = vpack.c.b16 %v3729, %v3728
    %v3735 = vpack.c.b16 %v3730, %v3730
    %v3741 = vsel %vm3454, %v3702, 0
    %v3744 = vsel %vm3454, %v3704, 0
    %v3747 = vsel %vm3454, %v3706, 0
    %v3750 = vsel %vm3454, %v3708, 0
    %v3753 = vsel %vm3454, %v3710, 0
    %v3756 = vsel %vm3454, %v3712, 0
    %v3759 = vsel %vm2254, %v3735, 0
    %3761 = vmatprep.subr.bf16.mxu0 0
    %3762 = vmatpush1.bf16.msra.mxu0 %v3731
    %3763 = vmatprep.subr.bf16.mxu0 0
    %3764 = vmatpush1.bf16.msra.mxu0 %v3732
    %3765 = vmatprep.subr.bf16.mxu0 0
    %3766 = vmatpush1.bf16.msra.mxu0 %v3733
    %3767 = vmatprep.subr.bf16.mxu0 0
    %3768 = vmatpush1.bf16.msra.mxu0 %v3734
    %3769 = vmatprep.subr.bf16.mxu0 0
    %3770 = vmatpush1.bf16.msra.mxu0 %v3759
    %3771 = vmatprep.subr.bf16.mxu0 0
    %3772 = vmatpush1.bf16.msra.mxu0 0
    %3773 = vmatprep.subr.bf16.mxu0 0
    %3774 = vmatpush1.bf16.msra.mxu0 0
    %3775 = vmatprep.subr.bf16.mxu0 0
    %3776 = vmatpush1.bf16.msra.mxu0 0
    %3777 = vmatprep.subr.bf16.mxu0 0
    %3778 = vmatpush1.bf16.msra.mxu0 0
    %3779 = vmatprep.subr.bf16.mxu0 0
    %3780 = vmatpush1.bf16.msra.mxu0 0
    %3781 = vmatprep.subr.bf16.mxu0 0
    %3782 = vmatpush1.bf16.msra.mxu0 0
    %3783 = vmatprep.subr.bf16.mxu0 0
    %3784 = vmatpush1.bf16.msra.mxu0 0
    %3785 = vmatprep.subr.bf16.mxu0 0
    %3786 = vmatpush1.bf16.msra.mxu0 0
    %3787 = vmatprep.subr.bf16.mxu0 0
    %3788 = vmatpush1.bf16.msra.mxu0 0
    %3789 = vmatprep.subr.bf16.mxu0 0
    %3790 = vmatpush1.bf16.msra.mxu0 0
    %3791 = vmatprep.subr.bf16.mxu0 0
    %3792 = vmatpush1.bf16.msra.mxu0 0
    %3793 = vmatprep.mubr.bf16.mxu0 0
    %3794 = vmatmul.mubr.bf16.gmra.mrb[0].mxu0 %v3741
    %v3795 = vpop.f32.mrb[0].mxu0
    %v3796 = vadd.f32 0.0, %v3795
    %v3797 = vpop.f32.mrb[0].mxu0
    %v3798 = vpop.f32.mrb[0].mxu0
    %v3799 = vadd.f32 0.0, %v3798
    %v3800 = vpop.f32.mrb[0].mxu0
    %3801 = vmatprep.mubr.bf16.mxu0 0
    %3802 = vmatmul.mubr.bf16.gmra.mrb[0].mxu0 %v3744
    %v3803 = vpop.f32.mrb[0].mxu0
    %v3804 = vadd.f32 0.0, %v3803
    %v3805 = vpop.f32.mrb[0].mxu0
    %v3806 = vpop.f32.mrb[0].mxu0
    %v3807 = vadd.f32 0.0, %v3806
    %v3808 = vpop.f32.mrb[0].mxu0
    %3809 = vmatprep.mubr.bf16.mxu0 0
    %3810 = vmatmul.mubr.bf16.gmra.mrb[0].mxu0 %v3747
    %v3811 = vpop.f32.mrb[0].mxu0
    %v3812 = vadd.f32 0.0, %v3811
    %v3813 = vpop.f32.mrb[0].mxu0
    %v3814 = vpop.f32.mrb[0].mxu0
    %v3815 = vadd.f32 0.0, %v3814
    %v3816 = vpop.f32.mrb[0].mxu0
    %3817 = vmatprep.mubr.bf16.mxu0 0
    %3818 = vmatmul.mubr.bf16.gmra.mrb[0].mxu0 %v3750
    %v3819 = vpop.f32.mrb[0].mxu0
    %v3820 = vadd.f32 0.0, %v3819
    %v3821 = vpop.f32.mrb[0].mxu0
    %v3822 = vpop.f32.mrb[0].mxu0
    %v3823 = vadd.f32 0.0, %v3822
    %v3824 = vpop.f32.mrb[0].mxu0
    %3825 = vmatprep.mubr.bf16.mxu0 0
    %3826 = vmatmul.mubr.bf16.gmra.mrb[0].mxu0 %v3753
    %v3827 = vpop.f32.mrb[0].mxu0
    %v3828 = vadd.f32 0.0, %v3827
    %v3829 = vpop.f32.mrb[0].mxu0
    %v3830 = vpop.f32.mrb[0].mxu0
    %v3831 = vadd.f32 0.0, %v3830
    %v3832 = vpop.f32.mrb[0].mxu0
    %3833 = vmatprep.mubr.bf16.mxu0 0
    %3834 = vmatmul.mubr.bf16.gmra.mrb[0].mxu0 %v3756
    %v3835 = vpop.f32.mrb[0].mxu0
    %v3836 = vadd.f32 0.0, %v3835
    %v3837 = vpop.f32.mrb[0].mxu0
    %v3838 = vpop.f32.mrb[0].mxu0
    %v3839 = vadd.f32 0.0, %v3838
    %v3840 = vpop.f32.mrb[0].mxu0
    %3841 = vdwg.mxu0
    %v3842 = vadd.f32 %v3640, %v3796
    %v3843 = vadd.f32 %v3643, %v3799
    %v3844 = vadd.f32 %v3648, %v3804
    %v3845 = vadd.f32 %v3651, %v3807
    %v3846 = vadd.f32 %v3656, %v3812
    %v3847 = vadd.f32 %v3659, %v3815
    %v3848 = vadd.f32 %v3664, %v3820
    %v3849 = vadd.f32 %v3667, %v3823
    %v3850 = vadd.f32 %v3672, %v3828
    %v3851 = vadd.f32 %v3675, %v3831
    %v3852 = vadd.f32 %v3680, %v3836
    %v3853 = vadd.f32 %v3683, %v3839
    %v3854 = vld [vmem:[#allocation4 + $0x30] sm:$0x3]
    %s3855 = scalar_lea.vmem %s5, 108
    %v3856 = vld [vmem:[%s3855] sm:$0xf]
    %v3857 = vld [vmem:[%s3855 + $0x4] sm:$0xf]
    %v3858 = vld [vmem:[%s3855 + $0x8] sm:$0xf]
    %v3859 = vld [vmem:[%s3855 + $0xc] sm:$0xf]
    %v3860 = vld [vmem:[%s3855 + $0x10] sm:$0xf]
    %v3861 = vld [vmem:[%s3855 + $0x14] sm:$0xf]
    %v3862 = vld [vmem:[%s3855 + $0x18] sm:$0xf]
    %v3863 = vld [vmem:[%s3855 + $0x1c] sm:$0xf]
    %v3864 = vld [vmem:[%s3855 + $0x20] sm:$0xf]
    %v3866 = vunpack.c.l.b16 %v3854
    %v3867 = vpack.c.b16 %v3866, %v3866
    %v3869 = vshrl.u32 %v3699, 16
    %v3871 = vrot.slane %v3869, 1
    %v3872 = vshll.u32 %v3699, 16
    %v3874 = vrot.slane %v3872, 2
    %v3875 = vor.u32 %v3871, %v3874
    %v3876 = vrot.slane %v3387, 1
    %v3877 = vrot.slane %v3383, 2
    %v3878 = vor.u32 %v3876, %v3877
    %v3879 = vsel %vm1263, %v3875, %v3878
    %v3880 = vrot.slane %v3395, 1
    %v3881 = vrot.slane %v3391, 2
    %v3882 = vor.u32 %v3880, %v3881
    %v3883 = vsel %vm1263, %v3878, %v3882
    %v3884 = vrot.slane %v3403, 1
    %v3885 = vrot.slane %v3399, 2
    %v3886 = vor.u32 %v3884, %v3885
    %v3887 = vsel %vm1263, %v3882, %v3886
    %v3888 = vrot.slane %v3411, 1
    %v3889 = vrot.slane %v3407, 2
    %v3890 = vor.u32 %v3888, %v3889
    %v3891 = vsel %vm1263, %v3886, %v3890
    %v3892 = vrot.slane %v3419, 1
    %v3893 = vrot.slane %v3415, 2
    %v3894 = vor.u32 %v3892, %v3893
    %v3895 = vsel %vm1263, %v3890, %v3894
    %v3897 = vshrl.u32 %v3867, 16
    %v3899 = vrot.slane %v3897, 1
    %v3900 = vshll.u32 %v3867, 16
    %v3902 = vrot.slane %v3900, 2
    %v3903 = vor.u32 %v3899, %v3902
    %v3904 = vsel %vm1263, %v3894, %v3903
    %v3914 = vunpack.c.l.b16 %v3856
    %v3915 = vunpack.c.l.b16 %v3857
    %v3916 = vunpack.c.l.b16 %v3858
    %v3917 = vunpack.c.l.b16 %v3859
    %v3918 = vunpack.c.l.b16 %v3860
    %v3919 = vunpack.c.l.b16 %v3861
    %v3920 = vunpack.c.l.b16 %v3862
    %v3921 = vunpack.c.l.b16 %v3863
    %v3922 = vunpack.c.l.b16 %v3864
    %v3923 = vpack.c.b16 %v3915, %v3914
    %v3924 = vpack.c.b16 %v3917, %v3916
    %v3925 = vpack.c.b16 %v3919, %v3918
    %v3926 = vpack.c.b16 %v3921, %v3920
    %v3927 = vpack.c.b16 %v3922, %v3922
    %v3933 = vsel %vm3454, %v3879, 0
    %v3936 = vsel %vm3454, %v3883, 0
    %v3939 = vsel %vm3454, %v3887, 0
    %v3942 = vsel %vm3454, %v3891, 0
    %v3945 = vsel %vm3454, %v3895, 0
    %v3948 = vsel %vm3454, %v3904, 0
    %v3951 = vsel %vm2254, %v3927, 0
    %3953 = vmatprep.subr.bf16.mxu0 0
    %3954 = vmatpush1.bf16.msra.mxu0 %v3923
    %3955 = vmatprep.subr.bf16.mxu0 0
    %3956 = vmatpush1.bf16.msra.mxu0 %v3924
    %3957 = vmatprep.subr.bf16.mxu0 0
    %3958 = vmatpush1.bf16.msra.mxu0 %v3925
    %3959 = vmatprep.subr.bf16.mxu0 0
    %3960 = vmatpush1.bf16.msra.mxu0 %v3926
    %3961 = vmatprep.subr.bf16.mxu0 0
    %3962 = vmatpush1.bf16.msra.mxu0 %v3951
    %3963 = vmatprep.subr.bf16.mxu0 0
    %3964 = vmatpush1.bf16.msra.mxu0 0
    %3965 = vmatprep.subr.bf16.mxu0 0
    %3966 = vmatpush1.bf16.msra.mxu0 0
    %3967 = vmatprep.subr.bf16.mxu0 0
    %3968 = vmatpush1.bf16.msra.mxu0 0
    %3969 = vmatprep.subr.bf16.mxu0 0
    %3970 = vmatpush1.bf16.msra.mxu0 0
    %3971 = vmatprep.subr.bf16.mxu0 0
    %3972 = vmatpush1.bf16.msra.mxu0 0
    %3973 = vmatprep.subr.bf16.mxu0 0
    %3974 = vmatpush1.bf16.msra.mxu0 0
    %3975 = vmatprep.subr.bf16.mxu0 0
    %3976 = vmatpush1.bf16.msra.mxu0 0
    %3977 = vmatprep.subr.bf16.mxu0 0
    %3978 = vmatpush1.bf16.msra.mxu0 0
    %3979 = vmatprep.subr.bf16.mxu0 0
    %3980 = vmatpush1.bf16.msra.mxu0 0
    %3981 = vmatprep.subr.bf16.mxu0 0
    %3982 = vmatpush1.bf16.msra.mxu0 0
    %3983 = vmatprep.subr.bf16.mxu0 0
    %3984 = vmatpush1.bf16.msra.mxu0 0
    %3985 = vmatprep.mubr.bf16.mxu0 0
    %3986 = vmatmul.mubr.bf16.gmra.mrb[0].mxu0 %v3933
    %v3987 = vpop.f32.mrb[0].mxu0
    %v3988 = vadd.f32 0.0, %v3987
    %v3989 = vpop.f32.mrb[0].mxu0
    %v3990 = vpop.f32.mrb[0].mxu0
    %v3991 = vadd.f32 0.0, %v3990
    %v3992 = vpop.f32.mrb[0].mxu0
    %3993 = vmatprep.mubr.bf16.mxu0 0
    %3994 = vmatmul.mubr.bf16.gmra.mrb[0].mxu0 %v3936
    %v3995 = vpop.f32.mrb[0].mxu0
    %v3996 = vadd.f32 0.0, %v3995
    %v3997 = vpop.f32.mrb[0].mxu0
    %v3998 = vpop.f32.mrb[0].mxu0
    %v3999 = vadd.f32 0.0, %v3998
    %v4000 = vpop.f32.mrb[0].mxu0
    %4001 = vmatprep.mubr.bf16.mxu0 0
    %4002 = vmatmul.mubr.bf16.gmra.mrb[0].mxu0 %v3939
    %v4003 = vpop.f32.mrb[0].mxu0
    %v4004 = vadd.f32 0.0, %v4003
    %v4005 = vpop.f32.mrb[0].mxu0
    %v4006 = vpop.f32.mrb[0].mxu0
    %v4007 = vadd.f32 0.0, %v4006
    %v4008 = vpop.f32.mrb[0].mxu0
    %4009 = vmatprep.mubr.bf16.mxu0 0
    %4010 = vmatmul.mubr.bf16.gmra.mrb[0].mxu0 %v3942
    %v4011 = vpop.f32.mrb[0].mxu0
    %v4012 = vadd.f32 0.0, %v4011
    %v4013 = vpop.f32.mrb[0].mxu0
    %v4014 = vpop.f32.mrb[0].mxu0
    %v4015 = vadd.f32 0.0, %v4014
    %v4016 = vpop.f32.mrb[0].mxu0
    %4017 = vmatprep.mubr.bf16.mxu0 0
    %4018 = vmatmul.mubr.bf16.gmra.mrb[0].mxu0 %v3945
    %v4019 = vpop.f32.mrb[0].mxu0
    %v4020 = vadd.f32 0.0, %v4019
    %v4021 = vpop.f32.mrb[0].mxu0
    %v4022 = vpop.f32.mrb[0].mxu0
    %v4023 = vadd.f32 0.0, %v4022
    %v4024 = vpop.f32.mrb[0].mxu0
    %4025 = vmatprep.mubr.bf16.mxu0 0
    %4026 = vmatmul.mubr.bf16.gmra.mrb[0].mxu0 %v3948
    %v4027 = vpop.f32.mrb[0].mxu0
    %v4028 = vadd.f32 0.0, %v4027
    %v4029 = vpop.f32.mrb[0].mxu0
    %v4030 = vpop.f32.mrb[0].mxu0
    %v4031 = vadd.f32 0.0, %v4030
    %v4032 = vpop.f32.mrb[0].mxu0
    %4033 = vdwg.mxu0
    %v4034 = vadd.f32 %v3842, %v3988
    %v4035 = vadd.f32 %v3843, %v3991
    %v4036 = vadd.f32 %v3844, %v3996
    %v4037 = vadd.f32 %v3845, %v3999
    %v4038 = vadd.f32 %v3846, %v4004
    %v4039 = vadd.f32 %v3847, %v4007
    %v4040 = vadd.f32 %v3848, %v4012
    %v4041 = vadd.f32 %v3849, %v4015
    %v4042 = vadd.f32 %v3850, %v4020
    %v4043 = vadd.f32 %v3851, %v4023
    %v4044 = vadd.f32 %v3852, %v4028
    %v4045 = vadd.f32 %v3853, %v4031
    %v4046 = vld [vmem:[#allocation4] sm:$0xc]
    %s4047 = scalar_lea.vmem %s5, 144
    %v4048 = vld [vmem:[%s4047] sm:$0xf]
    %v4049 = vld [vmem:[%s4047 + $0x4] sm:$0xf]
    %v4050 = vld [vmem:[%s4047 + $0x8] sm:$0xf]
    %v4051 = vld [vmem:[%s4047 + $0xc] sm:$0xf]
    %v4052 = vld [vmem:[%s4047 + $0x10] sm:$0xf]
    %v4053 = vld [vmem:[%s4047 + $0x14] sm:$0xf]
    %v4054 = vld [vmem:[%s4047 + $0x18] sm:$0xf]
    %v4055 = vld [vmem:[%s4047 + $0x1c] sm:$0xf]
    %v4056 = vld [vmem:[%s4047 + $0x20] sm:$0xf]
    %v4058 = vunpack.c.l.b16 %v4046
    %v4059 = vpack.c.b16 %v3356, %v4058
    %v4060 = vrot.slane %v4059, 2
    %v4061 = vrot.slane %v3369, 2
    %v4062 = vsel %vm1637, %v4060, %v4061
    %v4063 = vrot.slane %v3370, 2
    %v4064 = vsel %vm1637, %v4061, %v4063
    %v4065 = vrot.slane %v3371, 2
    %v4066 = vsel %vm1637, %v4063, %v4065
    %v4067 = vrot.slane %v3372, 2
    %v4068 = vsel %vm1637, %v4065, %v4067
    %v4069 = vrot.slane %v3373, 2
    %v4070 = vsel %vm1637, %v4067, %v4069
    %v4071 = vrot.slane %v3867, 2
    %v4072 = vsel %vm1637, %v4069, %v4071
    %v4082 = vunpack.c.l.b16 %v4048
    %v4083 = vunpack.c.l.b16 %v4049
    %v4084 = vunpack.c.l.b16 %v4050
    %v4085 = vunpack.c.l.b16 %v4051
    %v4086 = vunpack.c.l.b16 %v4052
    %v4087 = vunpack.c.l.b16 %v4053
    %v4088 = vunpack.c.l.b16 %v4054
    %v4089 = vunpack.c.l.b16 %v4055
    %v4090 = vunpack.c.l.b16 %v4056
    %v4091 = vpack.c.b16 %v4083, %v4082
    %v4092 = vpack.c.b16 %v4085, %v4084
    %v4093 = vpack.c.b16 %v4087, %v4086
    %v4094 = vpack.c.b16 %v4089, %v4088
    %v4095 = vpack.c.b16 %v4090, %v4090
    %v4101 = vsel %vm3454, %v4062, 0
    %v4104 = vsel %vm3454, %v4064, 0
    %v4107 = vsel %vm3454, %v4066, 0
    %v4110 = vsel %vm3454, %v4068, 0
    %v4113 = vsel %vm3454, %v4070, 0
    %v4116 = vsel %vm3454, %v4072, 0
    %v4119 = vsel %vm2254, %v4095, 0
    %4121 = vmatprep.subr.bf16.mxu0 0
    %4122 = vmatpush1.bf16.msra.mxu0 %v4091
    %4123 = vmatprep.subr.bf16.mxu0 0
    %4124 = vmatpush1.bf16.msra.mxu0 %v4092
    %4125 = vmatprep.subr.bf16.mxu0 0
    %4126 = vmatpush1.bf16.msra.mxu0 %v4093
    %4127 = vmatprep.subr.bf16.mxu0 0
    %4128 = vmatpush1.bf16.msra.mxu0 %v4094
    %4129 = vmatprep.subr.bf16.mxu0 0
    %4130 = vmatpush1.bf16.msra.mxu0 %v4119
    %4131 = vmatprep.subr.bf16.mxu0 0
    %4132 = vmatpush1.bf16.msra.mxu0 0
    %4133 = vmatprep.subr.bf16.mxu0 0
    %4134 = vmatpush1.bf16.msra.mxu0 0
    %4135 = vmatprep.subr.bf16.mxu0 0
    %4136 = vmatpush1.bf16.msra.mxu0 0
    %4137 = vmatprep.subr.bf16.mxu0 0
    %4138 = vmatpush1.bf16.msra.mxu0 0
    %4139 = vmatprep.subr.bf16.mxu0 0
    %4140 = vmatpush1.bf16.msra.mxu0 0
    %4141 = vmatprep.subr.bf16.mxu0 0
    %4142 = vmatpush1.bf16.msra.mxu0 0
    %4143 = vmatprep.subr.bf16.mxu0 0
    %4144 = vmatpush1.bf16.msra.mxu0 0
    %4145 = vmatprep.subr.bf16.mxu0 0
    %4146 = vmatpush1.bf16.msra.mxu0 0
    %4147 = vmatprep.subr.bf16.mxu0 0
    %4148 = vmatpush1.bf16.msra.mxu0 0
    %4149 = vmatprep.subr.bf16.mxu0 0
    %4150 = vmatpush1.bf16.msra.mxu0 0
    %4151 = vmatprep.subr.bf16.mxu0 0
    %4152 = vmatpush1.bf16.msra.mxu0 0
    %4153 = vmatprep.mubr.bf16.mxu0 0
    %4154 = vmatmul.mubr.bf16.gmra.mrb[0].mxu0 %v4101
    %v4155 = vpop.f32.mrb[0].mxu0
    %v4156 = vadd.f32 0.0, %v4155
    %v4157 = vpop.f32.mrb[0].mxu0
    %v4158 = vpop.f32.mrb[0].mxu0
    %v4159 = vadd.f32 0.0, %v4158
    %v4160 = vpop.f32.mrb[0].mxu0
    %4161 = vmatprep.mubr.bf16.mxu0 0
    %4162 = vmatmul.mubr.bf16.gmra.mrb[0].mxu0 %v4104
    %v4163 = vpop.f32.mrb[0].mxu0
    %v4164 = vadd.f32 0.0, %v4163
    %v4165 = vpop.f32.mrb[0].mxu0
    %v4166 = vpop.f32.mrb[0].mxu0
    %v4167 = vadd.f32 0.0, %v4166
    %v4168 = vpop.f32.mrb[0].mxu0
    %4169 = vmatprep.mubr.bf16.mxu0 0
    %4170 = vmatmul.mubr.bf16.gmra.mrb[0].mxu0 %v4107
    %v4171 = vpop.f32.mrb[0].mxu0
    %v4172 = vadd.f32 0.0, %v4171
    %v4173 = vpop.f32.mrb[0].mxu0
    %v4174 = vpop.f32.mrb[0].mxu0
    %v4175 = vadd.f32 0.0, %v4174
    %v4176 = vpop.f32.mrb[0].mxu0
    %4177 = vmatprep.mubr.bf16.mxu0 0
    %4178 = vmatmul.mubr.bf16.gmra.mrb[0].mxu0 %v4110
    %v4179 = vpop.f32.mrb[0].mxu0
    %v4180 = vadd.f32 0.0, %v4179
    %v4181 = vpop.f32.mrb[0].mxu0
    %v4182 = vpop.f32.mrb[0].mxu0
    %v4183 = vadd.f32 0.0, %v4182
    %v4184 = vpop.f32.mrb[0].mxu0
    %4185 = vmatprep.mubr.bf16.mxu0 0
    %4186 = vmatmul.mubr.bf16.gmra.mrb[0].mxu0 %v4113
    %v4187 = vpop.f32.mrb[0].mxu0
    %v4188 = vadd.f32 0.0, %v4187
    %v4189 = vpop.f32.mrb[0].mxu0
    %v4190 = vpop.f32.mrb[0].mxu0
    %v4191 = vadd.f32 0.0, %v4190
    %v4192 = vpop.f32.mrb[0].mxu0
    %4193 = vmatprep.mubr.bf16.mxu0 0
    %4194 = vmatmul.mubr.bf16.gmra.mrb[0].mxu0 %v4116
    %v4195 = vpop.f32.mrb[0].mxu0
    %v4196 = vadd.f32 0.0, %v4195
    %v4197 = vpop.f32.mrb[0].mxu0
    %v4198 = vpop.f32.mrb[0].mxu0
    %v4199 = vadd.f32 0.0, %v4198
    %v4200 = vpop.f32.mrb[0].mxu0
    %4201 = vdwg.mxu0
    %v4202 = vadd.f32 %v4034, %v4156
    %v4203 = vadd.f32 %v4035, %v4159
    %v4204 = vadd.f32 %v4036, %v4164
    %v4205 = vadd.f32 %v4037, %v4167
    %v4206 = vadd.f32 %v4038, %v4172
    %v4207 = vadd.f32 %v4039, %v4175
    %v4208 = vadd.f32 %v4040, %v4180
    %v4209 = vadd.f32 %v4041, %v4183
    %v4210 = vadd.f32 %v4042, %v4188
    %v4211 = vadd.f32 %v4043, %v4191
    %v4212 = vadd.f32 %v4044, %v4196
    %v4213 = vadd.f32 %v4045, %v4199
    %v4214 = vld [vmem:[%s8] sm:$0x1]
    %v4216 = vlaneseq
    %v4217 = vshrl.u32 %v4216, 7
    %v4218 = vsub.s32 0, %v4217
    %v4219 = vrot.slane %v4214, %v4218
    %v4221 = vadd.f32 %v4202, %v4219
    %v4222 = vadd.f32 %v4203, %v4219
    %v4223 = vadd.f32 %v4204, %v4219
    %v4224 = vadd.f32 %v4205, %v4219
    %v4225 = vadd.f32 %v4206, %v4219
    %v4226 = vadd.f32 %v4207, %v4219
    %v4227 = vadd.f32 %v4208, %v4219
    %v4228 = vadd.f32 %v4209, %v4219
    %v4229 = vadd.f32 %v4210, %v4219
    %v4230 = vadd.f32 %v4211, %v4219
    %v4231 = vadd.f32 %v4212, %v4219
    %v4232 = vadd.f32 %v4213, %v4219
    %v4233 = vmax.f32 %v4221, 0.0
    %v4234 = vmax.f32 %v4222, 0.0
    %v4235 = vmax.f32 %v4223, 0.0
    %v4236 = vmax.f32 %v4224, 0.0
    %v4237 = vmax.f32 %v4225, 0.0
    %v4238 = vmax.f32 %v4226, 0.0
    %v4239 = vmax.f32 %v4227, 0.0
    %v4240 = vmax.f32 %v4228, 0.0
    %v4241 = vmax.f32 %v4229, 0.0
    %v4242 = vmax.f32 %v4230, 0.0
    %v4243 = vmax.f32 %v4231, 0.0
    %v4244 = vmax.f32 %v4232, 0.0
    %v4245 = vpack.c.bf16 %v4234, %v4233
    %v4246 = vpack.c.bf16 %v4236, %v4235
    %v4247 = vpack.c.bf16 %v4238, %v4237
    %v4248 = vpack.c.bf16 %v4240, %v4239
    %v4249 = vpack.c.bf16 %v4242, %v4241
    %v4250 = vpack.c.bf16 %v4244, %v4243
    %v4257 = vunpack.c.l.b16 %v4245
    %v4258 = vunpack.c.h.b16 %v4245
    %v4259 = vunpack.c.l.b16 %v4246
    %v4260 = vunpack.c.h.b16 %v4246
    %v4261 = vunpack.c.l.b16 %v4247
    %v4262 = vunpack.c.h.b16 %v4247
    %v4263 = vunpack.c.l.b16 %v4248
    %v4264 = vunpack.c.h.b16 %v4248
    %v4265 = vunpack.c.l.b16 %v4249
    %v4266 = vunpack.c.h.b16 %v4249
    %v4267 = vunpack.c.l.b16 %v4250
    %v4268 = vunpack.c.h.b16 %v4250
    %v4269 = vpack.c.b16 %v4257, %v4257
    %v4270 = vpack.c.b16 %v4258, %v4258
    %v4271 = vpack.c.b16 %v4259, %v4259
    %v4272 = vpack.c.b16 %v4260, %v4260
    %v4273 = vpack.c.b16 %v4261, %v4261
    %v4274 = vpack.c.b16 %v4262, %v4262
    %v4275 = vpack.c.b16 %v4263, %v4263
    %v4276 = vpack.c.b16 %v4264, %v4264
    %v4277 = vpack.c.b16 %v4265, %v4265
    %v4278 = vpack.c.b16 %v4266, %v4266
    %v4279 = vpack.c.b16 %v4267, %v4267
    %v4280 = vpack.c.b16 %v4268, %v4268
    %4293 = vst [vmem:[#allocation5] sm:$0xf] %v4269
    %4294 = vst [vmem:[#allocation5 + $0x4] sm:$0xf] %v4270
    %4295 = vst [vmem:[#allocation5 + $0x8] sm:$0xf] %v4271
    %4296 = vst [vmem:[#allocation5 + $0xc] sm:$0xf] %v4272
    %4297 = vst [vmem:[#allocation5 + $0x10] sm:$0xf] %v4273
    %4298 = vst [vmem:[#allocation5 + $0x14] sm:$0xf] %v4274
    %4299 = vst [vmem:[#allocation5 + $0x18] sm:$0xf] %v4275
    %4300 = vst [vmem:[#allocation5 + $0x1c] sm:$0xf] %v4276
    %4301 = vst [vmem:[#allocation5 + $0x20] sm:$0xf] %v4277
    %4302 = vst [vmem:[#allocation5 + $0x24] sm:$0xf] %v4278
    %4303 = vst [vmem:[#allocation5 + $0x28] sm:$0xf] %v4279
    %4304 = vst [vmem:[#allocation5 + $0x2c] sm:$0xf] %v4280
    %4305 = vst [vmem:[#allocation5 + $0x30] sm:$0xf] 0
    %v4306 = vld [vmem:[#allocation5] sm:$0xf]
    %v4307 = vld [vmem:[#allocation5 + $0x4] sm:$0xf]
    %v4308 = vld [vmem:[#allocation5 + $0x8] sm:$0xf]
    %v4309 = vld [vmem:[#allocation5 + $0xc] sm:$0xf]
    %v4310 = vld [vmem:[#allocation5 + $0x10] sm:$0xf]
    %v4311 = vld [vmem:[#allocation5 + $0x14] sm:$0xf]
    %v4312 = vld [vmem:[#allocation5 + $0x18] sm:$0xf]
    %v4313 = vld [vmem:[#allocation5 + $0x1c] sm:$0xf]
    %v4314 = vld [vmem:[#allocation5 + $0x20] sm:$0xf]
    %v4315 = vld [vmem:[#allocation5 + $0x24] sm:$0xf]
    %v4316 = vld [vmem:[#allocation5 + $0x28] sm:$0xf]
    %v4317 = vld [vmem:[#allocation5 + $0x2c] sm:$0xf]
    %v4318 = vld [vmem:[#allocation5 + $0x30] sm:$0x1]
    %v4332 = vunpack.c.l.b16 %v4306
    %v4333 = vunpack.c.l.b16 %v4307
    %v4334 = vunpack.c.l.b16 %v4308
    %v4335 = vunpack.c.l.b16 %v4309
    %v4336 = vunpack.c.l.b16 %v4310
    %v4337 = vunpack.c.l.b16 %v4311
    %v4338 = vunpack.c.l.b16 %v4312
    %v4339 = vunpack.c.l.b16 %v4313
    %v4340 = vunpack.c.l.b16 %v4314
    %v4341 = vunpack.c.l.b16 %v4315
    %v4342 = vunpack.c.l.b16 %v4316
    %v4343 = vunpack.c.l.b16 %v4317
    %v4344 = vunpack.c.l.b16 %v4318
    %v4345 = vpack.c.b16 %v4333, %v4332
    %v4346 = vpack.c.b16 %v4335, %v4334
    %v4347 = vpack.c.b16 %v4337, %v4336
    %v4348 = vpack.c.b16 %v4339, %v4338
    %v4349 = vpack.c.b16 %v4341, %v4340
    %v4350 = vpack.c.b16 %v4343, %v4342
    %v4351 = vpack.c.b16 %v4344, %v4344
    %v4353 = vshrl.u32 %v4345, 16
    %v4355 = vshll.u32 %v4345, 16
    %v4357 = vrot.slane %v4355, 1
    %v4358 = vor.u32 %v4353, %v4357
    %v4360 = vshll.u32 %v4346, 16
    %v4362 = vrot.slane %v4360, 1
    %v4363 = vsel %vm253, %v4358, %v4362
    %v4364 = vshrl.u32 %v4346, 16
    %v4366 = vor.u32 %v4364, %v4362
    %v4368 = vshll.u32 %v4347, 16
    %v4370 = vrot.slane %v4368, 1
    %v4371 = vsel %vm253, %v4366, %v4370
    %v4372 = vshrl.u32 %v4347, 16
    %v4374 = vor.u32 %v4372, %v4370
    %v4376 = vshll.u32 %v4348, 16
    %v4378 = vrot.slane %v4376, 1
    %v4379 = vsel %vm253, %v4374, %v4378
    %v4380 = vshrl.u32 %v4348, 16
    %v4382 = vor.u32 %v4380, %v4378
    %v4384 = vshll.u32 %v4349, 16
    %v4386 = vrot.slane %v4384, 1
    %v4387 = vsel %vm253, %v4382, %v4386
    %v4388 = vshrl.u32 %v4349, 16
    %v4390 = vor.u32 %v4388, %v4386
    %v4392 = vshll.u32 %v4350, 16
    %v4394 = vrot.slane %v4392, 1
    %v4395 = vsel %vm253, %v4390, %v4394
    %v4396 = vshrl.u32 %v4350, 16
    %v4398 = vor.u32 %v4396, %v4394
    %v4400 = vshll.u32 %v4351, 16
    %v4402 = vrot.slane %v4400, 1
    %v4403 = vsel %vm253, %v4398, %v4402
    %v4410 = vmax.bf16 %v4245, %v4363
    %v4411 = vmax.bf16 %v4246, %v4371
    %v4412 = vmax.bf16 %v4247, %v4379
    %v4413 = vmax.bf16 %v4248, %v4387
    %v4414 = vmax.bf16 %v4249, %v4395
    %v4415 = vmax.bf16 %v4250, %v4403
    %v4416 = vld [vmem:[#allocation8] sm:$0xf]
    %v4417 = vld [vmem:[#allocation8 + $0x4] sm:$0xf]
    %v4418 = vld [vmem:[#allocation8 + $0x8] sm:$0xf]
    %v4419 = vld [vmem:[#allocation8 + $0xc] sm:$0xf]
    %v4424 = vunpack.c.l.b16 %v4416
    %v4425 = vunpack.c.l.b16 %v4417
    %v4426 = vunpack.c.l.b16 %v4418
    %v4427 = vunpack.c.l.b16 %v4419
    %v4428 = vpack.c.b16 %v4425, %v4424
    %v4429 = vpack.c.b16 %v4427, %v4426
    %v4431 = vsel %vm2786, %v4428, 0
    %v4434 = vsel %vm2786, %v4429, 0
    %4436 = vmatprep.subr.bf16.mxu0 0
    %4437 = vmatpush1.bf16.msra.mxu0 %v4410
    %4438 = vmatprep.subr.bf16.mxu0 0
    %4439 = vmatpush1.bf16.msra.mxu0 %v4411
    %4440 = vmatprep.subr.bf16.mxu0 0
    %4441 = vmatpush1.bf16.msra.mxu0 %v4412
    %4442 = vmatprep.subr.bf16.mxu0 0
    %4443 = vmatpush1.bf16.msra.mxu0 %v4413
    %4444 = vmatprep.subr.bf16.mxu0 0
    %4445 = vmatpush1.bf16.msra.mxu0 %v4414
    %4446 = vmatprep.subr.bf16.mxu0 0
    %4447 = vmatpush1.bf16.msra.mxu0 %v4415
    %4448 = vmatprep.subr.bf16.mxu0 0
    %4449 = vmatpush1.bf16.msra.mxu0 0
    %4450 = vmatprep.subr.bf16.mxu0 0
    %4451 = vmatpush1.bf16.msra.mxu0 0
    %4452 = vmatprep.subr.bf16.mxu0 0
    %4453 = vmatpush1.bf16.msra.mxu0 0
    %4454 = vmatprep.subr.bf16.mxu0 0
    %4455 = vmatpush1.bf16.msra.mxu0 0
    %4456 = vmatprep.subr.bf16.mxu0 0
    %4457 = vmatpush1.bf16.msra.mxu0 0
    %4458 = vmatprep.subr.bf16.mxu0 0
    %4459 = vmatpush1.bf16.msra.mxu0 0
    %4460 = vmatprep.subr.bf16.mxu0 0
    %4461 = vmatpush1.bf16.msra.mxu0 0
    %4462 = vmatprep.subr.bf16.mxu0 0
    %4463 = vmatpush1.bf16.msra.mxu0 0
    %4464 = vmatprep.subr.bf16.mxu0 0
    %4465 = vmatpush1.bf16.msra.mxu0 0
    %4466 = vmatprep.subr.bf16.mxu0 0
    %4467 = vmatpush1.bf16.msra.mxu0 0
    %4468 = vmatprep.mubr.bf16.mxu0 0
    %4469 = vmatmul.mubr.bf16.gmra.mrb[0].mxu0 %v4431
    %v4470 = vpop.f32.mrb[0].mxu0
    %v4471 = vadd.f32 0.0, %v4470
    %v4472 = vpop.f32.mrb[0].mxu0
    %v4473 = vpop.f32.mrb[0].mxu0
    %v4474 = vadd.f32 0.0, %v4473
    %v4475 = vpop.f32.mrb[0].mxu0
    %4476 = vmatprep.mubr.bf16.mxu0 0
    %4477 = vmatmul.mubr.bf16.gmra.mrb[0].mxu0 %v4434
    %v4478 = vpop.f32.mrb[0].mxu0
    %v4479 = vadd.f32 0.0, %v4478
    %v4480 = vpop.f32.mrb[0].mxu0
    %v4481 = vpop.f32.mrb[0].mxu0
    %v4482 = vadd.f32 0.0, %v4481
    %v4483 = vpop.f32.mrb[0].mxu0
    %4484 = vdwg.mxu0
    %v4485 = vld [vmem:[%s7] sm:$0xf]
    %v4486 = vld [vmem:[%s7 + $0x4] sm:$0xf]
    %v4487 = vld [vmem:[%s7 + $0x8] sm:$0xf]
    %v4488 = vld [vmem:[%s7 + $0xc] sm:$0xf]
    %v4489 = vld [vmem:[%s7 + $0x10] sm:$0xf]
    %v4490 = vld [vmem:[%s7 + $0x14] sm:$0xf]
    %v4491 = vld [vmem:[%s7 + $0x18] sm:$0xf]
    %v4492 = vld [vmem:[%s7 + $0x1c] sm:$0xf]
    %v4493 = vld [vmem:[%s7 + $0x20] sm:$0xf]
    %v4494 = vld [vmem:[%s7 + $0x24] sm:$0xf]
    %v4495 = vld [vmem:[%s7 + $0x28] sm:$0xf]
    %v4496 = vld [vmem:[%s7 + $0x2c] sm:$0xf]
    %v4497 = vld [vmem:[%s7 + $0x30] sm:$0xf]
    %v4498 = vld [vmem:[%s7 + $0x34] sm:$0xf]
    %v4499 = vld [vmem:[%s7 + $0x38] sm:$0xf]
    %v4500 = vld [vmem:[%s7 + $0x3c] sm:$0xf]
    %v4501 = vpack.c.bf16 %v4474, %v4471
    %v4502 = vpack.c.bf16 %v4482, %v4479
    %v4519 = vunpack.c.l.b16 %v4485
    %v4520 = vunpack.c.l.b16 %v4486
    %v4521 = vunpack.c.l.b16 %v4487
    %v4522 = vunpack.c.l.b16 %v4488
    %v4523 = vunpack.c.l.b16 %v4489
    %v4524 = vunpack.c.l.b16 %v4490
    %v4525 = vunpack.c.l.b16 %v4491
    %v4526 = vunpack.c.l.b16 %v4492
    %v4527 = vunpack.c.l.b16 %v4493
    %v4528 = vunpack.c.l.b16 %v4494
    %v4529 = vunpack.c.l.b16 %v4495
    %v4530 = vunpack.c.l.b16 %v4496
    %v4531 = vunpack.c.l.b16 %v4497
    %v4532 = vunpack.c.l.b16 %v4498
    %v4533 = vunpack.c.l.b16 %v4499
    %v4534 = vunpack.c.l.b16 %v4500
    %v4535 = vpack.c.b16 %v4520, %v4519
    %v4536 = vpack.c.b16 %v4522, %v4521
    %v4537 = vpack.c.b16 %v4524, %v4523
    %v4538 = vpack.c.b16 %v4526, %v4525
    %v4539 = vpack.c.b16 %v4528, %v4527
    %v4540 = vpack.c.b16 %v4530, %v4529
    %v4541 = vpack.c.b16 %v4532, %v4531
    %v4542 = vpack.c.b16 %v4534, %v4533
    %4551 = vmatprep.subr.bf16.mxu0 0
    %4552 = vmatpush1.bf16.msra.mxu0 %v4535
    %4553 = vmatprep.subr.bf16.mxu0 0
    %4554 = vmatpush1.bf16.msra.mxu0 %v4536
    %4555 = vmatprep.subr.bf16.mxu0 0
    %4556 = vmatpush1.bf16.msra.mxu0 %v4537
    %4557 = vmatprep.subr.bf16.mxu0 0
    %4558 = vmatpush1.bf16.msra.mxu0 %v4538
    %4559 = vmatprep.subr.bf16.mxu0 0
    %4560 = vmatpush1.bf16.msra.mxu0 %v4539
    %4561 = vmatprep.subr.bf16.mxu0 0
    %4562 = vmatpush1.bf16.msra.mxu0 %v4540
    %4563 = vmatprep.subr.bf16.mxu0 0
    %4564 = vmatpush1.bf16.msra.mxu0 %v4541
    %4565 = vmatprep.subr.bf16.mxu0 0
    %4566 = vmatpush1.bf16.msra.mxu0 %v4542
    %4567 = vmatprep.subr.bf16.mxu0 0
    %4568 = vmatpush1.bf16.msra.mxu0 0
    %4569 = vmatprep.subr.bf16.mxu0 0
    %4570 = vmatpush1.bf16.msra.mxu0 0
    %4571 = vmatprep.subr.bf16.mxu0 0
    %4572 = vmatpush1.bf16.msra.mxu0 0
    %4573 = vmatprep.subr.bf16.mxu0 0
    %4574 = vmatpush1.bf16.msra.mxu0 0
    %4575 = vmatprep.subr.bf16.mxu0 0
    %4576 = vmatpush1.bf16.msra.mxu0 0
    %4577 = vmatprep.subr.bf16.mxu0 0
    %4578 = vmatpush1.bf16.msra.mxu0 0
    %4579 = vmatprep.subr.bf16.mxu0 0
    %4580 = vmatpush1.bf16.msra.mxu0 0
    %4581 = vmatprep.subr.bf16.mxu0 0
    %4582 = vmatpush1.bf16.msra.mxu0 0
    %4583 = vmatprep.mubr.bf16.mxu0 0
    %4584 = vmatmul.mubr.bf16.gmra.mrb[0].mxu0 %v4501
    %v4585 = vpop.f32.mrb[0].mxu0
    %v4586 = vadd.f32 0.0, %v4585
    %v4587 = vpop.f32.mrb[0].mxu0
    %v4588 = vpop.f32.mrb[0].mxu0
    %v4589 = vadd.f32 0.0, %v4588
    %v4590 = vpop.f32.mrb[0].mxu0
    %4591 = vmatprep.mubr.bf16.mxu0 0
    %4592 = vmatmul.mubr.bf16.gmra.mrb[0].mxu0 %v4502
    %v4593 = vpop.f32.mrb[0].mxu0
    %v4594 = vadd.f32 0.0, %v4593
    %v4595 = vpop.f32.mrb[0].mxu0
    %v4596 = vpop.f32.mrb[0].mxu0
    %v4597 = vadd.f32 0.0, %v4596
    %v4598 = vpop.f32.mrb[0].mxu0
    %4599 = vdwg.mxu0
    %s4600 = scalar_lea.vmem %s7, 64
    %v4601 = vld [vmem:[%s4600] sm:$0xf]
    %v4602 = vld [vmem:[%s4600 + $0x4] sm:$0xf]
    %v4603 = vld [vmem:[%s4600 + $0x8] sm:$0xf]
    %v4604 = vld [vmem:[%s4600 + $0xc] sm:$0xf]
    %v4605 = vld [vmem:[%s4600 + $0x10] sm:$0xf]
    %v4606 = vld [vmem:[%s4600 + $0x14] sm:$0xf]
    %v4607 = vld [vmem:[%s4600 + $0x18] sm:$0xf]
    %v4608 = vld [vmem:[%s4600 + $0x1c] sm:$0xf]
    %v4609 = vld [vmem:[%s4600 + $0x20] sm:$0xf]
    %v4610 = vld [vmem:[%s4600 + $0x24] sm:$0xf]
    %v4611 = vld [vmem:[%s4600 + $0x28] sm:$0xf]
    %v4612 = vld [vmem:[%s4600 + $0x2c] sm:$0xf]
    %v4613 = vld [vmem:[%s4600 + $0x30] sm:$0xf]
    %v4614 = vld [vmem:[%s4600 + $0x34] sm:$0xf]
    %v4615 = vld [vmem:[%s4600 + $0x38] sm:$0xf]
    %v4616 = vld [vmem:[%s4600 + $0x3c] sm:$0xf]
    %v4633 = vunpack.c.l.b16 %v4601
    %v4634 = vunpack.c.l.b16 %v4602
    %v4635 = vunpack.c.l.b16 %v4603
    %v4636 = vunpack.c.l.b16 %v4604
    %v4637 = vunpack.c.l.b16 %v4605
    %v4638 = vunpack.c.l.b16 %v4606
    %v4639 = vunpack.c.l.b16 %v4607
    %v4640 = vunpack.c.l.b16 %v4608
    %v4641 = vunpack.c.l.b16 %v4609
    %v4642 = vunpack.c.l.b16 %v4610
    %v4643 = vunpack.c.l.b16 %v4611
    %v4644 = vunpack.c.l.b16 %v4612
    %v4645 = vunpack.c.l.b16 %v4613
    %v4646 = vunpack.c.l.b16 %v4614
    %v4647 = vunpack.c.l.b16 %v4615
    %v4648 = vunpack.c.l.b16 %v4616
    %v4649 = vpack.c.b16 %v4634, %v4633
    %v4650 = vpack.c.b16 %v4636, %v4635
    %v4651 = vpack.c.b16 %v4638, %v4637
    %v4652 = vpack.c.b16 %v4640, %v4639
    %v4653 = vpack.c.b16 %v4642, %v4641
    %v4654 = vpack.c.b16 %v4644, %v4643
    %v4655 = vpack.c.b16 %v4646, %v4645
    %v4656 = vpack.c.b16 %v4648, %v4647
    %4665 = vmatprep.subr.bf16.mxu0 0
    %4666 = vmatpush1.bf16.msra.mxu0 %v4649
    %4667 = vmatprep.subr.bf16.mxu0 0
    %4668 = vmatpush1.bf16.msra.mxu0 %v4650
    %4669 = vmatprep.subr.bf16.mxu0 0
    %4670 = vmatpush1.bf16.msra.mxu0 %v4651
    %4671 = vmatprep.subr.bf16.mxu0 0
    %4672 = vmatpush1.bf16.msra.mxu0 %v4652
    %4673 = vmatprep.subr.bf16.mxu0 0
    %4674 = vmatpush1.bf16.msra.mxu0 %v4653
    %4675 = vmatprep.subr.bf16.mxu0 0
    %4676 = vmatpush1.bf16.msra.mxu0 %v4654
    %4677 = vmatprep.subr.bf16.mxu0 0
    %4678 = vmatpush1.bf16.msra.mxu0 %v4655
    %4679 = vmatprep.subr.bf16.mxu0 0
    %4680 = vmatpush1.bf16.msra.mxu0 %v4656
    %4681 = vmatprep.subr.bf16.mxu0 0
    %4682 = vmatpush1.bf16.msra.mxu0 0
    %4683 = vmatprep.subr.bf16.mxu0 0
    %4684 = vmatpush1.bf16.msra.mxu0 0
    %4685 = vmatprep.subr.bf16.mxu0 0
    %4686 = vmatpush1.bf16.msra.mxu0 0
    %4687 = vmatprep.subr.bf16.mxu0 0
    %4688 = vmatpush1.bf16.msra.mxu0 0
    %4689 = vmatprep.subr.bf16.mxu0 0
    %4690 = vmatpush1.bf16.msra.mxu0 0
    %4691 = vmatprep.subr.bf16.mxu0 0
    %4692 = vmatpush1.bf16.msra.mxu0 0
    %4693 = vmatprep.subr.bf16.mxu0 0
    %4694 = vmatpush1.bf16.msra.mxu0 0
    %4695 = vmatprep.subr.bf16.mxu0 0
    %4696 = vmatpush1.bf16.msra.mxu0 0
    %4697 = vmatprep.mubr.bf16.mxu0 0
    %4698 = vmatmul.mubr.bf16.gmra.mrb[0].mxu0 %v4501
    %v4699 = vpop.f32.mrb[0].mxu0
    %v4700 = vadd.f32 0.0, %v4699
    %v4701 = vpop.f32.mrb[0].mxu0
    %v4702 = vpop.f32.mrb[0].mxu0
    %v4703 = vadd.f32 0.0, %v4702
    %v4704 = vpop.f32.mrb[0].mxu0
    %4705 = vmatprep.mubr.bf16.mxu0 0
    %4706 = vmatmul.mubr.bf16.gmra.mrb[0].mxu0 %v4502
    %v4707 = vpop.f32.mrb[0].mxu0
    %v4708 = vadd.f32 0.0, %v4707
    %v4709 = vpop.f32.mrb[0].mxu0
    %v4710 = vpop.f32.mrb[0].mxu0
    %v4711 = vadd.f32 0.0, %v4710
    %v4712 = vpop.f32.mrb[0].mxu0
    %4713 = vdwg.mxu0
    %v4714 = vmax.f32 %v4586, %v4700
    %v4715 = vmax.f32 %v4589, %v4703
    %v4716 = vmax.f32 %v4594, %v4708
    %v4717 = vmax.f32 %v4597, %v4711
    %v4718 = vld [vmem:[%s9] sm:$0xf]
    %v4719 = vld [vmem:[%s9 + $0x4] sm:$0xf]
    %v4720 = vld [vmem:[%s9 + $0x8] sm:$0xf]
    %v4721 = vld [vmem:[%s9 + $0xc] sm:$0xf]
    %v4722 = vld [vmem:[%s9 + $0x10] sm:$0xf]
    %v4723 = vld [vmem:[%s9 + $0x14] sm:$0xf]
    %v4724 = vld [vmem:[%s9 + $0x18] sm:$0xf]
    %v4725 = vld [vmem:[%s9 + $0x1c] sm:$0xf]
    %v4726 = vpack.c.bf16 %v4714, %v4714
    %s4727 = scalar_lea.vmem %s9, 32
    %v4728 = vld [vmem:[%s4727] sm:$0xf]
    %v4729 = vld [vmem:[%s4727 + $0x4] sm:$0xf]
    %v4730 = vld [vmem:[%s4727 + $0x8] sm:$0xf]
    %v4731 = vld [vmem:[%s4727 + $0xc] sm:$0xf]
    %v4732 = vld [vmem:[%s4727 + $0x10] sm:$0xf]
    %v4733 = vld [vmem:[%s4727 + $0x14] sm:$0xf]
    %v4734 = vld [vmem:[%s4727 + $0x18] sm:$0xf]
    %v4735 = vld [vmem:[%s4727 + $0x1c] sm:$0xf]
    %v4736 = vpack.c.bf16 %v4715, %v4715
    %v4745 = vunpack.c.l.b16 %v4728
    %v4746 = vunpack.c.l.b16 %v4729
    %v4747 = vunpack.c.l.b16 %v4730
    %v4748 = vunpack.c.l.b16 %v4731
    %v4749 = vunpack.c.l.b16 %v4732
    %v4750 = vunpack.c.l.b16 %v4733
    %v4751 = vunpack.c.l.b16 %v4734
    %v4752 = vunpack.c.l.b16 %v4735
    %v4753 = vpack.c.b16 %v4746, %v4745
    %v4754 = vpack.c.b16 %v4748, %v4747
    %v4755 = vpack.c.b16 %v4750, %v4749
    %v4756 = vpack.c.b16 %v4752, %v4751
    %vm4761 = vcmask 523264
    %v4763 = vsel %vm4761, %v4736, 0
    %4765 = vmatprep.subr.bf16.mxu0 0
    %4766 = vmatpush1.bf16.msra.mxu0 %v4753
    %4767 = vmatprep.subr.bf16.mxu0 0
    %4768 = vmatpush1.bf16.msra.mxu0 %v4754
    %4769 = vmatprep.subr.bf16.mxu0 0
    %4770 = vmatpush1.bf16.msra.mxu0 %v4755
    %4771 = vmatprep.subr.bf16.mxu0 0
    %4772 = vmatpush1.bf16.msra.mxu0 %v4756
    %4773 = vmatprep.subr.bf16.mxu0 0
    %4774 = vmatpush1.bf16.msra.mxu0 0
    %4775 = vmatprep.subr.bf16.mxu0 0
    %4776 = vmatpush1.bf16.msra.mxu0 0
    %4777 = vmatprep.subr.bf16.mxu0 0
    %4778 = vmatpush1.bf16.msra.mxu0 0
    %4779 = vmatprep.subr.bf16.mxu0 0
    %4780 = vmatpush1.bf16.msra.mxu0 0
    %4781 = vmatprep.subr.bf16.mxu0 0
    %4782 = vmatpush1.bf16.msra.mxu0 0
    %4783 = vmatprep.subr.bf16.mxu0 0
    %4784 = vmatpush1.bf16.msra.mxu0 0
    %4785 = vmatprep.subr.bf16.mxu0 0
    %4786 = vmatpush1.bf16.msra.mxu0 0
    %4787 = vmatprep.subr.bf16.mxu0 0
    %4788 = vmatpush1.bf16.msra.mxu0 0
    %4789 = vmatprep.subr.bf16.mxu0 0
    %4790 = vmatpush1.bf16.msra.mxu0 0
    %4791 = vmatprep.subr.bf16.mxu0 0
    %4792 = vmatpush1.bf16.msra.mxu0 0
    %4793 = vmatprep.subr.bf16.mxu0 0
    %4794 = vmatpush1.bf16.msra.mxu0 0
    %4795 = vmatprep.subr.bf16.mxu0 0
    %4796 = vmatpush1.bf16.msra.mxu0 0
    %4797 = vmatprep.mubr.bf16.mxu0 0
    %4798 = vmatmul.mubr.bf16.gmra.mrb[0].mxu0 %v4763
    %v4799 = vpop.f32.mrb[0].mxu0
    %v4800 = vadd.f32 0.0, %v4799
    %v4801 = vpop.f32.mrb[0].mxu0
    %v4802 = vpop.f32.mrb[0].mxu0
    %v4803 = vpop.f32.mrb[0].mxu0
    %4804 = vdwg.mxu0
    %v4813 = vunpack.c.l.b16 %v4718
    %v4814 = vunpack.c.l.b16 %v4719
    %v4815 = vunpack.c.l.b16 %v4720
    %v4816 = vunpack.c.l.b16 %v4721
    %v4817 = vunpack.c.l.b16 %v4722
    %v4818 = vunpack.c.l.b16 %v4723
    %v4819 = vunpack.c.l.b16 %v4724
    %v4820 = vunpack.c.l.b16 %v4725
    %v4821 = vpack.c.b16 %v4814, %v4813
    %v4822 = vpack.c.b16 %v4816, %v4815
    %v4823 = vpack.c.b16 %v4818, %v4817
    %v4824 = vpack.c.b16 %v4820, %v4819
    %v4830 = vsel %vm4761, %v4726, 0
    %4832 = vmatprep.subr.bf16.mxu0 0
    %4833 = vmatpush1.bf16.msra.mxu0 %v4821
    %4834 = vmatprep.subr.bf16.mxu0 0
    %4835 = vmatpush1.bf16.msra.mxu0 %v4822
    %4836 = vmatprep.subr.bf16.mxu0 0
    %4837 = vmatpush1.bf16.msra.mxu0 %v4823
    %4838 = vmatprep.subr.bf16.mxu0 0
    %4839 = vmatpush1.bf16.msra.mxu0 %v4824
    %4840 = vmatprep.subr.bf16.mxu0 0
    %4841 = vmatpush1.bf16.msra.mxu0 0
    %4842 = vmatprep.subr.bf16.mxu0 0
    %4843 = vmatpush1.bf16.msra.mxu0 0
    %4844 = vmatprep.subr.bf16.mxu0 0
    %4845 = vmatpush1.bf16.msra.mxu0 0
    %4846 = vmatprep.subr.bf16.mxu0 0
    %4847 = vmatpush1.bf16.msra.mxu0 0
    %4848 = vmatprep.subr.bf16.mxu0 0
    %4849 = vmatpush1.bf16.msra.mxu0 0
    %4850 = vmatprep.subr.bf16.mxu0 0
    %4851 = vmatpush1.bf16.msra.mxu0 0
    %4852 = vmatprep.subr.bf16.mxu0 0
    %4853 = vmatpush1.bf16.msra.mxu0 0
    %4854 = vmatprep.subr.bf16.mxu0 0
    %4855 = vmatpush1.bf16.msra.mxu0 0
    %4856 = vmatprep.subr.bf16.mxu0 0
    %4857 = vmatpush1.bf16.msra.mxu0 0
    %4858 = vmatprep.subr.bf16.mxu0 0
    %4859 = vmatpush1.bf16.msra.mxu0 0
    %4860 = vmatprep.subr.bf16.mxu0 0
    %4861 = vmatpush1.bf16.msra.mxu0 0
    %4862 = vmatprep.subr.bf16.mxu0 0
    %4863 = vmatpush1.bf16.msra.mxu0 0
    %4864 = vmatprep.mubr.bf16.mxu0 0
    %4865 = vmatmul.mubr.bf16.gmra.mrb[0].mxu0 %v4830
    %v4866 = vpop.f32.mrb[0].mxu0
    %v4867 = vadd.f32 %v4800, %v4866
    %v4868 = vpop.f32.mrb[0].mxu0
    %v4869 = vpop.f32.mrb[0].mxu0
    %v4870 = vpop.f32.mrb[0].mxu0
    %4871 = vdwg.mxu0
    %s4872 = scalar_lea.vmem %s9, 64
    %v4873 = vld [vmem:[%s4872] sm:$0xf]
    %v4874 = vld [vmem:[%s4872 + $0x4] sm:$0xf]
    %v4875 = vld [vmem:[%s4872 + $0x8] sm:$0xf]
    %v4876 = vld [vmem:[%s4872 + $0xc] sm:$0xf]
    %v4877 = vld [vmem:[%s4872 + $0x10] sm:$0xf]
    %v4878 = vld [vmem:[%s4872 + $0x14] sm:$0xf]
    %v4879 = vld [vmem:[%s4872 + $0x18] sm:$0xf]
    %v4880 = vld [vmem:[%s4872 + $0x1c] sm:$0xf]
    %v4881 = vpack.c.bf16 %v4716, %v4716
    %v4890 = vunpack.c.l.b16 %v4873
    %v4891 = vunpack.c.l.b16 %v4874
    %v4892 = vunpack.c.l.b16 %v4875
    %v4893 = vunpack.c.l.b16 %v4876
    %v4894 = vunpack.c.l.b16 %v4877
    %v4895 = vunpack.c.l.b16 %v4878
    %v4896 = vunpack.c.l.b16 %v4879
    %v4897 = vunpack.c.l.b16 %v4880
    %v4898 = vpack.c.b16 %v4891, %v4890
    %v4899 = vpack.c.b16 %v4893, %v4892
    %v4900 = vpack.c.b16 %v4895, %v4894
    %v4901 = vpack.c.b16 %v4897, %v4896
    %v4907 = vsel %vm4761, %v4881, 0
    %4909 = vmatprep.subr.bf16.mxu0 0
    %4910 = vmatpush1.bf16.msra.mxu0 %v4898
    %4911 = vmatprep.subr.bf16.mxu0 0
    %4912 = vmatpush1.bf16.msra.mxu0 %v4899
    %4913 = vmatprep.subr.bf16.mxu0 0
    %4914 = vmatpush1.bf16.msra.mxu0 %v4900
    %4915 = vmatprep.subr.bf16.mxu0 0
    %4916 = vmatpush1.bf16.msra.mxu0 %v4901
    %4917 = vmatprep.subr.bf16.mxu0 0
    %4918 = vmatpush1.bf16.msra.mxu0 0
    %4919 = vmatprep.subr.bf16.mxu0 0
    %4920 = vmatpush1.bf16.msra.mxu0 0
    %4921 = vmatprep.subr.bf16.mxu0 0
    %4922 = vmatpush1.bf16.msra.mxu0 0
    %4923 = vmatprep.subr.bf16.mxu0 0
    %4924 = vmatpush1.bf16.msra.mxu0 0
    %4925 = vmatprep.subr.bf16.mxu0 0
    %4926 = vmatpush1.bf16.msra.mxu0 0
    %4927 = vmatprep.subr.bf16.mxu0 0
    %4928 = vmatpush1.bf16.msra.mxu0 0
    %4929 = vmatprep.subr.bf16.mxu0 0
    %4930 = vmatpush1.bf16.msra.mxu0 0
    %4931 = vmatprep.subr.bf16.mxu0 0
    %4932 = vmatpush1.bf16.msra.mxu0 0
    %4933 = vmatprep.subr.bf16.mxu0 0
    %4934 = vmatpush1.bf16.msra.mxu0 0
    %4935 = vmatprep.subr.bf16.mxu0 0
    %4936 = vmatpush1.bf16.msra.mxu0 0
    %4937 = vmatprep.subr.bf16.mxu0 0
    %4938 = vmatpush1.bf16.msra.mxu0 0
    %4939 = vmatprep.subr.bf16.mxu0 0
    %4940 = vmatpush1.bf16.msra.mxu0 0
    %4941 = vmatprep.mubr.bf16.mxu0 0
    %4942 = vmatmul.mubr.bf16.gmra.mrb[0].mxu0 %v4907
    %v4943 = vpop.f32.mrb[0].mxu0
    %v4944 = vadd.f32 0.0, %v4943
    %v4945 = vpop.f32.mrb[0].mxu0
    %v4946 = vpop.f32.mrb[0].mxu0
    %v4947 = vpop.f32.mrb[0].mxu0
    %4948 = vdwg.mxu0
    %v4949 = vadd.f32 %v4867, %v4944
    %s4950 = scalar_lea.vmem %s9, 96
    %v4951 = vld [vmem:[%s4950] sm:$0xf]
    %v4952 = vld [vmem:[%s4950 + $0x4] sm:$0xf]
    %v4953 = vld [vmem:[%s4950 + $0x8] sm:$0xf]
    %v4954 = vld [vmem:[%s4950 + $0xc] sm:$0xf]
    %v4955 = vld [vmem:[%s4950 + $0x10] sm:$0xf]
    %v4956 = vld [vmem:[%s4950 + $0x14] sm:$0xf]
    %v4957 = vld [vmem:[%s4950 + $0x18] sm:$0xf]
    %v4958 = vld [vmem:[%s4950 + $0x1c] sm:$0xf]
    %v4959 = vpack.c.bf16 %v4717, %v4717
    %v4968 = vunpack.c.l.b16 %v4951
    %v4969 = vunpack.c.l.b16 %v4952
    %v4970 = vunpack.c.l.b16 %v4953
    %v4971 = vunpack.c.l.b16 %v4954
    %v4972 = vunpack.c.l.b16 %v4955
    %v4973 = vunpack.c.l.b16 %v4956
    %v4974 = vunpack.c.l.b16 %v4957
    %v4975 = vunpack.c.l.b16 %v4958
    %v4976 = vpack.c.b16 %v4969, %v4968
    %v4977 = vpack.c.b16 %v4971, %v4970
    %v4978 = vpack.c.b16 %v4973, %v4972
    %v4979 = vpack.c.b16 %v4975, %v4974
    %v4985 = vsel %vm4761, %v4959, 0
    %4987 = vmatprep.subr.bf16.mxu0 0
    %4988 = vmatpush1.bf16.msra.mxu0 %v4976
    %4989 = vmatprep.subr.bf16.mxu0 0
    %4990 = vmatpush1.bf16.msra.mxu0 %v4977
    %4991 = vmatprep.subr.bf16.mxu0 0
    %4992 = vmatpush1.bf16.msra.mxu0 %v4978
    %4993 = vmatprep.subr.bf16.mxu0 0
    %4994 = vmatpush1.bf16.msra.mxu0 %v4979
    %4995 = vmatprep.subr.bf16.mxu0 0
    %4996 = vmatpush1.bf16.msra.mxu0 0
    %4997 = vmatprep.subr.bf16.mxu0 0
    %4998 = vmatpush1.bf16.msra.mxu0 0
    %4999 = vmatprep.subr.bf16.mxu0 0
    %5000 = vmatpush1.bf16.msra.mxu0 0
    %5001 = vmatprep.subr.bf16.mxu0 0
    %5002 = vmatpush1.bf16.msra.mxu0 0
    %5003 = vmatprep.subr.bf16.mxu0 0
    %5004 = vmatpush1.bf16.msra.mxu0 0
    %5005 = vmatprep.subr.bf16.mxu0 0
    %5006 = vmatpush1.bf16.msra.mxu0 0
    %5007 = vmatprep.subr.bf16.mxu0 0
    %5008 = vmatpush1.bf16.msra.mxu0 0
    %5009 = vmatprep.subr.bf16.mxu0 0
    %5010 = vmatpush1.bf16.msra.mxu0 0
    %5011 = vmatprep.subr.bf16.mxu0 0
    %5012 = vmatpush1.bf16.msra.mxu0 0
    %5013 = vmatprep.subr.bf16.mxu0 0
    %5014 = vmatpush1.bf16.msra.mxu0 0
    %5015 = vmatprep.subr.bf16.mxu0 0
    %5016 = vmatpush1.bf16.msra.mxu0 0
    %5017 = vmatprep.subr.bf16.mxu0 0
    %5018 = vmatpush1.bf16.msra.mxu0 0
    %5019 = vmatprep.mubr.bf16.mxu0 0
    %5020 = vmatmul.mubr.bf16.gmra.mrb[0].mxu0 %v4985
    %v5021 = vpop.f32.mrb[0].mxu0
    %v5022 = vadd.f32 0.0, %v5021
    %v5023 = vpop.f32.mrb[0].mxu0
    %v5024 = vpop.f32.mrb[0].mxu0
    %v5025 = vpop.f32.mrb[0].mxu0
    %5026 = vdwg.mxu0
    %v5027 = vadd.f32 %v4949, %v5022
    %v5028 = vld [vmem:[%s12] sm:$0x1]
    %v5029 = vlaneseq
    %v5030 = vshrl.u32 %v5029, 7
    %v5031 = vsub.s32 0, %v5030
    %v5032 = vrot.slane %v5028, %v5031
    %v5033 = vadd.f32 %v5027, %v5032
    %v5034 = vmax.f32 %v5033, 0.0
    %v5035 = vld [vmem:[#allocation10] sm:$0xf]
    %v5036 = vld [vmem:[#allocation10 + $0x4] sm:$0xf]
    %v5037 = vld [vmem:[#allocation10 + $0x8] sm:$0xf]
    %v5038 = vld [vmem:[#allocation10 + $0xc] sm:$0xf]
    %v5039 = vld [vmem:[#allocation10 + $0x10] sm:$0xf]
    %v5040 = vld [vmem:[#allocation10 + $0x14] sm:$0xf]
    %v5041 = vld [vmem:[#allocation10 + $0x18] sm:$0xf]
    %v5042 = vld [vmem:[#allocation10 + $0x1c] sm:$0xf]
    %v5043 = vld [vmem:[#allocation10 + $0x20] sm:$0xf]
    %v5044 = vld [vmem:[#allocation10 + $0x24] sm:$0xf]
    %v5045 = vld [vmem:[#allocation10 + $0x28] sm:$0xf]
    %v5046 = vld [vmem:[#allocation10 + $0x2c] sm:$0xf]
    %v5047 = vld [vmem:[#allocation10 + $0x30] sm:$0xf]
    %v5048 = vld [vmem:[#allocation10 + $0x34] sm:$0xf]
    %v5049 = vld [vmem:[#allocation10 + $0x38] sm:$0xf]
    %v5050 = vld [vmem:[#allocation10 + $0x3c] sm:$0xf]
    %v5051 = vpack.c.bf16 %v5034, %v5034
    %v5052 = vld [vmem:[%s12 + $0x1] sm:$0x1]
    %v5053 = vlaneseq
    %v5054 = vshrl.u32 %v5053, 7
    %v5055 = vsub.s32 0, %v5054
    %v5056 = vrot.slane %v5052, %v5055
    %v5073 = vunpack.c.l.b16 %v5035
    %v5074 = vunpack.c.l.b16 %v5036
    %v5075 = vunpack.c.l.b16 %v5037
    %v5076 = vunpack.c.l.b16 %v5038
    %v5077 = vunpack.c.l.b16 %v5039
    %v5078 = vunpack.c.l.b16 %v5040
    %v5079 = vunpack.c.l.b16 %v5041
    %v5080 = vunpack.c.l.b16 %v5042
    %v5081 = vunpack.c.l.b16 %v5043
    %v5082 = vunpack.c.l.b16 %v5044
    %v5083 = vunpack.c.l.b16 %v5045
    %v5084 = vunpack.c.l.b16 %v5046
    %v5085 = vunpack.c.l.b16 %v5047
    %v5086 = vunpack.c.l.b16 %v5048
    %v5087 = vunpack.c.l.b16 %v5049
    %v5088 = vunpack.c.l.b16 %v5050
    %v5089 = vpack.c.b16 %v5074, %v5073
    %v5090 = vpack.c.b16 %v5076, %v5075
    %v5091 = vpack.c.b16 %v5078, %v5077
    %v5092 = vpack.c.b16 %v5080, %v5079
    %v5093 = vpack.c.b16 %v5082, %v5081
    %v5094 = vpack.c.b16 %v5084, %v5083
    %v5095 = vpack.c.b16 %v5086, %v5085
    %v5096 = vpack.c.b16 %v5088, %v5087
    %5105 = vmatprep.subr.bf16.mxu0 0
    %5106 = vmatpush1.bf16.msra.mxu0 %v5089
    %5107 = vmatprep.subr.bf16.mxu0 0
    %5108 = vmatpush1.bf16.msra.mxu0 %v5090
    %5109 = vmatprep.subr.bf16.mxu0 0
    %5110 = vmatpush1.bf16.msra.mxu0 %v5091
    %5111 = vmatprep.subr.bf16.mxu0 0
    %5112 = vmatpush1.bf16.msra.mxu0 %v5092
    %5113 = vmatprep.subr.bf16.mxu0 0
    %5114 = vmatpush1.bf16.msra.mxu0 %v5093
    %5115 = vmatprep.subr.bf16.mxu0 0
    %5116 = vmatpush1.bf16.msra.mxu0 %v5094
    %5117 = vmatprep.subr.bf16.mxu0 0
    %5118 = vmatpush1.bf16.msra.mxu0 %v5095
    %5119 = vmatprep.subr.bf16.mxu0 0
    %5120 = vmatpush1.bf16.msra.mxu0 %v5096
    %5121 = vmatprep.subr.bf16.mxu0 0
    %5122 = vmatpush1.bf16.msra.mxu0 0
    %5123 = vmatprep.subr.bf16.mxu0 0
    %5124 = vmatpush1.bf16.msra.mxu0 0
    %5125 = vmatprep.subr.bf16.mxu0 0
    %5126 = vmatpush1.bf16.msra.mxu0 0
    %5127 = vmatprep.subr.bf16.mxu0 0
    %5128 = vmatpush1.bf16.msra.mxu0 0
    %5129 = vmatprep.subr.bf16.mxu0 0
    %5130 = vmatpush1.bf16.msra.mxu0 0
    %5131 = vmatprep.subr.bf16.mxu0 0
    %5132 = vmatpush1.bf16.msra.mxu0 0
    %5133 = vmatprep.subr.bf16.mxu0 0
    %5134 = vmatpush1.bf16.msra.mxu0 0
    %5135 = vmatprep.subr.bf16.mxu0 0
    %5136 = vmatpush1.bf16.msra.mxu0 0
    %5137 = vmatprep.mubr.bf16.mxu0 0
    %5138 = vmatmul.mubr.bf16.gmra.mrb[0].mxu0 %v5051
    %v5139 = vpop.f32.mrb[0].mxu0
    %v5140 = vadd.f32 %v5056, %v5139
    %v5141 = vpop.f32.mrb[0].mxu0
    %v5142 = vpop.f32.mrb[0].mxu0
    %v5143 = vpop.f32.mrb[0].mxu0
    %5144 = vdwg.mxu0
    %v5145 = vmax.f32 %v5140, 0.0
    %v5146 = vld [vmem:[%s11] sm:$0xf]
    %v5147 = vld [vmem:[%s11 + $0x4] sm:$0xf]
    %v5148 = vld [vmem:[%s11 + $0x8] sm:$0xf]
    %v5149 = vld [vmem:[%s11 + $0xc] sm:$0xf]
    %v5150 = vld [vmem:[%s11 + $0x10] sm:$0xf]
    %v5151 = vld [vmem:[%s11 + $0x14] sm:$0xf]
    %v5152 = vld [vmem:[%s11 + $0x18] sm:$0xf]
    %v5153 = vld [vmem:[%s11 + $0x1c] sm:$0xf]
    %v5154 = vld [vmem:[%s11 + $0x20] sm:$0xf]
    %v5155 = vld [vmem:[%s11 + $0x24] sm:$0xf]
    %v5156 = vld [vmem:[%s11 + $0x28] sm:$0xf]
    %v5157 = vld [vmem:[%s11 + $0x2c] sm:$0xf]
    %v5158 = vld [vmem:[%s11 + $0x30] sm:$0xf]
    %v5159 = vld [vmem:[%s11 + $0x34] sm:$0xf]
    %v5160 = vld [vmem:[%s11 + $0x38] sm:$0xf]
    %v5161 = vld [vmem:[%s11 + $0x3c] sm:$0xf]
    %v5162 = vpack.c.bf16 %v5145, %v5145
    %v5163 = vld [vmem:[%s12 + $0x2] sm:$0x1]
    %v5164 = vlaneseq
    %v5165 = vshrl.u32 %v5164, 7
    %v5166 = vsub.s32 0, %v5165
    %v5167 = vrot.slane %v5163, %v5166
    %v5184 = vunpack.c.l.b16 %v5146
    %v5185 = vunpack.c.l.b16 %v5147
    %v5186 = vunpack.c.l.b16 %v5148
    %v5187 = vunpack.c.l.b16 %v5149
    %v5188 = vunpack.c.l.b16 %v5150
    %v5189 = vunpack.c.l.b16 %v5151
    %v5190 = vunpack.c.l.b16 %v5152
    %v5191 = vunpack.c.l.b16 %v5153
    %v5192 = vunpack.c.l.b16 %v5154
    %v5193 = vunpack.c.l.b16 %v5155
    %v5194 = vunpack.c.l.b16 %v5156
    %v5195 = vunpack.c.l.b16 %v5157
    %v5196 = vunpack.c.l.b16 %v5158
    %v5197 = vunpack.c.l.b16 %v5159
    %v5198 = vunpack.c.l.b16 %v5160
    %v5199 = vunpack.c.l.b16 %v5161
    %v5200 = vpack.c.b16 %v5185, %v5184
    %v5201 = vpack.c.b16 %v5187, %v5186
    %v5202 = vpack.c.b16 %v5189, %v5188
    %v5203 = vpack.c.b16 %v5191, %v5190
    %v5204 = vpack.c.b16 %v5193, %v5192
    %v5205 = vpack.c.b16 %v5195, %v5194
    %v5206 = vpack.c.b16 %v5197, %v5196
    %v5207 = vpack.c.b16 %v5199, %v5198
    %5216 = vmatprep.subr.bf16.mxu0 0
    %5217 = vmatpush1.bf16.msra.mxu0 %v5200
    %5218 = vmatprep.subr.bf16.mxu0 0
    %5219 = vmatpush1.bf16.msra.mxu0 %v5201
    %5220 = vmatprep.subr.bf16.mxu0 0
    %5221 = vmatpush1.bf16.msra.mxu0 %v5202
    %5222 = vmatprep.subr.bf16.mxu0 0
    %5223 = vmatpush1.bf16.msra.mxu0 %v5203
    %5224 = vmatprep.subr.bf16.mxu0 0
    %5225 = vmatpush1.bf16.msra.mxu0 %v5204
    %5226 = vmatprep.subr.bf16.mxu0 0
    %5227 = vmatpush1.bf16.msra.mxu0 %v5205
    %5228 = vmatprep.subr.bf16.mxu0 0
    %5229 = vmatpush1.bf16.msra.mxu0 %v5206
    %5230 = vmatprep.subr.bf16.mxu0 0
    %5231 = vmatpush1.bf16.msra.mxu0 %v5207
    %5232 = vmatprep.subr.bf16.mxu0 0
    %5233 = vmatpush1.bf16.msra.mxu0 0
    %5234 = vmatprep.subr.bf16.mxu0 0
    %5235 = vmatpush1.bf16.msra.mxu0 0
    %5236 = vmatprep.subr.bf16.mxu0 0
    %5237 = vmatpush1.bf16.msra.mxu0 0
    %5238 = vmatprep.subr.bf16.mxu0 0
    %5239 = vmatpush1.bf16.msra.mxu0 0
    %5240 = vmatprep.subr.bf16.mxu0 0
    %5241 = vmatpush1.bf16.msra.mxu0 0
    %5242 = vmatprep.subr.bf16.mxu0 0
    %5243 = vmatpush1.bf16.msra.mxu0 0
    %5244 = vmatprep.subr.bf16.mxu0 0
    %5245 = vmatpush1.bf16.msra.mxu0 0
    %5246 = vmatprep.subr.bf16.mxu0 0
    %5247 = vmatpush1.bf16.msra.mxu0 0
    %5248 = vmatprep.mubr.bf16.mxu0 0
    %5249 = vmatmul.mubr.bf16.gmra.mrb[0].mxu0 %v5162
    %v5250 = vpop.f32.mrb[0].mxu0
    %v5251 = vadd.f32 %v5167, %v5250
    %v5252 = vpop.f32.mrb[0].mxu0
    %v5253 = vpop.f32.mrb[0].mxu0
    %v5254 = vpop.f32.mrb[0].mxu0
    %5255 = vdwg.mxu0
    %5256 = vst [vmem:[%s13] sm:$0xff] %v5251
    // Predicated region
    $region66: #{forward.1} parent=1 // pred_check
      _
    $region67: #{forward.1} parent=1 // pred_check_branch
      %5258 = sbr.rel (0) target = $region69
    $region68: #{forward.1} parent=1 // pred_region
      _
    $region69: #{forward.1} parent=1 // pred_fallthru
      _
    // Predicated region
    $region70: #{forward.1} parent=1 // pred_check
      _
    $region71: #{forward.1} parent=1 // pred_check_branch
      %5260 = sbr.rel (0) target = $region73
    $region72: #{forward.1} parent=1 // pred_region
      _
    $region73: #{forward.1} parent=1 // pred_fallthru
      _
    %5261 = vsyncpa [#allocation7], 1
    %5262 = vsyncpa [#allocation9], 1

</llo_original>
